<compile_context>
chip_gen: v7x
topology: tpu7x:2x2x1
jax: 0.10.0
libtpu: 0.0.40
codegen_flags: <defaults>
</compile_context>

<pallas_src>
import math
import functools

import jax
import jax.numpy as jnp
from jax import lax  # noqa: F401
from jax.experimental import pallas as pl
from jax.experimental.pallas import tpu as pltpu


# ----------------------------------------------------------------------------
# Fused Pallas kernel
# ----------------------------------------------------------------------------
def _attention_block(Qp, Kp, Vp, wo, bo, *, num_heads, dim_V):
    """MAB tail: multi-head attention + residual + relu(fc_o) residual.

    Qp/Kp/Vp are already-projected (rows, dim_V) activations.  The
    1/sqrt(dim_V) score scale is pre-folded into the K projection, so the
    scores are just Qh @ Kh^T.
    """
    dh = dim_V // num_heads

    # Head-batched (H, rows, dh) views, built from lane slices + a new leading
    # axis (avoids lane-dim reshapes / relayouts inside the kernel).
    Qh = jnp.stack([Qp[:, h * dh:(h + 1) * dh] for h in range(num_heads)], axis=0)
    Kh = jnp.stack([Kp[:, h * dh:(h + 1) * dh] for h in range(num_heads)], axis=0)
    Vh = jnp.stack([Vp[:, h * dh:(h + 1) * dh] for h in range(num_heads)], axis=0)

    # Scores for all heads in one batched contraction: (H, Nq, Nk).
    S = jnp.einsum('hqd,hkd->hqk', Qh, Kh, preferred_element_type=jnp.float32)
    S = S - jnp.max(S, axis=-1, keepdims=True)
    E = jnp.exp(S)
    inv = pl.reciprocal(jnp.sum(E, axis=-1, keepdims=True), approx=True)  # EUP
    A = E * inv

    # (H, Nq, dh) head outputs in one batched contraction.
    Oh = jnp.einsum('hqk,hkd->hqd', A, Vh, preferred_element_type=jnp.float32)

    O = Qp + jnp.concatenate([Oh[h] for h in range(num_heads)], axis=-1)
    Ho = jnp.dot(O, wo, preferred_element_type=jnp.float32) + bo
    return O + jnp.maximum(Ho, 0.0)


def _set_transformer_kernel(
        x_ref, s_ref,
        wqkv1_ref, bqkv1_ref, wo1_ref, bo1_ref,
        wqkv2_ref, bqkv2_ref, wo2_ref, bo2_ref,
        wq3_ref, bq3_ref, wkv3_ref, bkv3_ref, wo3_ref, bo3_ref,
        wdec_ref, bdec_ref,
        out_ref, *, num_heads, dim_V):
    X = x_ref[...]

    # ---- SAB1: Q == K == X -> single fused QKV matmul ----------------------
    P = jnp.dot(X, wqkv1_ref[...], preferred_element_type=jnp.float32) + bqkv1_ref[...]
    h = _attention_block(P[:, :dim_V], P[:, dim_V:2 * dim_V], P[:, 2 * dim_V:],
                         wo1_ref[...], bo1_ref[...],
                         num_heads=num_heads, dim_V=dim_V)

    # ---- SAB2 ---------------------------------------------------------------
    P = jnp.dot(h, wqkv2_ref[...], preferred_element_type=jnp.float32) + bqkv2_ref[...]
    h = _attention_block(P[:, :dim_V], P[:, dim_V:2 * dim_V], P[:, 2 * dim_V:],
                         wo2_ref[...], bo2_ref[...],
                         num_heads=num_heads, dim_V=dim_V)

    # ---- decoder: Dropout -> PMA -> Dropout -> Linear -----------------------
    # TODO(synk): nn.Dropout is identity here (eval-mode semantics); training-
    # mode stochastic dropout is not implemented.
    Qp = jnp.dot(s_ref[...], wq3_ref[...], preferred_element_type=jnp.float32) + bq3_ref[...]
    KV = jnp.dot(h, wkv3_ref[...], preferred_element_type=jnp.float32) + bkv3_ref[...]
    p = _attention_block(Qp, KV[:, :dim_V], KV[:, dim_V:],
                         wo3_ref[...], bo3_ref[...],
                         num_heads=num_heads, dim_V=dim_V)

    out_ref[...] = (jnp.dot(p, wdec_ref[...], preferred_element_type=jnp.float32)
                    + bdec_ref[...])


# ----------------------------------------------------------------------------
# Parameter packing (one-time, outside the kernel; folded by jit)
# ----------------------------------------------------------------------------
def prepare_fused_params(params):
    """Pack per-MAB weights into fused slabs; fold attention scale into K."""
    dim_V = params["sab1"]["wq"].shape[1]
    scale = 1.0 / math.sqrt(dim_V)

    def pack_qkv(p):
        w = jnp.concatenate([p["wq"], p["wk"] * scale, p["wv"]], axis=1)
        b = jnp.concatenate([p["bq"], p["bk"] * scale, p["bv"]], axis=1)
        return w, b

    wqkv1, bqkv1 = pack_qkv(params["sab1"])
    wqkv2, bqkv2 = pack_qkv(params["sab2"])
    pma = params["pma"]
    wkv3 = jnp.concatenate([pma["wk"] * scale, pma["wv"]], axis=1)
    bkv3 = jnp.concatenate([pma["bk"] * scale, pma["bv"]], axis=1)

    return (wqkv1, bqkv1, params["sab1"]["wo"], params["sab1"]["bo"],
            wqkv2, bqkv2, params["sab2"]["wo"], params["sab2"]["bo"],
            pma["wq"], pma["bq"], wkv3, bkv3, pma["wo"], pma["bo"],
            params["w_dec"], params["b_dec"])


def _cost_estimate(args, out_elems, N, k, d_in, dim_V, d_out, H):
    flops = (
        2 * N * d_in * 3 * dim_V              # SAB1 fused QKV proj
        + 2 * N * dim_V * 3 * dim_V           # SAB2 fused QKV proj
        + 2 * k * dim_V * dim_V               # PMA Q proj
        + 2 * N * dim_V * 2 * dim_V           # PMA fused KV proj
        + 2 * (2 * 2 * N * N * dim_V)         # SAB1+SAB2 attention (QK^T + AV)
        + 2 * (2 * k * N * dim_V)             # PMA attention
        + 2 * (2 * N * dim_V * dim_V)         # fc_o for both SABs
        + 2 * k * dim_V * dim_V               # PMA fc_o
        + 2 * k * dim_V * d_out)              # decoder linear
    transcendentals = 2 * H * N * N + H * k * N + 2 * H * N + H * k  # exp + recip
    bytes_accessed = 4 * (sum(int(a.size) for a in args) + int(out_elems))
    return pl.CostEstimate(flops=int(flops),
                           transcendentals=int(transcendentals),
                           bytes_accessed=int(bytes_accessed))


# ----------------------------------------------------------------------------
# Wrapper: single pallas_call, no grid, everything resident in VMEM
# ----------------------------------------------------------------------------
def set_transformer_forward(X, params, num_heads):
    dim_V = params["sab1"]["wq"].shape[1]
    assert dim_V % num_heads == 0
    N, d_in = X.shape
    num_outputs = params["S"].shape[0]
    d_out = params["w_dec"].shape[1]

    args = (X, params["S"], *prepare_fused_params(params))
    kernel = functools.partial(_set_transformer_kernel,
                               num_heads=num_heads, dim_V=dim_V)
    vmem = pltpu.MemorySpace.VMEM
    out = pl.pallas_call(
        kernel,
        out_shape=jax.ShapeDtypeStruct((num_outputs, d_out), jnp.float32),
        in_specs=[pl.BlockSpec(memory_space=vmem) for _ in args],
        out_specs=pl.BlockSpec(memory_space=vmem),
        cost_estimate=_cost_estimate(args, num_outputs * d_out,
                                     N, num_outputs, d_in, dim_V, d_out,
                                     num_heads),
    )(*args)

    # PyTorch: .squeeze(0).squeeze(0) — batch dim already dropped; squeeze seeds if 1.
    return out[0] if out.shape[0] == 1 else out


# ----------------------------------------------------------------------------
# Parameter construction (deterministic, in-script; PyTorch-like init)
# ----------------------------------------------------------------------------
def init_linear(key, d_in, d_out):
    # weight stored pre-transposed as (d_in, d_out) so kernels do x @ W
    k1, k2 = jax.random.split(key)
    bound = 1.0 / math.sqrt(d_in)
    w = jax.random.uniform(k1, (d_in, d_out), jnp.float32, -bound, bound)
    b = jax.random.uniform(k2, (1, d_out), jnp.float32, -bound, bound)
    return w, b


def init_mab(key, dim_Q, dim_K, dim_V):
    ks = jax.random.split(key, 4)
    wq, bq = init_linear(ks[0], dim_Q, dim_V)
    wk, bk = init_linear(ks[1], dim_K, dim_V)
    wv, bv = init_linear(ks[2], dim_K, dim_V)
    wo, bo = init_linear(ks[3], dim_V, dim_V)
    return dict(wq=wq, bq=bq, wk=wk, bk=bk, wv=wv, bv=bv, wo=wo, bo=bo)


# ----------------------------------------------------------------------------
# Pure-JAX reference (mirrors the PyTorch module exactly) for a sanity check
# ----------------------------------------------------------------------------
def _mab_ref(Q, K, p, num_heads):
    dV = p["wq"].shape[1]
    dh = dV // num_heads
    Qp = Q @ p["wq"] + p["bq"]
    Kp = K @ p["wk"] + p["bk"]
    Vp = K @ p["wv"] + p["bv"]
    heads = []
    for h in range(num_heads):
        q = Qp[:, h * dh:(h + 1) * dh]
        k = Kp[:, h * dh:(h + 1) * dh]
        v = Vp[:, h * dh:(h + 1) * dh]
        A = jax.nn.softmax((q @ k.T) / math.sqrt(dV), axis=-1)
        heads.append(q + A @ v)
    O = jnp.concatenate(heads, axis=-1)
    return O + jax.nn.relu(O @ p["wo"] + p["bo"])


def set_transformer_ref(X, params, num_heads):
    h = _mab_ref(X, X, params["sab1"], num_heads)
    h = _mab_ref(h, h, params["sab2"], num_heads)
    p = _mab_ref(params["S"], h, params["pma"], num_heads)
    out = p @ params["w_dec"] + params["b_dec"]
    return out[0] if out.shape[0] == 1 else out


# ----------------------------------------------------------------------------
if __name__ == "__main__":
    # Small shapes consistent with the module's forward
    dim_input, num_outputs, dim_output = 8, 1, 4
    dim_hidden, num_heads = 32, 4
    N = 16                                            # set size

    key = jax.random.PRNGKey(0)
    kx, ks, k1, k2, k3, k4 = jax.random.split(key, 6)

    X = jax.random.normal(kx, (N, dim_input), jnp.float32)

    # PMA seed vector S: xavier_uniform over (1, num_seeds, dim) -> stored (num_seeds, dim)
    xav = math.sqrt(6.0 / (num_outputs + dim_hidden))
    params = {
        "sab1": init_mab(k1, dim_input, dim_input, dim_hidden),
        "sab2": init_mab(k2, dim_hidden, dim_hidden, dim_hidden),
        "pma": init_mab(k3, dim_hidden, dim_hidden, dim_hidden),
        "S": jax.random.uniform(ks, (num_outputs, dim_hidden), jnp.float32, -xav, xav),
    }
    params["w_dec"], params["b_dec"] = init_linear(k4, dim_hidden, dim_output)

    fwd = jax.jit(functools.partial(set_transformer_forward, num_heads=num_heads))
    out = jax.block_until_ready(fwd(X, params))

    ref = set_transformer_ref(X, params, num_heads)

    assert out.shape == (dim_output,), out.shape
    assert jnp.all(jnp.isfinite(out))
    # loose tolerance: kernel uses the EUP approximate reciprocal in softmax
    assert jnp.allclose(out, ref, rtol=5e-2, atol=5e-2), (out, ref)
    print("KERNEL_OK")
</pallas_src>

<mosaic_0001>
module attributes {stable_mosaic.version = 11 : i64} {
  func.func @_set_transformer_kernel(%arg0: memref<16x8xf32, #tpu.memory_space<vmem>>, %arg1: memref<1x32xf32, #tpu.memory_space<vmem>>, %arg2: memref<8x96xf32, #tpu.memory_space<vmem>>, %arg3: memref<1x96xf32, #tpu.memory_space<vmem>>, %arg4: memref<32x32xf32, #tpu.memory_space<vmem>>, %arg5: memref<1x32xf32, #tpu.memory_space<vmem>>, %arg6: memref<32x96xf32, #tpu.memory_space<vmem>>, %arg7: memref<1x96xf32, #tpu.memory_space<vmem>>, %arg8: memref<32x32xf32, #tpu.memory_space<vmem>>, %arg9: memref<1x32xf32, #tpu.memory_space<vmem>>, %arg10: memref<32x32xf32, #tpu.memory_space<vmem>>, %arg11: memref<1x32xf32, #tpu.memory_space<vmem>>, %arg12: memref<32x64xf32, #tpu.memory_space<vmem>>, %arg13: memref<1x64xf32, #tpu.memory_space<vmem>>, %arg14: memref<32x32xf32, #tpu.memory_space<vmem>>, %arg15: memref<1x32xf32, #tpu.memory_space<vmem>>, %arg16: memref<32x4xf32, #tpu.memory_space<vmem>>, %arg17: memref<1x4xf32, #tpu.memory_space<vmem>>, %arg18: memref<1x4xf32, #tpu.memory_space<vmem>>) attributes {dimension_semantics = [], scalar_prefetch = 0 : i64, scratch_operands = 0 : i64, tpu.core_type = #tpu.core_type<tc>} {
    %c0 = arith.constant 0 : index
    %c0_0 = arith.constant 0 : index
    %0 = vector.load %arg0[%c0, %c0_0] : memref<16x8xf32, #tpu.memory_space<vmem>>, vector<16x8xf32>
    %c0_1 = arith.constant 0 : index
    %c0_2 = arith.constant 0 : index
    %1 = vector.load %arg2[%c0_1, %c0_2] : memref<8x96xf32, #tpu.memory_space<vmem>>, vector<8x96xf32>
    %cst = arith.constant dense<0.000000e+00> : vector<16x96xf32>
    %2 = tpu.matmul %0, %1, %cst {dimension_numbers = #tpu.dot_dimension_numbers<[1], [0], [0], [1], [0, 0, 1, 1], [], []>} : vector<16x8xf32>, vector<8x96xf32>, vector<16x96xf32> -> vector<16x96xf32>
    %c0_3 = arith.constant 0 : index
    %c0_4 = arith.constant 0 : index
    %3 = vector.load %arg3[%c0_3, %c0_4] : memref<1x96xf32, #tpu.memory_space<vmem>>, vector<1x96xf32>
    %4 = vector.broadcast %3 : vector<1x96xf32> to vector<16x96xf32>
    %5 = arith.addf %2, %4 : vector<16x96xf32>
    %6 = vector.extract_strided_slice %5 {offsets = [0, 0], sizes = [16, 32], strides = [1, 1]} : vector<16x96xf32> to vector<16x32xf32>
    %7 = vector.extract_strided_slice %5 {offsets = [0, 32], sizes = [16, 32], strides = [1, 1]} : vector<16x96xf32> to vector<16x32xf32>
    %8 = vector.extract_strided_slice %5 {offsets = [0, 64], sizes = [16, 32], strides = [1, 1]} : vector<16x96xf32> to vector<16x32xf32>
    %c0_5 = arith.constant 0 : index
    %c0_6 = arith.constant 0 : index
    %9 = vector.load %arg4[%c0_5, %c0_6] : memref<32x32xf32, #tpu.memory_space<vmem>>, vector<32x32xf32>
    %c0_7 = arith.constant 0 : index
    %c0_8 = arith.constant 0 : index
    %10 = vector.load %arg5[%c0_7, %c0_8] : memref<1x32xf32, #tpu.memory_space<vmem>>, vector<1x32xf32>
    %11 = vector.extract_strided_slice %6 {offsets = [0, 0], sizes = [16, 8], strides = [1, 1]} : vector<16x32xf32> to vector<16x8xf32>
    %12 = vector.extract_strided_slice %6 {offsets = [0, 8], sizes = [16, 8], strides = [1, 1]} : vector<16x32xf32> to vector<16x8xf32>
    %13 = vector.extract_strided_slice %6 {offsets = [0, 16], sizes = [16, 8], strides = [1, 1]} : vector<16x32xf32> to vector<16x8xf32>
    %14 = vector.extract_strided_slice %6 {offsets = [0, 24], sizes = [16, 8], strides = [1, 1]} : vector<16x32xf32> to vector<16x8xf32>
    %15 = vector.shape_cast %11 : vector<16x8xf32> to vector<1x16x8xf32>
    %16 = vector.shape_cast %12 : vector<16x8xf32> to vector<1x16x8xf32>
    %17 = vector.shape_cast %13 : vector<16x8xf32> to vector<1x16x8xf32>
    %18 = vector.shape_cast %14 : vector<16x8xf32> to vector<1x16x8xf32>
    %19 = tpu.concatenate %15, %16, %17, %18 in 0 : vector<1x16x8xf32>, vector<1x16x8xf32>, vector<1x16x8xf32>, vector<1x16x8xf32> -> vector<4x16x8xf32>
    %20 = vector.extract_strided_slice %7 {offsets = [0, 0], sizes = [16, 8], strides = [1, 1]} : vector<16x32xf32> to vector<16x8xf32>
    %21 = vector.extract_strided_slice %7 {offsets = [0, 8], sizes = [16, 8], strides = [1, 1]} : vector<16x32xf32> to vector<16x8xf32>
    %22 = vector.extract_strided_slice %7 {offsets = [0, 16], sizes = [16, 8], strides = [1, 1]} : vector<16x32xf32> to vector<16x8xf32>
    %23 = vector.extract_strided_slice %7 {offsets = [0, 24], sizes = [16, 8], strides = [1, 1]} : vector<16x32xf32> to vector<16x8xf32>
    %24 = vector.shape_cast %20 : vector<16x8xf32> to vector<1x16x8xf32>
    %25 = vector.shape_cast %21 : vector<16x8xf32> to vector<1x16x8xf32>
    %26 = vector.shape_cast %22 : vector<16x8xf32> to vector<1x16x8xf32>
    %27 = vector.shape_cast %23 : vector<16x8xf32> to vector<1x16x8xf32>
    %28 = tpu.concatenate %24, %25, %26, %27 in 0 : vector<1x16x8xf32>, vector<1x16x8xf32>, vector<1x16x8xf32>, vector<1x16x8xf32> -> vector<4x16x8xf32>
    %29 = vector.extract_strided_slice %8 {offsets = [0, 0], sizes = [16, 8], strides = [1, 1]} : vector<16x32xf32> to vector<16x8xf32>
    %30 = vector.extract_strided_slice %8 {offsets = [0, 8], sizes = [16, 8], strides = [1, 1]} : vector<16x32xf32> to vector<16x8xf32>
    %31 = vector.extract_strided_slice %8 {offsets = [0, 16], sizes = [16, 8], strides = [1, 1]} : vector<16x32xf32> to vector<16x8xf32>
    %32 = vector.extract_strided_slice %8 {offsets = [0, 24], sizes = [16, 8], strides = [1, 1]} : vector<16x32xf32> to vector<16x8xf32>
    %33 = vector.shape_cast %29 : vector<16x8xf32> to vector<1x16x8xf32>
    %34 = vector.shape_cast %30 : vector<16x8xf32> to vector<1x16x8xf32>
    %35 = vector.shape_cast %31 : vector<16x8xf32> to vector<1x16x8xf32>
    %36 = vector.shape_cast %32 : vector<16x8xf32> to vector<1x16x8xf32>
    %37 = tpu.concatenate %33, %34, %35, %36 in 0 : vector<1x16x8xf32>, vector<1x16x8xf32>, vector<1x16x8xf32>, vector<1x16x8xf32> -> vector<4x16x8xf32>
    "tpu.trace_start"() <{level = 10 : i32, message = "hqd,hkd->hqk"}> : () -> ()
    %cst_9 = arith.constant dense<0.000000e+00> : vector<4x16x16xf32>
    %38 = tpu.matmul %19, %28, %cst_9 {dimension_numbers = #tpu.dot_dimension_numbers<[2], [2], [1], [1], [0, 0, 0, 1, 1, 1], [0], [0]>} : vector<4x16x8xf32>, vector<4x16x8xf32>, vector<4x16x16xf32> -> vector<4x16x16xf32>
    "tpu.trace_stop"() : () -> ()
    %cst_10 = arith.constant dense<0xFF800000> : vector<4x16xf32>
    %39 = vector.multi_reduction <maximumf>, %38, %cst_10 [2] : vector<4x16x16xf32> to vector<4x16xf32>
    %40 = vector.shape_cast %39 : vector<4x16xf32> to vector<4x16x1xf32>
    %41 = vector.broadcast %40 : vector<4x16x1xf32> to vector<4x16x16xf32>
    %42 = arith.subf %38, %41 : vector<4x16x16xf32>
    %43 = math.exp %42 : vector<4x16x16xf32>
    %cst_11 = arith.constant dense<0.000000e+00> : vector<4x16xf32>
    %44 = vector.multi_reduction <add>, %43, %cst_11 [2] : vector<4x16x16xf32> to vector<4x16xf32>
    %45 = vector.shape_cast %44 : vector<4x16xf32> to vector<4x16x1xf32>
    %46 = tpu.reciprocal %45 {approx = true} : vector<4x16x1xf32> -> vector<4x16x1xf32>
    %47 = vector.broadcast %46 : vector<4x16x1xf32> to vector<4x16x16xf32>
    %48 = arith.mulf %43, %47 : vector<4x16x16xf32>
    "tpu.trace_start"() <{level = 10 : i32, message = "hqk,hkd->hqd"}> : () -> ()
    %cst_12 = arith.constant dense<0.000000e+00> : vector<4x16x8xf32>
    %49 = tpu.matmul %48, %37, %cst_12 {dimension_numbers = #tpu.dot_dimension_numbers<[2], [1], [1], [2], [0, 0, 0, 1, 1, 2], [0], [0]>} : vector<4x16x16xf32>, vector<4x16x8xf32>, vector<4x16x8xf32> -> vector<4x16x8xf32>
    "tpu.trace_stop"() : () -> ()
    %50 = vector.extract_strided_slice %49 {offsets = [0, 0, 0], sizes = [1, 16, 8], strides = [1, 1, 1]} : vector<4x16x8xf32> to vector<1x16x8xf32>
    %51 = vector.shape_cast %50 : vector<1x16x8xf32> to vector<16x8xf32>
    %52 = vector.extract_strided_slice %49 {offsets = [1, 0, 0], sizes = [1, 16, 8], strides = [1, 1, 1]} : vector<4x16x8xf32> to vector<1x16x8xf32>
    %53 = vector.shape_cast %52 : vector<1x16x8xf32> to vector<16x8xf32>
    %54 = vector.extract_strided_slice %49 {offsets = [2, 0, 0], sizes = [1, 16, 8], strides = [1, 1, 1]} : vector<4x16x8xf32> to vector<1x16x8xf32>
    %55 = vector.shape_cast %54 : vector<1x16x8xf32> to vector<16x8xf32>
    %56 = vector.extract_strided_slice %49 {offsets = [3, 0, 0], sizes = [1, 16, 8], strides = [1, 1, 1]} : vector<4x16x8xf32> to vector<1x16x8xf32>
    %57 = vector.shape_cast %56 : vector<1x16x8xf32> to vector<16x8xf32>
    %58 = tpu.concatenate %51, %53, %55, %57 in 1 : vector<16x8xf32>, vector<16x8xf32>, vector<16x8xf32>, vector<16x8xf32> -> vector<16x32xf32>
    %59 = arith.addf %6, %58 : vector<16x32xf32>
    %cst_13 = arith.constant dense<0.000000e+00> : vector<16x32xf32>
    %60 = tpu.matmul %59, %9, %cst_13 {dimension_numbers = #tpu.dot_dimension_numbers<[1], [0], [0], [1], [0, 0, 1, 1], [], []>} : vector<16x32xf32>, vector<32x32xf32>, vector<16x32xf32> -> vector<16x32xf32>
    %61 = vector.broadcast %10 : vector<1x32xf32> to vector<16x32xf32>
    %62 = arith.addf %60, %61 : vector<16x32xf32>
    %cst_14 = arith.constant 0.000000e+00 : f32
    %63 = vector.broadcast %cst_14 : f32 to vector<16x32xf32>
    %64 = arith.maximumf %62, %63 : vector<16x32xf32>
    %65 = arith.addf %59, %64 : vector<16x32xf32>
    %c0_15 = arith.constant 0 : index
    %c0_16 = arith.constant 0 : index
    %66 = vector.load %arg6[%c0_15, %c0_16] : memref<32x96xf32, #tpu.memory_space<vmem>>, vector<32x96xf32>
    %cst_17 = arith.constant dense<0.000000e+00> : vector<16x96xf32>
    %67 = tpu.matmul %65, %66, %cst_17 {dimension_numbers = #tpu.dot_dimension_numbers<[1], [0], [0], [1], [0, 0, 1, 1], [], []>} : vector<16x32xf32>, vector<32x96xf32>, vector<16x96xf32> -> vector<16x96xf32>
    %c0_18 = arith.constant 0 : index
    %c0_19 = arith.constant 0 : index
    %68 = vector.load %arg7[%c0_18, %c0_19] : memref<1x96xf32, #tpu.memory_space<vmem>>, vector<1x96xf32>
    %69 = vector.broadcast %68 : vector<1x96xf32> to vector<16x96xf32>
    %70 = arith.addf %67, %69 : vector<16x96xf32>
    %71 = vector.extract_strided_slice %70 {offsets = [0, 0], sizes = [16, 32], strides = [1, 1]} : vector<16x96xf32> to vector<16x32xf32>
    %72 = vector.extract_strided_slice %70 {offsets = [0, 32], sizes = [16, 32], strides = [1, 1]} : vector<16x96xf32> to vector<16x32xf32>
    %73 = vector.extract_strided_slice %70 {offsets = [0, 64], sizes = [16, 32], strides = [1, 1]} : vector<16x96xf32> to vector<16x32xf32>
    %c0_20 = arith.constant 0 : index
    %c0_21 = arith.constant 0 : index
    %74 = vector.load %arg8[%c0_20, %c0_21] : memref<32x32xf32, #tpu.memory_space<vmem>>, vector<32x32xf32>
    %c0_22 = arith.constant 0 : index
    %c0_23 = arith.constant 0 : index
    %75 = vector.load %arg9[%c0_22, %c0_23] : memref<1x32xf32, #tpu.memory_space<vmem>>, vector<1x32xf32>
    %76 = vector.extract_strided_slice %71 {offsets = [0, 0], sizes = [16, 8], strides = [1, 1]} : vector<16x32xf32> to vector<16x8xf32>
    %77 = vector.extract_strided_slice %71 {offsets = [0, 8], sizes = [16, 8], strides = [1, 1]} : vector<16x32xf32> to vector<16x8xf32>
    %78 = vector.extract_strided_slice %71 {offsets = [0, 16], sizes = [16, 8], strides = [1, 1]} : vector<16x32xf32> to vector<16x8xf32>
    %79 = vector.extract_strided_slice %71 {offsets = [0, 24], sizes = [16, 8], strides = [1, 1]} : vector<16x32xf32> to vector<16x8xf32>
    %80 = vector.shape_cast %76 : vector<16x8xf32> to vector<1x16x8xf32>
    %81 = vector.shape_cast %77 : vector<16x8xf32> to vector<1x16x8xf32>
    %82 = vector.shape_cast %78 : vector<16x8xf32> to vector<1x16x8xf32>
    %83 = vector.shape_cast %79 : vector<16x8xf32> to vector<1x16x8xf32>
    %84 = tpu.concatenate %80, %81, %82, %83 in 0 : vector<1x16x8xf32>, vector<1x16x8xf32>, vector<1x16x8xf32>, vector<1x16x8xf32> -> vector<4x16x8xf32>
    %85 = vector.extract_strided_slice %72 {offsets = [0, 0], sizes = [16, 8], strides = [1, 1]} : vector<16x32xf32> to vector<16x8xf32>
    %86 = vector.extract_strided_slice %72 {offsets = [0, 8], sizes = [16, 8], strides = [1, 1]} : vector<16x32xf32> to vector<16x8xf32>
    %87 = vector.extract_strided_slice %72 {offsets = [0, 16], sizes = [16, 8], strides = [1, 1]} : vector<16x32xf32> to vector<16x8xf32>
    %88 = vector.extract_strided_slice %72 {offsets = [0, 24], sizes = [16, 8], strides = [1, 1]} : vector<16x32xf32> to vector<16x8xf32>
    %89 = vector.shape_cast %85 : vector<16x8xf32> to vector<1x16x8xf32>
    %90 = vector.shape_cast %86 : vector<16x8xf32> to vector<1x16x8xf32>
    %91 = vector.shape_cast %87 : vector<16x8xf32> to vector<1x16x8xf32>
    %92 = vector.shape_cast %88 : vector<16x8xf32> to vector<1x16x8xf32>
    %93 = tpu.concatenate %89, %90, %91, %92 in 0 : vector<1x16x8xf32>, vector<1x16x8xf32>, vector<1x16x8xf32>, vector<1x16x8xf32> -> vector<4x16x8xf32>
    %94 = vector.extract_strided_slice %73 {offsets = [0, 0], sizes = [16, 8], strides = [1, 1]} : vector<16x32xf32> to vector<16x8xf32>
    %95 = vector.extract_strided_slice %73 {offsets = [0, 8], sizes = [16, 8], strides = [1, 1]} : vector<16x32xf32> to vector<16x8xf32>
    %96 = vector.extract_strided_slice %73 {offsets = [0, 16], sizes = [16, 8], strides = [1, 1]} : vector<16x32xf32> to vector<16x8xf32>
    %97 = vector.extract_strided_slice %73 {offsets = [0, 24], sizes = [16, 8], strides = [1, 1]} : vector<16x32xf32> to vector<16x8xf32>
    %98 = vector.shape_cast %94 : vector<16x8xf32> to vector<1x16x8xf32>
    %99 = vector.shape_cast %95 : vector<16x8xf32> to vector<1x16x8xf32>
    %100 = vector.shape_cast %96 : vector<16x8xf32> to vector<1x16x8xf32>
    %101 = vector.shape_cast %97 : vector<16x8xf32> to vector<1x16x8xf32>
    %102 = tpu.concatenate %98, %99, %100, %101 in 0 : vector<1x16x8xf32>, vector<1x16x8xf32>, vector<1x16x8xf32>, vector<1x16x8xf32> -> vector<4x16x8xf32>
    "tpu.trace_start"() <{level = 10 : i32, message = "hqd,hkd->hqk"}> : () -> ()
    %cst_24 = arith.constant dense<0.000000e+00> : vector<4x16x16xf32>
    %103 = tpu.matmul %84, %93, %cst_24 {dimension_numbers = #tpu.dot_dimension_numbers<[2], [2], [1], [1], [0, 0, 0, 1, 1, 1], [0], [0]>} : vector<4x16x8xf32>, vector<4x16x8xf32>, vector<4x16x16xf32> -> vector<4x16x16xf32>
    "tpu.trace_stop"() : () -> ()
    %cst_25 = arith.constant dense<0xFF800000> : vector<4x16xf32>
    %104 = vector.multi_reduction <maximumf>, %103, %cst_25 [2] : vector<4x16x16xf32> to vector<4x16xf32>
    %105 = vector.shape_cast %104 : vector<4x16xf32> to vector<4x16x1xf32>
    %106 = vector.broadcast %105 : vector<4x16x1xf32> to vector<4x16x16xf32>
    %107 = arith.subf %103, %106 : vector<4x16x16xf32>
    %108 = math.exp %107 : vector<4x16x16xf32>
    %cst_26 = arith.constant dense<0.000000e+00> : vector<4x16xf32>
    %109 = vector.multi_reduction <add>, %108, %cst_26 [2] : vector<4x16x16xf32> to vector<4x16xf32>
    %110 = vector.shape_cast %109 : vector<4x16xf32> to vector<4x16x1xf32>
    %111 = tpu.reciprocal %110 {approx = true} : vector<4x16x1xf32> -> vector<4x16x1xf32>
    %112 = vector.broadcast %111 : vector<4x16x1xf32> to vector<4x16x16xf32>
    %113 = arith.mulf %108, %112 : vector<4x16x16xf32>
    "tpu.trace_start"() <{level = 10 : i32, message = "hqk,hkd->hqd"}> : () -> ()
    %cst_27 = arith.constant dense<0.000000e+00> : vector<4x16x8xf32>
    %114 = tpu.matmul %113, %102, %cst_27 {dimension_numbers = #tpu.dot_dimension_numbers<[2], [1], [1], [2], [0, 0, 0, 1, 1, 2], [0], [0]>} : vector<4x16x16xf32>, vector<4x16x8xf32>, vector<4x16x8xf32> -> vector<4x16x8xf32>
    "tpu.trace_stop"() : () -> ()
    %115 = vector.extract_strided_slice %114 {offsets = [0, 0, 0], sizes = [1, 16, 8], strides = [1, 1, 1]} : vector<4x16x8xf32> to vector<1x16x8xf32>
    %116 = vector.shape_cast %115 : vector<1x16x8xf32> to vector<16x8xf32>
    %117 = vector.extract_strided_slice %114 {offsets = [1, 0, 0], sizes = [1, 16, 8], strides = [1, 1, 1]} : vector<4x16x8xf32> to vector<1x16x8xf32>
    %118 = vector.shape_cast %117 : vector<1x16x8xf32> to vector<16x8xf32>
    %119 = vector.extract_strided_slice %114 {offsets = [2, 0, 0], sizes = [1, 16, 8], strides = [1, 1, 1]} : vector<4x16x8xf32> to vector<1x16x8xf32>
    %120 = vector.shape_cast %119 : vector<1x16x8xf32> to vector<16x8xf32>
    %121 = vector.extract_strided_slice %114 {offsets = [3, 0, 0], sizes = [1, 16, 8], strides = [1, 1, 1]} : vector<4x16x8xf32> to vector<1x16x8xf32>
    %122 = vector.shape_cast %121 : vector<1x16x8xf32> to vector<16x8xf32>
    %123 = tpu.concatenate %116, %118, %120, %122 in 1 : vector<16x8xf32>, vector<16x8xf32>, vector<16x8xf32>, vector<16x8xf32> -> vector<16x32xf32>
    %124 = arith.addf %71, %123 : vector<16x32xf32>
    %cst_28 = arith.constant dense<0.000000e+00> : vector<16x32xf32>
    %125 = tpu.matmul %124, %74, %cst_28 {dimension_numbers = #tpu.dot_dimension_numbers<[1], [0], [0], [1], [0, 0, 1, 1], [], []>} : vector<16x32xf32>, vector<32x32xf32>, vector<16x32xf32> -> vector<16x32xf32>
    %126 = vector.broadcast %75 : vector<1x32xf32> to vector<16x32xf32>
    %127 = arith.addf %125, %126 : vector<16x32xf32>
    %cst_29 = arith.constant 0.000000e+00 : f32
    %128 = vector.broadcast %cst_29 : f32 to vector<16x32xf32>
    %129 = arith.maximumf %127, %128 : vector<16x32xf32>
    %130 = arith.addf %124, %129 : vector<16x32xf32>
    %c0_30 = arith.constant 0 : index
    %c0_31 = arith.constant 0 : index
    %131 = vector.load %arg1[%c0_30, %c0_31] : memref<1x32xf32, #tpu.memory_space<vmem>>, vector<1x32xf32>
    %c0_32 = arith.constant 0 : index
    %c0_33 = arith.constant 0 : index
    %132 = vector.load %arg10[%c0_32, %c0_33] : memref<32x32xf32, #tpu.memory_space<vmem>>, vector<32x32xf32>
    %cst_34 = arith.constant dense<0.000000e+00> : vector<1x32xf32>
    %133 = tpu.matmul %131, %132, %cst_34 {dimension_numbers = #tpu.dot_dimension_numbers<[1], [0], [0], [1], [0, 0, 1, 1], [], []>} : vector<1x32xf32>, vector<32x32xf32>, vector<1x32xf32> -> vector<1x32xf32>
    %c0_35 = arith.constant 0 : index
    %c0_36 = arith.constant 0 : index
    %134 = vector.load %arg11[%c0_35, %c0_36] : memref<1x32xf32, #tpu.memory_space<vmem>>, vector<1x32xf32>
    %135 = arith.addf %133, %134 : vector<1x32xf32>
    %c0_37 = arith.constant 0 : index
    %c0_38 = arith.constant 0 : index
    %136 = vector.load %arg12[%c0_37, %c0_38] : memref<32x64xf32, #tpu.memory_space<vmem>>, vector<32x64xf32>
    %cst_39 = arith.constant dense<0.000000e+00> : vector<16x64xf32>
    %137 = tpu.matmul %130, %136, %cst_39 {dimension_numbers = #tpu.dot_dimension_numbers<[1], [0], [0], [1], [0, 0, 1, 1], [], []>} : vector<16x32xf32>, vector<32x64xf32>, vector<16x64xf32> -> vector<16x64xf32>
    %c0_40 = arith.constant 0 : index
    %c0_41 = arith.constant 0 : index
    %138 = vector.load %arg13[%c0_40, %c0_41] : memref<1x64xf32, #tpu.memory_space<vmem>>, vector<1x64xf32>
    %139 = vector.broadcast %138 : vector<1x64xf32> to vector<16x64xf32>
    %140 = arith.addf %137, %139 : vector<16x64xf32>
    %141 = vector.extract_strided_slice %140 {offsets = [0, 0], sizes = [16, 32], strides = [1, 1]} : vector<16x64xf32> to vector<16x32xf32>
    %142 = vector.extract_strided_slice %140 {offsets = [0, 32], sizes = [16, 32], strides = [1, 1]} : vector<16x64xf32> to vector<16x32xf32>
    %c0_42 = arith.constant 0 : index
    %c0_43 = arith.constant 0 : index
    %143 = vector.load %arg14[%c0_42, %c0_43] : memref<32x32xf32, #tpu.memory_space<vmem>>, vector<32x32xf32>
    %c0_44 = arith.constant 0 : index
    %c0_45 = arith.constant 0 : index
    %144 = vector.load %arg15[%c0_44, %c0_45] : memref<1x32xf32, #tpu.memory_space<vmem>>, vector<1x32xf32>
    %145 = vector.extract_strided_slice %135 {offsets = [0, 0], sizes = [1, 8], strides = [1, 1]} : vector<1x32xf32> to vector<1x8xf32>
    %146 = vector.extract_strided_slice %135 {offsets = [0, 8], sizes = [1, 8], strides = [1, 1]} : vector<1x32xf32> to vector<1x8xf32>
    %147 = vector.extract_strided_slice %135 {offsets = [0, 16], sizes = [1, 8], strides = [1, 1]} : vector<1x32xf32> to vector<1x8xf32>
    %148 = vector.extract_strided_slice %135 {offsets = [0, 24], sizes = [1, 8], strides = [1, 1]} : vector<1x32xf32> to vector<1x8xf32>
    %149 = vector.shape_cast %145 : vector<1x8xf32> to vector<1x1x8xf32>
    %150 = vector.shape_cast %146 : vector<1x8xf32> to vector<1x1x8xf32>
    %151 = vector.shape_cast %147 : vector<1x8xf32> to vector<1x1x8xf32>
    %152 = vector.shape_cast %148 : vector<1x8xf32> to vector<1x1x8xf32>
    %153 = tpu.concatenate %149, %150, %151, %152 in 0 : vector<1x1x8xf32>, vector<1x1x8xf32>, vector<1x1x8xf32>, vector<1x1x8xf32> -> vector<4x1x8xf32>
    %154 = vector.extract_strided_slice %141 {offsets = [0, 0], sizes = [16, 8], strides = [1, 1]} : vector<16x32xf32> to vector<16x8xf32>
    %155 = vector.extract_strided_slice %141 {offsets = [0, 8], sizes = [16, 8], strides = [1, 1]} : vector<16x32xf32> to vector<16x8xf32>
    %156 = vector.extract_strided_slice %141 {offsets = [0, 16], sizes = [16, 8], strides = [1, 1]} : vector<16x32xf32> to vector<16x8xf32>
    %157 = vector.extract_strided_slice %141 {offsets = [0, 24], sizes = [16, 8], strides = [1, 1]} : vector<16x32xf32> to vector<16x8xf32>
    %158 = vector.shape_cast %154 : vector<16x8xf32> to vector<1x16x8xf32>
    %159 = vector.shape_cast %155 : vector<16x8xf32> to vector<1x16x8xf32>
    %160 = vector.shape_cast %156 : vector<16x8xf32> to vector<1x16x8xf32>
    %161 = vector.shape_cast %157 : vector<16x8xf32> to vector<1x16x8xf32>
    %162 = tpu.concatenate %158, %159, %160, %161 in 0 : vector<1x16x8xf32>, vector<1x16x8xf32>, vector<1x16x8xf32>, vector<1x16x8xf32> -> vector<4x16x8xf32>
    %163 = vector.extract_strided_slice %142 {offsets = [0, 0], sizes = [16, 8], strides = [1, 1]} : vector<16x32xf32> to vector<16x8xf32>
    %164 = vector.extract_strided_slice %142 {offsets = [0, 8], sizes = [16, 8], strides = [1, 1]} : vector<16x32xf32> to vector<16x8xf32>
    %165 = vector.extract_strided_slice %142 {offsets = [0, 16], sizes = [16, 8], strides = [1, 1]} : vector<16x32xf32> to vector<16x8xf32>
    %166 = vector.extract_strided_slice %142 {offsets = [0, 24], sizes = [16, 8], strides = [1, 1]} : vector<16x32xf32> to vector<16x8xf32>
    %167 = vector.shape_cast %163 : vector<16x8xf32> to vector<1x16x8xf32>
    %168 = vector.shape_cast %164 : vector<16x8xf32> to vector<1x16x8xf32>
    %169 = vector.shape_cast %165 : vector<16x8xf32> to vector<1x16x8xf32>
    %170 = vector.shape_cast %166 : vector<16x8xf32> to vector<1x16x8xf32>
    %171 = tpu.concatenate %167, %168, %169, %170 in 0 : vector<1x16x8xf32>, vector<1x16x8xf32>, vector<1x16x8xf32>, vector<1x16x8xf32> -> vector<4x16x8xf32>
    "tpu.trace_start"() <{level = 10 : i32, message = "hqd,hkd->hqk"}> : () -> ()
    %cst_46 = arith.constant dense<0.000000e+00> : vector<4x1x16xf32>
    %172 = tpu.matmul %153, %162, %cst_46 {dimension_numbers = #tpu.dot_dimension_numbers<[2], [2], [1], [1], [0, 0, 0, 1, 1, 1], [0], [0]>} : vector<4x1x8xf32>, vector<4x16x8xf32>, vector<4x1x16xf32> -> vector<4x1x16xf32>
    "tpu.trace_stop"() : () -> ()
    %cst_47 = arith.constant dense<0xFF800000> : vector<4x1xf32>
    %173 = vector.multi_reduction <maximumf>, %172, %cst_47 [2] : vector<4x1x16xf32> to vector<4x1xf32>
    %174 = vector.shape_cast %173 : vector<4x1xf32> to vector<4x1x1xf32>
    %175 = vector.broadcast %174 : vector<4x1x1xf32> to vector<4x1x16xf32>
    %176 = arith.subf %172, %175 : vector<4x1x16xf32>
    %177 = math.exp %176 : vector<4x1x16xf32>
    %cst_48 = arith.constant dense<0.000000e+00> : vector<4x1xf32>
    %178 = vector.multi_reduction <add>, %177, %cst_48 [2] : vector<4x1x16xf32> to vector<4x1xf32>
    %179 = vector.shape_cast %178 : vector<4x1xf32> to vector<4x1x1xf32>
    %180 = tpu.reciprocal %179 {approx = true} : vector<4x1x1xf32> -> vector<4x1x1xf32>
    %181 = vector.broadcast %180 : vector<4x1x1xf32> to vector<4x1x16xf32>
    %182 = arith.mulf %177, %181 : vector<4x1x16xf32>
    "tpu.trace_start"() <{level = 10 : i32, message = "hqk,hkd->hqd"}> : () -> ()
    %cst_49 = arith.constant dense<0.000000e+00> : vector<4x1x8xf32>
    %183 = tpu.matmul %182, %171, %cst_49 {dimension_numbers = #tpu.dot_dimension_numbers<[2], [1], [1], [2], [0, 0, 0, 1, 1, 2], [0], [0]>} : vector<4x1x16xf32>, vector<4x16x8xf32>, vector<4x1x8xf32> -> vector<4x1x8xf32>
    "tpu.trace_stop"() : () -> ()
    %184 = vector.extract_strided_slice %183 {offsets = [0, 0, 0], sizes = [1, 1, 8], strides = [1, 1, 1]} : vector<4x1x8xf32> to vector<1x1x8xf32>
    %185 = vector.shape_cast %184 : vector<1x1x8xf32> to vector<1x8xf32>
    %186 = vector.extract_strided_slice %183 {offsets = [1, 0, 0], sizes = [1, 1, 8], strides = [1, 1, 1]} : vector<4x1x8xf32> to vector<1x1x8xf32>
    %187 = vector.shape_cast %186 : vector<1x1x8xf32> to vector<1x8xf32>
    %188 = vector.extract_strided_slice %183 {offsets = [2, 0, 0], sizes = [1, 1, 8], strides = [1, 1, 1]} : vector<4x1x8xf32> to vector<1x1x8xf32>
    %189 = vector.shape_cast %188 : vector<1x1x8xf32> to vector<1x8xf32>
    %190 = vector.extract_strided_slice %183 {offsets = [3, 0, 0], sizes = [1, 1, 8], strides = [1, 1, 1]} : vector<4x1x8xf32> to vector<1x1x8xf32>
    %191 = vector.shape_cast %190 : vector<1x1x8xf32> to vector<1x8xf32>
    %192 = tpu.concatenate %185, %187, %189, %191 in 1 : vector<1x8xf32>, vector<1x8xf32>, vector<1x8xf32>, vector<1x8xf32> -> vector<1x32xf32>
    %193 = arith.addf %135, %192 : vector<1x32xf32>
    %cst_50 = arith.constant dense<0.000000e+00> : vector<1x32xf32>
    %194 = tpu.matmul %193, %143, %cst_50 {dimension_numbers = #tpu.dot_dimension_numbers<[1], [0], [0], [1], [0, 0, 1, 1], [], []>} : vector<1x32xf32>, vector<32x32xf32>, vector<1x32xf32> -> vector<1x32xf32>
    %195 = arith.addf %194, %144 : vector<1x32xf32>
    %cst_51 = arith.constant 0.000000e+00 : f32
    %196 = vector.broadcast %cst_51 : f32 to vector<1x32xf32>
    %197 = arith.maximumf %195, %196 : vector<1x32xf32>
    %198 = arith.addf %193, %197 : vector<1x32xf32>
    %c0_52 = arith.constant 0 : index
    %c0_53 = arith.constant 0 : index
    %199 = vector.load %arg16[%c0_52, %c0_53] : memref<32x4xf32, #tpu.memory_space<vmem>>, vector<32x4xf32>
    %cst_54 = arith.constant dense<0.000000e+00> : vector<1x4xf32>
    %200 = tpu.matmul %198, %199, %cst_54 {dimension_numbers = #tpu.dot_dimension_numbers<[1], [0], [0], [1], [0, 0, 1, 1], [], []>} : vector<1x32xf32>, vector<32x4xf32>, vector<1x4xf32> -> vector<1x4xf32>
    %c0_55 = arith.constant 0 : index
    %c0_56 = arith.constant 0 : index
    %201 = vector.load %arg17[%c0_55, %c0_56] : memref<1x4xf32, #tpu.memory_space<vmem>>, vector<1x4xf32>
    %202 = arith.addf %200, %201 : vector<1x4xf32>
    %c0_57 = arith.constant 0 : index
    %c0_58 = arith.constant 0 : index
    %203 = vector.load %arg18[%c0_57, %c0_58] : memref<1x4xf32, #tpu.memory_space<vmem>>, vector<1x4xf32>
    tpu.vector_store %arg18[%c0_57, %c0_58], %202 {strides = array<i32>} : memref<1x4xf32, #tpu.memory_space<vmem>>, vector<1x4xf32>,
    return
  }
}

</mosaic_0001>

<llo_original>
// kernel: set_transformer_forward.1
$region0: #{set_transformer_forward.1}
  #allocation0 [shape = 'u32[]', space=smem, size = 0x4, offset = 0x4, fixed_abs, tag = 'smem constant byte address 0x4 - core index']
  #allocation1 [shape = 'u32[144,128]{1,0:T(1,128)}', space=vmem, size = 0x12000, scoped, tag = 'internal scratch']
  %s0 = inlined_call_operand.vmem [shape: f32[16,8], index: 0, kind: input, shape index: {}]
  %s1 = inlined_call_operand.vmem [shape: f32[1,32], index: 1, kind: input, shape index: {}]
  %s2 = inlined_call_operand.vmem [shape: f32[8,96], index: 2, kind: input, shape index: {}]
  %s3 = inlined_call_operand.vmem [shape: f32[1,96], index: 3, kind: input, shape index: {}]
  %s4 = inlined_call_operand.vmem [shape: f32[32,32], index: 4, kind: input, shape index: {}]
  %s5 = inlined_call_operand.vmem [shape: f32[1,32], index: 5, kind: input, shape index: {}]
  %s6 = inlined_call_operand.vmem [shape: f32[32,96], index: 6, kind: input, shape index: {}]
  %s7 = inlined_call_operand.vmem [shape: f32[1,96], index: 7, kind: input, shape index: {}]
  %s8 = inlined_call_operand.vmem [shape: f32[32,32], index: 8, kind: input, shape index: {}]
  %s9 = inlined_call_operand.vmem [shape: f32[1,32], index: 9, kind: input, shape index: {}]
  %s10 = inlined_call_operand.vmem [shape: f32[32,32], index: 10, kind: input, shape index: {}]
  %s11 = inlined_call_operand.vmem [shape: f32[1,32], index: 11, kind: input, shape index: {}]
  %s12 = inlined_call_operand.vmem [shape: f32[32,64], index: 12, kind: input, shape index: {}]
  %s13 = inlined_call_operand.vmem [shape: f32[1,64], index: 13, kind: input, shape index: {}]
  %s14 = inlined_call_operand.vmem [shape: f32[32,32], index: 14, kind: input, shape index: {}]
  %s15 = inlined_call_operand.vmem [shape: f32[1,32], index: 15, kind: input, shape index: {}]
  %s16 = inlined_call_operand.vmem [shape: f32[32,4], index: 16, kind: input, shape index: {}]
  %s17 = inlined_call_operand.vmem [shape: f32[1,4], index: 17, kind: input, shape index: {}]
  %s18 = inlined_call_operand.hbm [shape: f32[1,4], index: 18, kind: output, shape index: {}]
  %s19 = sld [smem:[#allocation0]]
  $region82: #{set_transformer_forward.1} parent=0
    _
  %s21 = ssub.s32 1, %s19
  %s22 = scalar_select 0, %s21, %s19
  $region1: #{set_transformer_forward.1} parent=0
    #allocation2 [shape = 'u8[512]{0}', space=vmem, size = 0x400, scoped, tag = 'output window, operand 0, single buffered']
    #allocation3 [shape = 's32[1]{0}', space=sflag, size = 0x4, scoped, tag = 'scoped memory for set_transformer_forward.1']
    %23 = vsyncpa [#allocation3], 0
    // Predicated region
    $region2: #{set_transformer_forward.1} parent=1 // pred_check
      _
    $region3: #{set_transformer_forward.1} parent=1 // pred_check_branch
      %25 = sbr.rel (0) target = $region5
    $region4: #{set_transformer_forward.1} parent=1 // pred_region
      _
    $region5: #{set_transformer_forward.1} parent=1 // pred_fallthru
      _
    // Predicated region
    $region6: #{set_transformer_forward.1} parent=1 // pred_check
      _
    $region7: #{set_transformer_forward.1} parent=1 // pred_check_branch
      %27 = sbr.rel (0) target = $region9
    $region8: #{set_transformer_forward.1} parent=1 // pred_region
      _
    $region9: #{set_transformer_forward.1} parent=1 // pred_fallthru
      _
    // Predicated region
    $region10: #{set_transformer_forward.1} parent=1 // pred_check
      _
    $region11: #{set_transformer_forward.1} parent=1 // pred_check_branch
      %29 = sbr.rel (0) target = $region13
    $region12: #{set_transformer_forward.1} parent=1 // pred_region
      _
    $region13: #{set_transformer_forward.1} parent=1 // pred_fallthru
      _
    // Predicated region
    $region14: #{set_transformer_forward.1} parent=1 // pred_check
      _
    $region15: #{set_transformer_forward.1} parent=1 // pred_check_branch
      %31 = sbr.rel (0) target = $region17
    $region16: #{set_transformer_forward.1} parent=1 // pred_region
      _
    $region17: #{set_transformer_forward.1} parent=1 // pred_fallthru
      _
    // Predicated region
    $region18: #{set_transformer_forward.1} parent=1 // pred_check
      _
    $region19: #{set_transformer_forward.1} parent=1 // pred_check_branch
      %33 = sbr.rel (0) target = $region21
    $region20: #{set_transformer_forward.1} parent=1 // pred_region
      _
    $region21: #{set_transformer_forward.1} parent=1 // pred_fallthru
      _
    // Predicated region
    $region22: #{set_transformer_forward.1} parent=1 // pred_check
      _
    $region23: #{set_transformer_forward.1} parent=1 // pred_check_branch
      %35 = sbr.rel (0) target = $region25
    $region24: #{set_transformer_forward.1} parent=1 // pred_region
      _
    $region25: #{set_transformer_forward.1} parent=1 // pred_fallthru
      _
    // Predicated region
    $region26: #{set_transformer_forward.1} parent=1 // pred_check
      _
    $region27: #{set_transformer_forward.1} parent=1 // pred_check_branch
      %37 = sbr.rel (0) target = $region29
    $region28: #{set_transformer_forward.1} parent=1 // pred_region
      _
    $region29: #{set_transformer_forward.1} parent=1 // pred_fallthru
      _
    // Predicated region
    $region30: #{set_transformer_forward.1} parent=1 // pred_check
      _
    $region31: #{set_transformer_forward.1} parent=1 // pred_check_branch
      %39 = sbr.rel (0) target = $region33
    $region32: #{set_transformer_forward.1} parent=1 // pred_region
      _
    $region33: #{set_transformer_forward.1} parent=1 // pred_fallthru
      _
    // Predicated region
    $region34: #{set_transformer_forward.1} parent=1 // pred_check
      _
    $region35: #{set_transformer_forward.1} parent=1 // pred_check_branch
      %41 = sbr.rel (0) target = $region37
    $region36: #{set_transformer_forward.1} parent=1 // pred_region
      _
    $region37: #{set_transformer_forward.1} parent=1 // pred_fallthru
      _
    // Predicated region
    $region38: #{set_transformer_forward.1} parent=1 // pred_check
      _
    $region39: #{set_transformer_forward.1} parent=1 // pred_check_branch
      %43 = sbr.rel (0) target = $region41
    $region40: #{set_transformer_forward.1} parent=1 // pred_region
      _
    $region41: #{set_transformer_forward.1} parent=1 // pred_fallthru
      _
    // Predicated region
    $region42: #{set_transformer_forward.1} parent=1 // pred_check
      _
    $region43: #{set_transformer_forward.1} parent=1 // pred_check_branch
      %45 = sbr.rel (0) target = $region45
    $region44: #{set_transformer_forward.1} parent=1 // pred_region
      _
    $region45: #{set_transformer_forward.1} parent=1 // pred_fallthru
      _
    // Predicated region
    $region46: #{set_transformer_forward.1} parent=1 // pred_check
      _
    $region47: #{set_transformer_forward.1} parent=1 // pred_check_branch
      %47 = sbr.rel (0) target = $region49
    $region48: #{set_transformer_forward.1} parent=1 // pred_region
      _
    $region49: #{set_transformer_forward.1} parent=1 // pred_fallthru
      _
    // Predicated region
    $region50: #{set_transformer_forward.1} parent=1 // pred_check
      _
    $region51: #{set_transformer_forward.1} parent=1 // pred_check_branch
      %49 = sbr.rel (0) target = $region53
    $region52: #{set_transformer_forward.1} parent=1 // pred_region
      _
    $region53: #{set_transformer_forward.1} parent=1 // pred_fallthru
      _
    // Predicated region
    $region54: #{set_transformer_forward.1} parent=1 // pred_check
      _
    $region55: #{set_transformer_forward.1} parent=1 // pred_check_branch
      %51 = sbr.rel (0) target = $region57
    $region56: #{set_transformer_forward.1} parent=1 // pred_region
      _
    $region57: #{set_transformer_forward.1} parent=1 // pred_fallthru
      _
    // Predicated region
    $region58: #{set_transformer_forward.1} parent=1 // pred_check
      _
    $region59: #{set_transformer_forward.1} parent=1 // pred_check_branch
      %53 = sbr.rel (0) target = $region61
    $region60: #{set_transformer_forward.1} parent=1 // pred_region
      _
    $region61: #{set_transformer_forward.1} parent=1 // pred_fallthru
      _
    // Predicated region
    $region62: #{set_transformer_forward.1} parent=1 // pred_check
      _
    $region63: #{set_transformer_forward.1} parent=1 // pred_check_branch
      %55 = sbr.rel (0) target = $region65
    $region64: #{set_transformer_forward.1} parent=1 // pred_region
      _
    $region65: #{set_transformer_forward.1} parent=1 // pred_fallthru
      _
    // Predicated region
    $region66: #{set_transformer_forward.1} parent=1 // pred_check
      _
    $region67: #{set_transformer_forward.1} parent=1 // pred_check_branch
      %57 = sbr.rel (0) target = $region69
    $region68: #{set_transformer_forward.1} parent=1 // pred_region
      _
    $region69: #{set_transformer_forward.1} parent=1 // pred_fallthru
      _
    // Predicated region
    $region70: #{set_transformer_forward.1} parent=1 // pred_check
      _
    $region71: #{set_transformer_forward.1} parent=1 // pred_check_branch
      %59 = sbr.rel (0) target = $region73
    $region72: #{set_transformer_forward.1} parent=1 // pred_region
      _
    $region73: #{set_transformer_forward.1} parent=1 // pred_fallthru
      _
    %v60 = vld [vmem:[%s0] sm:$0xff]
    %v61 = vld [vmem:[%s0 + $0x8] sm:$0xff]
    %v62 = vld [vmem:[%s2] sm:$0xff]
    %v63 = vld [vmem:[%s3] sm:$0x1]
    %v65 = vlaneseq
    %v66 = vshrl.u32 %v65, 7
    %v67 = vsub.s32 0, %v66
    %v68 = vrot.slane %v63, %v67
    %vm70 = vcmask 64512
    %v72 = vsel %vm70, %v60, 0
    %v75 = vsel %vm70, %v61, 0
    %77 = vmatprep.subr.mxu0 0.0
    %78 = vmatpush1.msra.mxu0 %v62
    %79 = vmatprep.subr.mxu0 0.0
    %80 = vmatpush1.msra.mxu0 0.0
    %81 = vmatprep.subr.mxu0 0.0
    %82 = vmatpush1.msra.mxu0 0.0
    %83 = vmatprep.subr.mxu0 0.0
    %84 = vmatpush1.msra.mxu0 0.0
    %85 = vmatprep.subr.mxu0 0.0
    %86 = vmatpush1.msra.mxu0 0.0
    %87 = vmatprep.subr.mxu0 0.0
    %88 = vmatpush1.msra.mxu0 0.0
    %89 = vmatprep.subr.mxu0 0.0
    %90 = vmatpush1.msra.mxu0 0.0
    %91 = vmatprep.subr.mxu0 0.0
    %92 = vmatpush1.msra.mxu0 0.0
    %93 = vmatprep.subr.mxu0 0.0
    %94 = vmatpush1.msra.mxu0 0.0
    %95 = vmatprep.subr.mxu0 0.0
    %96 = vmatpush1.msra.mxu0 0.0
    %97 = vmatprep.subr.mxu0 0.0
    %98 = vmatpush1.msra.mxu0 0.0
    %99 = vmatprep.subr.mxu0 0.0
    %100 = vmatpush1.msra.mxu0 0.0
    %101 = vmatprep.subr.mxu0 0.0
    %102 = vmatpush1.msra.mxu0 0.0
    %103 = vmatprep.subr.mxu0 0.0
    %104 = vmatpush1.msra.mxu0 0.0
    %105 = vmatprep.subr.mxu0 0.0
    %106 = vmatpush1.msra.mxu0 0.0
    %107 = vmatprep.subr.mxu0 0.0
    %108 = vmatpush1.msra.mxu0 0.0
    %109 = vmatprep.subr.mxu0 0.0
    %110 = vmatpush1.msra.mxu0 0.0
    %111 = vmatprep.subr.mxu0 0.0
    %112 = vmatpush1.msra.mxu0 0.0
    %113 = vmatprep.subr.mxu0 0.0
    %114 = vmatpush1.msra.mxu0 0.0
    %115 = vmatprep.subr.mxu0 0.0
    %116 = vmatpush1.msra.mxu0 0.0
    %117 = vmatprep.subr.mxu0 0.0
    %118 = vmatpush1.msra.mxu0 0.0
    %119 = vmatprep.subr.mxu0 0.0
    %120 = vmatpush1.msra.mxu0 0.0
    %121 = vmatprep.subr.mxu0 0.0
    %122 = vmatpush1.msra.mxu0 0.0
    %123 = vmatprep.subr.mxu0 0.0
    %124 = vmatpush1.msra.mxu0 0.0
    %125 = vmatprep.subr.mxu0 0.0
    %126 = vmatpush1.msra.mxu0 0.0
    %127 = vmatprep.subr.mxu0 0.0
    %128 = vmatpush1.msra.mxu0 0.0
    %129 = vmatprep.subr.mxu0 0.0
    %130 = vmatpush1.msra.mxu0 0.0
    %131 = vmatprep.subr.mxu0 0.0
    %132 = vmatpush1.msra.mxu0 0.0
    %133 = vmatprep.subr.mxu0 0.0
    %134 = vmatpush1.msra.mxu0 0.0
    %135 = vmatprep.subr.mxu0 0.0
    %136 = vmatpush1.msra.mxu0 0.0
    %137 = vmatprep.subr.mxu0 0.0
    %138 = vmatpush1.msra.mxu0 0.0
    %139 = vmatprep.subr.mxu0 0.0
    %140 = vmatpush1.msra.mxu0 0.0
    %141 = vmatprep.mubr.f32.mxu0 0.0
    %142 = vmatmul.mubr.f32.gmra.mrb[0].mxu0 %v72
    %v143 = vpop.f32.mrb[0].mxu0
    %v144 = vadd.f32 %v68, %v143
    %v145 = vpop.f32.mrb[0].mxu0
    %146 = vmatprep.mubr.f32.mxu0 0.0
    %147 = vmatmul.mubr.f32.gmra.mrb[0].mxu0 %v75
    %v148 = vpop.f32.mrb[0].mxu0
    %v149 = vadd.f32 %v68, %v148
    %v150 = vpop.f32.mrb[0].mxu0
    %151 = vdwg.mxu0
    %v152 = vld [vmem:[%s4] sm:$0xff]
    %v153 = vld [vmem:[%s4 + $0x8] sm:$0xff]
    %v154 = vld [vmem:[%s4 + $0x10] sm:$0xff]
    %v155 = vld [vmem:[%s4 + $0x18] sm:$0xff]
    %v156 = vld [vmem:[%s5] sm:$0x1]
    %159 = vrot.lane.b32.xlu0 %v144, 120
    %v160 = vpop.permute.xlu0 %159
    %161 = vrot.lane.b32.xlu0 %v149, 120
    %v162 = vpop.permute.xlu0 %161
    %163 = vrot.lane.b32.xlu0 %v144, 112
    %v164 = vpop.permute.xlu0 %163
    %165 = vrot.lane.b32.xlu0 %v149, 112
    %v166 = vpop.permute.xlu0 %165
    %167 = vrot.lane.b32.xlu0 %v144, 104
    %v168 = vpop.permute.xlu0 %167
    %169 = vrot.lane.b32.xlu0 %v149, 104
    %v170 = vpop.permute.xlu0 %169
    %171 = vrot.lane.b32.xlu0 %v144, 96
    %v172 = vpop.permute.xlu0 %171
    %173 = vrot.lane.b32.xlu0 %v149, 96
    %v174 = vpop.permute.xlu0 %173
    %v175 = vsel %vm70, %v144, 0
    %v177 = vsel %vm70, %v149, 0
    %v179 = vsel %vm70, %v172, 0
    %v181 = vsel %vm70, %v174, 0
    %183 = vmatprep.subr.mxu0 0.0
    %184 = vmatpush1.xpose.msra.mxu0 %v179
    %185 = vmatprep.subr.mxu0 0.0
    %186 = vmatpush1.xpose.msra.mxu0 %v181
    %187 = vmatprep.subr.mxu0 0.0
    %188 = vmatpush1.xpose.msra.mxu0 0.0
    %189 = vmatprep.subr.mxu0 0.0
    %190 = vmatpush1.xpose.msra.mxu0 0.0
    %191 = vmatprep.subr.mxu0 0.0
    %192 = vmatpush1.xpose.msra.mxu0 0.0
    %193 = vmatprep.subr.mxu0 0.0
    %194 = vmatpush1.xpose.msra.mxu0 0.0
    %195 = vmatprep.subr.mxu0 0.0
    %196 = vmatpush1.xpose.msra.mxu0 0.0
    %197 = vmatprep.subr.mxu0 0.0
    %198 = vmatpush1.xpose.msra.mxu0 0.0
    %199 = vmatprep.subr.mxu0 0.0
    %200 = vmatpush1.xpose.msra.mxu0 0.0
    %201 = vmatprep.subr.mxu0 0.0
    %202 = vmatpush1.xpose.msra.mxu0 0.0
    %203 = vmatprep.subr.mxu0 0.0
    %204 = vmatpush1.xpose.msra.mxu0 0.0
    %205 = vmatprep.subr.mxu0 0.0
    %206 = vmatpush1.xpose.msra.mxu0 0.0
    %207 = vmatprep.subr.mxu0 0.0
    %208 = vmatpush1.xpose.msra.mxu0 0.0
    %209 = vmatprep.subr.mxu0 0.0
    %210 = vmatpush1.xpose.msra.mxu0 0.0
    %211 = vmatprep.subr.mxu0 0.0
    %212 = vmatpush1.xpose.msra.mxu0 0.0
    %213 = vmatprep.subr.mxu0 0.0
    %214 = vmatpush1.xpose.msra.mxu0 0.0
    %215 = vmatprep.subr.mxu0 0.0
    %216 = vmatpush1.xpose.msra.mxu0 0.0
    %217 = vmatprep.subr.mxu0 0.0
    %218 = vmatpush1.xpose.msra.mxu0 0.0
    %219 = vmatprep.subr.mxu0 0.0
    %220 = vmatpush1.xpose.msra.mxu0 0.0
    %221 = vmatprep.subr.mxu0 0.0
    %222 = vmatpush1.xpose.msra.mxu0 0.0
    %223 = vmatprep.subr.mxu0 0.0
    %224 = vmatpush1.xpose.msra.mxu0 0.0
    %225 = vmatprep.subr.mxu0 0.0
    %226 = vmatpush1.xpose.msra.mxu0 0.0
    %227 = vmatprep.subr.mxu0 0.0
    %228 = vmatpush1.xpose.msra.mxu0 0.0
    %229 = vmatprep.subr.mxu0 0.0
    %230 = vmatpush1.xpose.msra.mxu0 0.0
    %231 = vmatprep.subr.mxu0 0.0
    %232 = vmatpush1.xpose.msra.mxu0 0.0
    %233 = vmatprep.subr.mxu0 0.0
    %234 = vmatpush1.xpose.msra.mxu0 0.0
    %235 = vmatprep.subr.mxu0 0.0
    %236 = vmatpush1.xpose.msra.mxu0 0.0
    %237 = vmatprep.subr.mxu0 0.0
    %238 = vmatpush1.xpose.msra.mxu0 0.0
    %239 = vmatprep.subr.mxu0 0.0
    %240 = vmatpush1.xpose.msra.mxu0 0.0
    %241 = vmatprep.subr.mxu0 0.0
    %242 = vmatpush1.xpose.msra.mxu0 0.0
    %243 = vmatprep.subr.mxu0 0.0
    %244 = vmatpush1.xpose.msra.mxu0 0.0
    %245 = vmatprep.subr.mxu0 0.0
    %246 = vmatpush1.xpose.msra.mxu0 0.0
    %247 = vmatprep.mubr.f32.mxu0 0.0
    %248 = vmatmul.mubr.f32.gmra.mrb[0].mxu0 %v175
    %v249 = vpop.f32.mrb[0].mxu0
    %v250 = vadd.f32 0.0, %v249
    %v251 = vpop.f32.mrb[0].mxu0
    %252 = vmatprep.mubr.f32.mxu0 0.0
    %253 = vmatmul.mubr.f32.gmra.mrb[0].mxu0 %v177
    %v254 = vpop.f32.mrb[0].mxu0
    %v255 = vadd.f32 0.0, %v254
    %v256 = vpop.f32.mrb[0].mxu0
    %257 = vdwg.mxu0
    %258 = vrot.lane.b32.xlu0 %v160, 96
    %v259 = vpop.permute.xlu0 %258
    %260 = vrot.lane.b32.xlu0 %v162, 96
    %v261 = vpop.permute.xlu0 %260
    %v262 = vsel %vm70, %v160, 0
    %v264 = vsel %vm70, %v162, 0
    %v266 = vsel %vm70, %v259, 0
    %v268 = vsel %vm70, %v261, 0
    %270 = vmatprep.subr.mxu0 0.0
    %271 = vmatpush1.xpose.msra.mxu0 %v266
    %272 = vmatprep.subr.mxu0 0.0
    %273 = vmatpush1.xpose.msra.mxu0 %v268
    %274 = vmatprep.subr.mxu0 0.0
    %275 = vmatpush1.xpose.msra.mxu0 0.0
    %276 = vmatprep.subr.mxu0 0.0
    %277 = vmatpush1.xpose.msra.mxu0 0.0
    %278 = vmatprep.subr.mxu0 0.0
    %279 = vmatpush1.xpose.msra.mxu0 0.0
    %280 = vmatprep.subr.mxu0 0.0
    %281 = vmatpush1.xpose.msra.mxu0 0.0
    %282 = vmatprep.subr.mxu0 0.0
    %283 = vmatpush1.xpose.msra.mxu0 0.0
    %284 = vmatprep.subr.mxu0 0.0
    %285 = vmatpush1.xpose.msra.mxu0 0.0
    %286 = vmatprep.subr.mxu0 0.0
    %287 = vmatpush1.xpose.msra.mxu0 0.0
    %288 = vmatprep.subr.mxu0 0.0
    %289 = vmatpush1.xpose.msra.mxu0 0.0
    %290 = vmatprep.subr.mxu0 0.0
    %291 = vmatpush1.xpose.msra.mxu0 0.0
    %292 = vmatprep.subr.mxu0 0.0
    %293 = vmatpush1.xpose.msra.mxu0 0.0
    %294 = vmatprep.subr.mxu0 0.0
    %295 = vmatpush1.xpose.msra.mxu0 0.0
    %296 = vmatprep.subr.mxu0 0.0
    %297 = vmatpush1.xpose.msra.mxu0 0.0
    %298 = vmatprep.subr.mxu0 0.0
    %299 = vmatpush1.xpose.msra.mxu0 0.0
    %300 = vmatprep.subr.mxu0 0.0
    %301 = vmatpush1.xpose.msra.mxu0 0.0
    %302 = vmatprep.subr.mxu0 0.0
    %303 = vmatpush1.xpose.msra.mxu0 0.0
    %304 = vmatprep.subr.mxu0 0.0
    %305 = vmatpush1.xpose.msra.mxu0 0.0
    %306 = vmatprep.subr.mxu0 0.0
    %307 = vmatpush1.xpose.msra.mxu0 0.0
    %308 = vmatprep.subr.mxu0 0.0
    %309 = vmatpush1.xpose.msra.mxu0 0.0
    %310 = vmatprep.subr.mxu0 0.0
    %311 = vmatpush1.xpose.msra.mxu0 0.0
    %312 = vmatprep.subr.mxu0 0.0
    %313 = vmatpush1.xpose.msra.mxu0 0.0
    %314 = vmatprep.subr.mxu0 0.0
    %315 = vmatpush1.xpose.msra.mxu0 0.0
    %316 = vmatprep.subr.mxu0 0.0
    %317 = vmatpush1.xpose.msra.mxu0 0.0
    %318 = vmatprep.subr.mxu0 0.0
    %319 = vmatpush1.xpose.msra.mxu0 0.0
    %320 = vmatprep.subr.mxu0 0.0
    %321 = vmatpush1.xpose.msra.mxu0 0.0
    %322 = vmatprep.subr.mxu0 0.0
    %323 = vmatpush1.xpose.msra.mxu0 0.0
    %324 = vmatprep.subr.mxu0 0.0
    %325 = vmatpush1.xpose.msra.mxu0 0.0
    %326 = vmatprep.subr.mxu0 0.0
    %327 = vmatpush1.xpose.msra.mxu0 0.0
    %328 = vmatprep.subr.mxu0 0.0
    %329 = vmatpush1.xpose.msra.mxu0 0.0
    %330 = vmatprep.subr.mxu0 0.0
    %331 = vmatpush1.xpose.msra.mxu0 0.0
    %332 = vmatprep.subr.mxu0 0.0
    %333 = vmatpush1.xpose.msra.mxu0 0.0
    %334 = vmatprep.mubr.f32.mxu0 0.0
    %335 = vmatmul.mubr.f32.gmra.mrb[0].mxu0 %v262
    %v336 = vpop.f32.mrb[0].mxu0
    %v337 = vadd.f32 0.0, %v336
    %v338 = vpop.f32.mrb[0].mxu0
    %339 = vmatprep.mubr.f32.mxu0 0.0
    %340 = vmatmul.mubr.f32.gmra.mrb[0].mxu0 %v264
    %v341 = vpop.f32.mrb[0].mxu0
    %v342 = vadd.f32 0.0, %v341
    %v343 = vpop.f32.mrb[0].mxu0
    %344 = vdwg.mxu0
    %345 = vrot.lane.b32.xlu0 %v164, 96
    %v346 = vpop.permute.xlu0 %345
    %347 = vrot.lane.b32.xlu0 %v166, 96
    %v348 = vpop.permute.xlu0 %347
    %v349 = vsel %vm70, %v164, 0
    %v351 = vsel %vm70, %v166, 0
    %v353 = vsel %vm70, %v346, 0
    %v355 = vsel %vm70, %v348, 0
    %357 = vmatprep.subr.mxu0 0.0
    %358 = vmatpush1.xpose.msra.mxu0 %v353
    %359 = vmatprep.subr.mxu0 0.0
    %360 = vmatpush1.xpose.msra.mxu0 %v355
    %361 = vmatprep.subr.mxu0 0.0
    %362 = vmatpush1.xpose.msra.mxu0 0.0
    %363 = vmatprep.subr.mxu0 0.0
    %364 = vmatpush1.xpose.msra.mxu0 0.0
    %365 = vmatprep.subr.mxu0 0.0
    %366 = vmatpush1.xpose.msra.mxu0 0.0
    %367 = vmatprep.subr.mxu0 0.0
    %368 = vmatpush1.xpose.msra.mxu0 0.0
    %369 = vmatprep.subr.mxu0 0.0
    %370 = vmatpush1.xpose.msra.mxu0 0.0
    %371 = vmatprep.subr.mxu0 0.0
    %372 = vmatpush1.xpose.msra.mxu0 0.0
    %373 = vmatprep.subr.mxu0 0.0
    %374 = vmatpush1.xpose.msra.mxu0 0.0
    %375 = vmatprep.subr.mxu0 0.0
    %376 = vmatpush1.xpose.msra.mxu0 0.0
    %377 = vmatprep.subr.mxu0 0.0
    %378 = vmatpush1.xpose.msra.mxu0 0.0
    %379 = vmatprep.subr.mxu0 0.0
    %380 = vmatpush1.xpose.msra.mxu0 0.0
    %381 = vmatprep.subr.mxu0 0.0
    %382 = vmatpush1.xpose.msra.mxu0 0.0
    %383 = vmatprep.subr.mxu0 0.0
    %384 = vmatpush1.xpose.msra.mxu0 0.0
    %385 = vmatprep.subr.mxu0 0.0
    %386 = vmatpush1.xpose.msra.mxu0 0.0
    %387 = vmatprep.subr.mxu0 0.0
    %388 = vmatpush1.xpose.msra.mxu0 0.0
    %389 = vmatprep.subr.mxu0 0.0
    %390 = vmatpush1.xpose.msra.mxu0 0.0
    %391 = vmatprep.subr.mxu0 0.0
    %392 = vmatpush1.xpose.msra.mxu0 0.0
    %393 = vmatprep.subr.mxu0 0.0
    %394 = vmatpush1.xpose.msra.mxu0 0.0
    %395 = vmatprep.subr.mxu0 0.0
    %396 = vmatpush1.xpose.msra.mxu0 0.0
    %397 = vmatprep.subr.mxu0 0.0
    %398 = vmatpush1.xpose.msra.mxu0 0.0
    %399 = vmatprep.subr.mxu0 0.0
    %400 = vmatpush1.xpose.msra.mxu0 0.0
    %401 = vmatprep.subr.mxu0 0.0
    %402 = vmatpush1.xpose.msra.mxu0 0.0
    %403 = vmatprep.subr.mxu0 0.0
    %404 = vmatpush1.xpose.msra.mxu0 0.0
    %405 = vmatprep.subr.mxu0 0.0
    %406 = vmatpush1.xpose.msra.mxu0 0.0
    %407 = vmatprep.subr.mxu0 0.0
    %408 = vmatpush1.xpose.msra.mxu0 0.0
    %409 = vmatprep.subr.mxu0 0.0
    %410 = vmatpush1.xpose.msra.mxu0 0.0
    %411 = vmatprep.subr.mxu0 0.0
    %412 = vmatpush1.xpose.msra.mxu0 0.0
    %413 = vmatprep.subr.mxu0 0.0
    %414 = vmatpush1.xpose.msra.mxu0 0.0
    %415 = vmatprep.subr.mxu0 0.0
    %416 = vmatpush1.xpose.msra.mxu0 0.0
    %417 = vmatprep.subr.mxu0 0.0
    %418 = vmatpush1.xpose.msra.mxu0 0.0
    %419 = vmatprep.subr.mxu0 0.0
    %420 = vmatpush1.xpose.msra.mxu0 0.0
    %421 = vmatprep.mubr.f32.mxu0 0.0
    %422 = vmatmul.mubr.f32.gmra.mrb[0].mxu0 %v349
    %v423 = vpop.f32.mrb[0].mxu0
    %v424 = vadd.f32 0.0, %v423
    %v425 = vpop.f32.mrb[0].mxu0
    %426 = vmatprep.mubr.f32.mxu0 0.0
    %427 = vmatmul.mubr.f32.gmra.mrb[0].mxu0 %v351
    %v428 = vpop.f32.mrb[0].mxu0
    %v429 = vadd.f32 0.0, %v428
    %v430 = vpop.f32.mrb[0].mxu0
    %431 = vdwg.mxu0
    %432 = vrot.lane.b32.xlu0 %v168, 96
    %v433 = vpop.permute.xlu0 %432
    %434 = vrot.lane.b32.xlu0 %v170, 96
    %v435 = vpop.permute.xlu0 %434
    %v436 = vsel %vm70, %v168, 0
    %v438 = vsel %vm70, %v170, 0
    %v440 = vsel %vm70, %v433, 0
    %v442 = vsel %vm70, %v435, 0
    %444 = vmatprep.subr.mxu0 0.0
    %445 = vmatpush1.xpose.msra.mxu0 %v440
    %446 = vmatprep.subr.mxu0 0.0
    %447 = vmatpush1.xpose.msra.mxu0 %v442
    %448 = vmatprep.subr.mxu0 0.0
    %449 = vmatpush1.xpose.msra.mxu0 0.0
    %450 = vmatprep.subr.mxu0 0.0
    %451 = vmatpush1.xpose.msra.mxu0 0.0
    %452 = vmatprep.subr.mxu0 0.0
    %453 = vmatpush1.xpose.msra.mxu0 0.0
    %454 = vmatprep.subr.mxu0 0.0
    %455 = vmatpush1.xpose.msra.mxu0 0.0
    %456 = vmatprep.subr.mxu0 0.0
    %457 = vmatpush1.xpose.msra.mxu0 0.0
    %458 = vmatprep.subr.mxu0 0.0
    %459 = vmatpush1.xpose.msra.mxu0 0.0
    %460 = vmatprep.subr.mxu0 0.0
    %461 = vmatpush1.xpose.msra.mxu0 0.0
    %462 = vmatprep.subr.mxu0 0.0
    %463 = vmatpush1.xpose.msra.mxu0 0.0
    %464 = vmatprep.subr.mxu0 0.0
    %465 = vmatpush1.xpose.msra.mxu0 0.0
    %466 = vmatprep.subr.mxu0 0.0
    %467 = vmatpush1.xpose.msra.mxu0 0.0
    %468 = vmatprep.subr.mxu0 0.0
    %469 = vmatpush1.xpose.msra.mxu0 0.0
    %470 = vmatprep.subr.mxu0 0.0
    %471 = vmatpush1.xpose.msra.mxu0 0.0
    %472 = vmatprep.subr.mxu0 0.0
    %473 = vmatpush1.xpose.msra.mxu0 0.0
    %474 = vmatprep.subr.mxu0 0.0
    %475 = vmatpush1.xpose.msra.mxu0 0.0
    %476 = vmatprep.subr.mxu0 0.0
    %477 = vmatpush1.xpose.msra.mxu0 0.0
    %478 = vmatprep.subr.mxu0 0.0
    %479 = vmatpush1.xpose.msra.mxu0 0.0
    %480 = vmatprep.subr.mxu0 0.0
    %481 = vmatpush1.xpose.msra.mxu0 0.0
    %482 = vmatprep.subr.mxu0 0.0
    %483 = vmatpush1.xpose.msra.mxu0 0.0
    %484 = vmatprep.subr.mxu0 0.0
    %485 = vmatpush1.xpose.msra.mxu0 0.0
    %486 = vmatprep.subr.mxu0 0.0
    %487 = vmatpush1.xpose.msra.mxu0 0.0
    %488 = vmatprep.subr.mxu0 0.0
    %489 = vmatpush1.xpose.msra.mxu0 0.0
    %490 = vmatprep.subr.mxu0 0.0
    %491 = vmatpush1.xpose.msra.mxu0 0.0
    %492 = vmatprep.subr.mxu0 0.0
    %493 = vmatpush1.xpose.msra.mxu0 0.0
    %494 = vmatprep.subr.mxu0 0.0
    %495 = vmatpush1.xpose.msra.mxu0 0.0
    %496 = vmatprep.subr.mxu0 0.0
    %497 = vmatpush1.xpose.msra.mxu0 0.0
    %498 = vmatprep.subr.mxu0 0.0
    %499 = vmatpush1.xpose.msra.mxu0 0.0
    %500 = vmatprep.subr.mxu0 0.0
    %501 = vmatpush1.xpose.msra.mxu0 0.0
    %502 = vmatprep.subr.mxu0 0.0
    %503 = vmatpush1.xpose.msra.mxu0 0.0
    %504 = vmatprep.subr.mxu0 0.0
    %505 = vmatpush1.xpose.msra.mxu0 0.0
    %506 = vmatprep.subr.mxu0 0.0
    %507 = vmatpush1.xpose.msra.mxu0 0.0
    %508 = vmatprep.mubr.f32.mxu0 0.0
    %509 = vmatmul.mubr.f32.gmra.mrb[0].mxu0 %v436
    %v510 = vpop.f32.mrb[0].mxu0
    %v511 = vadd.f32 0.0, %v510
    %v512 = vpop.f32.mrb[0].mxu0
    %513 = vmatprep.mubr.f32.mxu0 0.0
    %514 = vmatmul.mubr.f32.gmra.mrb[0].mxu0 %v438
    %v515 = vpop.f32.mrb[0].mxu0
    %v516 = vadd.f32 0.0, %v515
    %v517 = vpop.f32.mrb[0].mxu0
    %518 = vdwg.mxu0
    %vm519 = vcmask 130048
    %v520 = vsel %vm519, %v250, -inf
    %521 = vmax.xlane.f32.xlu0 %v520
    %v522 = vpop.xlane.xlu0 %521
    %v523 = vsel %vm519, %v255, -inf
    %524 = vmax.xlane.f32.xlu0 %v523
    %v525 = vpop.xlane.xlu0 %524
    %v526 = vsel %vm519, %v337, -inf
    %527 = vmax.xlane.f32.xlu0 %v526
    %v528 = vpop.xlane.xlu0 %527
    %v529 = vsel %vm519, %v342, -inf
    %530 = vmax.xlane.f32.xlu0 %v529
    %v531 = vpop.xlane.xlu0 %530
    %v532 = vsel %vm519, %v424, -inf
    %533 = vmax.xlane.f32.xlu0 %v532
    %v534 = vpop.xlane.xlu0 %533
    %v535 = vsel %vm519, %v429, -inf
    %536 = vmax.xlane.f32.xlu0 %v535
    %v537 = vpop.xlane.xlu0 %536
    %v538 = vsel %vm519, %v511, -inf
    %539 = vmax.xlane.f32.xlu0 %v538
    %v540 = vpop.xlane.xlu0 %539
    %v541 = vsel %vm519, %v516, -inf
    %542 = vmax.xlane.f32.xlu0 %v541
    %v543 = vpop.xlane.xlu0 %542
    %v544 = vsub.f32 %v250, %v522
    %v545 = vsub.f32 %v255, %v525
    %v546 = vsub.f32 %v337, %v528
    %v547 = vsub.f32 %v342, %v531
    %v548 = vsub.f32 %v424, %v534
    %v549 = vsub.f32 %v429, %v537
    %v550 = vsub.f32 %v511, %v540
    %v551 = vsub.f32 %v516, %v543
    %v552 = vmul.f32 %v544, 1.442695
    %v553 = vpow.pop %v552
    %v554 = vmul.f32 %v545, 1.442695
    %v555 = vpow.pop %v554
    %v556 = vmul.f32 %v546, 1.442695
    %v557 = vpow.pop %v556
    %v558 = vmul.f32 %v547, 1.442695
    %v559 = vpow.pop %v558
    %v560 = vmul.f32 %v548, 1.442695
    %v561 = vpow.pop %v560
    %v562 = vmul.f32 %v549, 1.442695
    %v563 = vpow.pop %v562
    %v564 = vmul.f32 %v550, 1.442695
    %v565 = vpow.pop %v564
    %v566 = vmul.f32 %v551, 1.442695
    %v567 = vpow.pop %v566
    %v568 = vsel %vm519, %v553, 0.0
    %569 = vadd.xlane.f32.xlu0 %v568
    %v570 = vpop.xlane.xlu0 %569
    %v571 = vsel %vm519, %v555, 0.0
    %572 = vadd.xlane.f32.xlu0 %v571
    %v573 = vpop.xlane.xlu0 %572
    %v574 = vsel %vm519, %v557, 0.0
    %575 = vadd.xlane.f32.xlu0 %v574
    %v576 = vpop.xlane.xlu0 %575
    %v577 = vsel %vm519, %v559, 0.0
    %578 = vadd.xlane.f32.xlu0 %v577
    %v579 = vpop.xlane.xlu0 %578
    %v580 = vsel %vm519, %v561, 0.0
    %581 = vadd.xlane.f32.xlu0 %v580
    %v582 = vpop.xlane.xlu0 %581
    %v583 = vsel %vm519, %v563, 0.0
    %584 = vadd.xlane.f32.xlu0 %v583
    %v585 = vpop.xlane.xlu0 %584
    %v586 = vsel %vm519, %v565, 0.0
    %587 = vadd.xlane.f32.xlu0 %v586
    %v588 = vpop.xlane.xlu0 %587
    %v589 = vsel %vm519, %v567, 0.0
    %590 = vadd.xlane.f32.xlu0 %v589
    %v591 = vpop.xlane.xlu0 %590
    %v592 = vrcp.pop %v570
    %v593 = vrcp.pop %v573
    %v594 = vrcp.pop %v576
    %v595 = vrcp.pop %v579
    %v596 = vrcp.pop %v582
    %v597 = vrcp.pop %v585
    %v598 = vrcp.pop %v588
    %v599 = vrcp.pop %v591
    %v600 = vmul.f32 %v553, %v592
    %v601 = vmul.f32 %v555, %v593
    %v602 = vmul.f32 %v557, %v594
    %v603 = vmul.f32 %v559, %v595
    %v604 = vmul.f32 %v561, %v596
    %v605 = vmul.f32 %v563, %v597
    %v606 = vmul.f32 %v565, %v598
    %v607 = vmul.f32 %v567, %v599
    %608 = vrot.lane.b32.xlu0 %v144, 64
    %v609 = vpop.permute.xlu0 %608
    %610 = vrot.lane.b32.xlu0 %v149, 64
    %v611 = vpop.permute.xlu0 %610
    %v615 = vsel %vm519, %v600, 0
    %v618 = vsel %vm519, %v601, 0
    %620 = vmatprep.subr.mxu0 0.0
    %621 = vmatpush1.msra.mxu0 %v609
    %622 = vmatprep.subr.mxu0 0.0
    %623 = vmatpush1.msra.mxu0 %v611
    %624 = vmatprep.subr.mxu0 0.0
    %625 = vmatpush1.msra.mxu0 0.0
    %626 = vmatprep.subr.mxu0 0.0
    %627 = vmatpush1.msra.mxu0 0.0
    %628 = vmatprep.subr.mxu0 0.0
    %629 = vmatpush1.msra.mxu0 0.0
    %630 = vmatprep.subr.mxu0 0.0
    %631 = vmatpush1.msra.mxu0 0.0
    %632 = vmatprep.subr.mxu0 0.0
    %633 = vmatpush1.msra.mxu0 0.0
    %634 = vmatprep.subr.mxu0 0.0
    %635 = vmatpush1.msra.mxu0 0.0
    %636 = vmatprep.subr.mxu0 0.0
    %637 = vmatpush1.msra.mxu0 0.0
    %638 = vmatprep.subr.mxu0 0.0
    %639 = vmatpush1.msra.mxu0 0.0
    %640 = vmatprep.subr.mxu0 0.0
    %641 = vmatpush1.msra.mxu0 0.0
    %642 = vmatprep.subr.mxu0 0.0
    %643 = vmatpush1.msra.mxu0 0.0
    %644 = vmatprep.subr.mxu0 0.0
    %645 = vmatpush1.msra.mxu0 0.0
    %646 = vmatprep.subr.mxu0 0.0
    %647 = vmatpush1.msra.mxu0 0.0
    %648 = vmatprep.subr.mxu0 0.0
    %649 = vmatpush1.msra.mxu0 0.0
    %650 = vmatprep.subr.mxu0 0.0
    %651 = vmatpush1.msra.mxu0 0.0
    %652 = vmatprep.subr.mxu0 0.0
    %653 = vmatpush1.msra.mxu0 0.0
    %654 = vmatprep.subr.mxu0 0.0
    %655 = vmatpush1.msra.mxu0 0.0
    %656 = vmatprep.subr.mxu0 0.0
    %657 = vmatpush1.msra.mxu0 0.0
    %658 = vmatprep.subr.mxu0 0.0
    %659 = vmatpush1.msra.mxu0 0.0
    %660 = vmatprep.subr.mxu0 0.0
    %661 = vmatpush1.msra.mxu0 0.0
    %662 = vmatprep.subr.mxu0 0.0
    %663 = vmatpush1.msra.mxu0 0.0
    %664 = vmatprep.subr.mxu0 0.0
    %665 = vmatpush1.msra.mxu0 0.0
    %666 = vmatprep.subr.mxu0 0.0
    %667 = vmatpush1.msra.mxu0 0.0
    %668 = vmatprep.subr.mxu0 0.0
    %669 = vmatpush1.msra.mxu0 0.0
    %670 = vmatprep.subr.mxu0 0.0
    %671 = vmatpush1.msra.mxu0 0.0
    %672 = vmatprep.subr.mxu0 0.0
    %673 = vmatpush1.msra.mxu0 0.0
    %674 = vmatprep.subr.mxu0 0.0
    %675 = vmatpush1.msra.mxu0 0.0
    %676 = vmatprep.subr.mxu0 0.0
    %677 = vmatpush1.msra.mxu0 0.0
    %678 = vmatprep.subr.mxu0 0.0
    %679 = vmatpush1.msra.mxu0 0.0
    %680 = vmatprep.subr.mxu0 0.0
    %681 = vmatpush1.msra.mxu0 0.0
    %682 = vmatprep.subr.mxu0 0.0
    %683 = vmatpush1.msra.mxu0 0.0
    %684 = vmatprep.mubr.f32.mxu0 0.0
    %685 = vmatmul.mubr.f32.gmra.mrb[0].mxu0 %v615
    %v686 = vpop.f32.mrb[0].mxu0
    %v687 = vadd.f32 0.0, %v686
    %v688 = vpop.f32.mrb[0].mxu0
    %689 = vmatprep.mubr.f32.mxu0 0.0
    %690 = vmatmul.mubr.f32.gmra.mrb[0].mxu0 %v618
    %v691 = vpop.f32.mrb[0].mxu0
    %v692 = vadd.f32 0.0, %v691
    %v693 = vpop.f32.mrb[0].mxu0
    %694 = vdwg.mxu0
    %695 = vrot.lane.b32.xlu0 %v160, 64
    %v696 = vpop.permute.xlu0 %695
    %697 = vrot.lane.b32.xlu0 %v162, 64
    %v698 = vpop.permute.xlu0 %697
    %v702 = vsel %vm519, %v602, 0
    %v705 = vsel %vm519, %v603, 0
    %707 = vmatprep.subr.mxu0 0.0
    %708 = vmatpush1.msra.mxu0 %v696
    %709 = vmatprep.subr.mxu0 0.0
    %710 = vmatpush1.msra.mxu0 %v698
    %711 = vmatprep.subr.mxu0 0.0
    %712 = vmatpush1.msra.mxu0 0.0
    %713 = vmatprep.subr.mxu0 0.0
    %714 = vmatpush1.msra.mxu0 0.0
    %715 = vmatprep.subr.mxu0 0.0
    %716 = vmatpush1.msra.mxu0 0.0
    %717 = vmatprep.subr.mxu0 0.0
    %718 = vmatpush1.msra.mxu0 0.0
    %719 = vmatprep.subr.mxu0 0.0
    %720 = vmatpush1.msra.mxu0 0.0
    %721 = vmatprep.subr.mxu0 0.0
    %722 = vmatpush1.msra.mxu0 0.0
    %723 = vmatprep.subr.mxu0 0.0
    %724 = vmatpush1.msra.mxu0 0.0
    %725 = vmatprep.subr.mxu0 0.0
    %726 = vmatpush1.msra.mxu0 0.0
    %727 = vmatprep.subr.mxu0 0.0
    %728 = vmatpush1.msra.mxu0 0.0
    %729 = vmatprep.subr.mxu0 0.0
    %730 = vmatpush1.msra.mxu0 0.0
    %731 = vmatprep.subr.mxu0 0.0
    %732 = vmatpush1.msra.mxu0 0.0
    %733 = vmatprep.subr.mxu0 0.0
    %734 = vmatpush1.msra.mxu0 0.0
    %735 = vmatprep.subr.mxu0 0.0
    %736 = vmatpush1.msra.mxu0 0.0
    %737 = vmatprep.subr.mxu0 0.0
    %738 = vmatpush1.msra.mxu0 0.0
    %739 = vmatprep.subr.mxu0 0.0
    %740 = vmatpush1.msra.mxu0 0.0
    %741 = vmatprep.subr.mxu0 0.0
    %742 = vmatpush1.msra.mxu0 0.0
    %743 = vmatprep.subr.mxu0 0.0
    %744 = vmatpush1.msra.mxu0 0.0
    %745 = vmatprep.subr.mxu0 0.0
    %746 = vmatpush1.msra.mxu0 0.0
    %747 = vmatprep.subr.mxu0 0.0
    %748 = vmatpush1.msra.mxu0 0.0
    %749 = vmatprep.subr.mxu0 0.0
    %750 = vmatpush1.msra.mxu0 0.0
    %751 = vmatprep.subr.mxu0 0.0
    %752 = vmatpush1.msra.mxu0 0.0
    %753 = vmatprep.subr.mxu0 0.0
    %754 = vmatpush1.msra.mxu0 0.0
    %755 = vmatprep.subr.mxu0 0.0
    %756 = vmatpush1.msra.mxu0 0.0
    %757 = vmatprep.subr.mxu0 0.0
    %758 = vmatpush1.msra.mxu0 0.0
    %759 = vmatprep.subr.mxu0 0.0
    %760 = vmatpush1.msra.mxu0 0.0
    %761 = vmatprep.subr.mxu0 0.0
    %762 = vmatpush1.msra.mxu0 0.0
    %763 = vmatprep.subr.mxu0 0.0
    %764 = vmatpush1.msra.mxu0 0.0
    %765 = vmatprep.subr.mxu0 0.0
    %766 = vmatpush1.msra.mxu0 0.0
    %767 = vmatprep.subr.mxu0 0.0
    %768 = vmatpush1.msra.mxu0 0.0
    %769 = vmatprep.subr.mxu0 0.0
    %770 = vmatpush1.msra.mxu0 0.0
    %771 = vmatprep.mubr.f32.mxu0 0.0
    %772 = vmatmul.mubr.f32.gmra.mrb[0].mxu0 %v702
    %v773 = vpop.f32.mrb[0].mxu0
    %v774 = vadd.f32 0.0, %v773
    %v775 = vpop.f32.mrb[0].mxu0
    %776 = vmatprep.mubr.f32.mxu0 0.0
    %777 = vmatmul.mubr.f32.gmra.mrb[0].mxu0 %v705
    %v778 = vpop.f32.mrb[0].mxu0
    %v779 = vadd.f32 0.0, %v778
    %v780 = vpop.f32.mrb[0].mxu0
    %781 = vdwg.mxu0
    %782 = vrot.lane.b32.xlu0 %v164, 64
    %v783 = vpop.permute.xlu0 %782
    %784 = vrot.lane.b32.xlu0 %v166, 64
    %v785 = vpop.permute.xlu0 %784
    %v789 = vsel %vm519, %v604, 0
    %v792 = vsel %vm519, %v605, 0
    %794 = vmatprep.subr.mxu0 0.0
    %795 = vmatpush1.msra.mxu0 %v783
    %796 = vmatprep.subr.mxu0 0.0
    %797 = vmatpush1.msra.mxu0 %v785
    %798 = vmatprep.subr.mxu0 0.0
    %799 = vmatpush1.msra.mxu0 0.0
    %800 = vmatprep.subr.mxu0 0.0
    %801 = vmatpush1.msra.mxu0 0.0
    %802 = vmatprep.subr.mxu0 0.0
    %803 = vmatpush1.msra.mxu0 0.0
    %804 = vmatprep.subr.mxu0 0.0
    %805 = vmatpush1.msra.mxu0 0.0
    %806 = vmatprep.subr.mxu0 0.0
    %807 = vmatpush1.msra.mxu0 0.0
    %808 = vmatprep.subr.mxu0 0.0
    %809 = vmatpush1.msra.mxu0 0.0
    %810 = vmatprep.subr.mxu0 0.0
    %811 = vmatpush1.msra.mxu0 0.0
    %812 = vmatprep.subr.mxu0 0.0
    %813 = vmatpush1.msra.mxu0 0.0
    %814 = vmatprep.subr.mxu0 0.0
    %815 = vmatpush1.msra.mxu0 0.0
    %816 = vmatprep.subr.mxu0 0.0
    %817 = vmatpush1.msra.mxu0 0.0
    %818 = vmatprep.subr.mxu0 0.0
    %819 = vmatpush1.msra.mxu0 0.0
    %820 = vmatprep.subr.mxu0 0.0
    %821 = vmatpush1.msra.mxu0 0.0
    %822 = vmatprep.subr.mxu0 0.0
    %823 = vmatpush1.msra.mxu0 0.0
    %824 = vmatprep.subr.mxu0 0.0
    %825 = vmatpush1.msra.mxu0 0.0
    %826 = vmatprep.subr.mxu0 0.0
    %827 = vmatpush1.msra.mxu0 0.0
    %828 = vmatprep.subr.mxu0 0.0
    %829 = vmatpush1.msra.mxu0 0.0
    %830 = vmatprep.subr.mxu0 0.0
    %831 = vmatpush1.msra.mxu0 0.0
    %832 = vmatprep.subr.mxu0 0.0
    %833 = vmatpush1.msra.mxu0 0.0
    %834 = vmatprep.subr.mxu0 0.0
    %835 = vmatpush1.msra.mxu0 0.0
    %836 = vmatprep.subr.mxu0 0.0
    %837 = vmatpush1.msra.mxu0 0.0
    %838 = vmatprep.subr.mxu0 0.0
    %839 = vmatpush1.msra.mxu0 0.0
    %840 = vmatprep.subr.mxu0 0.0
    %841 = vmatpush1.msra.mxu0 0.0
    %842 = vmatprep.subr.mxu0 0.0
    %843 = vmatpush1.msra.mxu0 0.0
    %844 = vmatprep.subr.mxu0 0.0
    %845 = vmatpush1.msra.mxu0 0.0
    %846 = vmatprep.subr.mxu0 0.0
    %847 = vmatpush1.msra.mxu0 0.0
    %848 = vmatprep.subr.mxu0 0.0
    %849 = vmatpush1.msra.mxu0 0.0
    %850 = vmatprep.subr.mxu0 0.0
    %851 = vmatpush1.msra.mxu0 0.0
    %852 = vmatprep.subr.mxu0 0.0
    %853 = vmatpush1.msra.mxu0 0.0
    %854 = vmatprep.subr.mxu0 0.0
    %855 = vmatpush1.msra.mxu0 0.0
    %856 = vmatprep.subr.mxu0 0.0
    %857 = vmatpush1.msra.mxu0 0.0
    %858 = vmatprep.mubr.f32.mxu0 0.0
    %859 = vmatmul.mubr.f32.gmra.mrb[0].mxu0 %v789
    %v860 = vpop.f32.mrb[0].mxu0
    %v861 = vadd.f32 0.0, %v860
    %v862 = vpop.f32.mrb[0].mxu0
    %863 = vmatprep.mubr.f32.mxu0 0.0
    %864 = vmatmul.mubr.f32.gmra.mrb[0].mxu0 %v792
    %v865 = vpop.f32.mrb[0].mxu0
    %v866 = vadd.f32 0.0, %v865
    %v867 = vpop.f32.mrb[0].mxu0
    %868 = vdwg.mxu0
    %869 = vrot.lane.b32.xlu0 %v168, 64
    %v870 = vpop.permute.xlu0 %869
    %871 = vrot.lane.b32.xlu0 %v170, 64
    %v872 = vpop.permute.xlu0 %871
    %v876 = vsel %vm519, %v606, 0
    %v879 = vsel %vm519, %v607, 0
    %881 = vmatprep.subr.mxu0 0.0
    %882 = vmatpush1.msra.mxu0 %v870
    %883 = vmatprep.subr.mxu0 0.0
    %884 = vmatpush1.msra.mxu0 %v872
    %885 = vmatprep.subr.mxu0 0.0
    %886 = vmatpush1.msra.mxu0 0.0
    %887 = vmatprep.subr.mxu0 0.0
    %888 = vmatpush1.msra.mxu0 0.0
    %889 = vmatprep.subr.mxu0 0.0
    %890 = vmatpush1.msra.mxu0 0.0
    %891 = vmatprep.subr.mxu0 0.0
    %892 = vmatpush1.msra.mxu0 0.0
    %893 = vmatprep.subr.mxu0 0.0
    %894 = vmatpush1.msra.mxu0 0.0
    %895 = vmatprep.subr.mxu0 0.0
    %896 = vmatpush1.msra.mxu0 0.0
    %897 = vmatprep.subr.mxu0 0.0
    %898 = vmatpush1.msra.mxu0 0.0
    %899 = vmatprep.subr.mxu0 0.0
    %900 = vmatpush1.msra.mxu0 0.0
    %901 = vmatprep.subr.mxu0 0.0
    %902 = vmatpush1.msra.mxu0 0.0
    %903 = vmatprep.subr.mxu0 0.0
    %904 = vmatpush1.msra.mxu0 0.0
    %905 = vmatprep.subr.mxu0 0.0
    %906 = vmatpush1.msra.mxu0 0.0
    %907 = vmatprep.subr.mxu0 0.0
    %908 = vmatpush1.msra.mxu0 0.0
    %909 = vmatprep.subr.mxu0 0.0
    %910 = vmatpush1.msra.mxu0 0.0
    %911 = vmatprep.subr.mxu0 0.0
    %912 = vmatpush1.msra.mxu0 0.0
    %913 = vmatprep.subr.mxu0 0.0
    %914 = vmatpush1.msra.mxu0 0.0
    %915 = vmatprep.subr.mxu0 0.0
    %916 = vmatpush1.msra.mxu0 0.0
    %917 = vmatprep.subr.mxu0 0.0
    %918 = vmatpush1.msra.mxu0 0.0
    %919 = vmatprep.subr.mxu0 0.0
    %920 = vmatpush1.msra.mxu0 0.0
    %921 = vmatprep.subr.mxu0 0.0
    %922 = vmatpush1.msra.mxu0 0.0
    %923 = vmatprep.subr.mxu0 0.0
    %924 = vmatpush1.msra.mxu0 0.0
    %925 = vmatprep.subr.mxu0 0.0
    %926 = vmatpush1.msra.mxu0 0.0
    %927 = vmatprep.subr.mxu0 0.0
    %928 = vmatpush1.msra.mxu0 0.0
    %929 = vmatprep.subr.mxu0 0.0
    %930 = vmatpush1.msra.mxu0 0.0
    %931 = vmatprep.subr.mxu0 0.0
    %932 = vmatpush1.msra.mxu0 0.0
    %933 = vmatprep.subr.mxu0 0.0
    %934 = vmatpush1.msra.mxu0 0.0
    %935 = vmatprep.subr.mxu0 0.0
    %936 = vmatpush1.msra.mxu0 0.0
    %937 = vmatprep.subr.mxu0 0.0
    %938 = vmatpush1.msra.mxu0 0.0
    %939 = vmatprep.subr.mxu0 0.0
    %940 = vmatpush1.msra.mxu0 0.0
    %941 = vmatprep.subr.mxu0 0.0
    %942 = vmatpush1.msra.mxu0 0.0
    %943 = vmatprep.subr.mxu0 0.0
    %944 = vmatpush1.msra.mxu0 0.0
    %945 = vmatprep.mubr.f32.mxu0 0.0
    %946 = vmatmul.mubr.f32.gmra.mrb[0].mxu0 %v876
    %v947 = vpop.f32.mrb[0].mxu0
    %v948 = vadd.f32 0.0, %v947
    %v949 = vpop.f32.mrb[0].mxu0
    %950 = vmatprep.mubr.f32.mxu0 0.0
    %951 = vmatmul.mubr.f32.gmra.mrb[0].mxu0 %v879
    %v952 = vpop.f32.mrb[0].mxu0
    %v953 = vadd.f32 0.0, %v952
    %v954 = vpop.f32.mrb[0].mxu0
    %955 = vdwg.mxu0
    %958 = vrot.lane.b32.xlu0 %v774, 8
    %v959 = vpop.permute.xlu0 %958
    %960 = vrot.lane.b32.xlu0 %v779, 8
    %v961 = vpop.permute.xlu0 %960
    %966 = vrot.lane.b32.xlu0 %v861, 16
    %v967 = vpop.permute.xlu0 %966
    %968 = vrot.lane.b32.xlu0 %v866, 16
    %v969 = vpop.permute.xlu0 %968
    %974 = vrot.lane.b32.xlu0 %v948, 24
    %v975 = vpop.permute.xlu0 %974
    %976 = vrot.lane.b32.xlu0 %v953, 24
    %v977 = vpop.permute.xlu0 %976
    %v980 = vsel %vm70, %v687, %v959
    %v981 = vsel %vm70, %v692, %v961
    %v982 = vsel %vm519, %v980, %v967
    %v983 = vsel %vm519, %v981, %v969
    %vm984 = vcmask 195584
    %v985 = vsel %vm984, %v982, %v975
    %v986 = vsel %vm984, %v983, %v977
    %v987 = vadd.f32 %v144, %v985
    %v988 = vadd.f32 %v149, %v986
    %v990 = vlaneseq
    %v991 = vshrl.u32 %v990, 7
    %v992 = vsub.s32 0, %v991
    %v993 = vrot.slane %v156, %v992
    %vm995 = vcmask 261120
    %v997 = vsel %vm995, %v987, 0
    %v1000 = vsel %vm995, %v988, 0
    %1002 = vmatprep.subr.mxu0 0.0
    %1003 = vmatpush1.msra.mxu0 %v152
    %1004 = vmatprep.subr.mxu0 0.0
    %1005 = vmatpush1.msra.mxu0 %v153
    %1006 = vmatprep.subr.mxu0 0.0
    %1007 = vmatpush1.msra.mxu0 %v154
    %1008 = vmatprep.subr.mxu0 0.0
    %1009 = vmatpush1.msra.mxu0 %v155
    %1010 = vmatprep.subr.mxu0 0.0
    %1011 = vmatpush1.msra.mxu0 0.0
    %1012 = vmatprep.subr.mxu0 0.0
    %1013 = vmatpush1.msra.mxu0 0.0
    %1014 = vmatprep.subr.mxu0 0.0
    %1015 = vmatpush1.msra.mxu0 0.0
    %1016 = vmatprep.subr.mxu0 0.0
    %1017 = vmatpush1.msra.mxu0 0.0
    %1018 = vmatprep.subr.mxu0 0.0
    %1019 = vmatpush1.msra.mxu0 0.0
    %1020 = vmatprep.subr.mxu0 0.0
    %1021 = vmatpush1.msra.mxu0 0.0
    %1022 = vmatprep.subr.mxu0 0.0
    %1023 = vmatpush1.msra.mxu0 0.0
    %1024 = vmatprep.subr.mxu0 0.0
    %1025 = vmatpush1.msra.mxu0 0.0
    %1026 = vmatprep.subr.mxu0 0.0
    %1027 = vmatpush1.msra.mxu0 0.0
    %1028 = vmatprep.subr.mxu0 0.0
    %1029 = vmatpush1.msra.mxu0 0.0
    %1030 = vmatprep.subr.mxu0 0.0
    %1031 = vmatpush1.msra.mxu0 0.0
    %1032 = vmatprep.subr.mxu0 0.0
    %1033 = vmatpush1.msra.mxu0 0.0
    %1034 = vmatprep.subr.mxu0 0.0
    %1035 = vmatpush1.msra.mxu0 0.0
    %1036 = vmatprep.subr.mxu0 0.0
    %1037 = vmatpush1.msra.mxu0 0.0
    %1038 = vmatprep.subr.mxu0 0.0
    %1039 = vmatpush1.msra.mxu0 0.0
    %1040 = vmatprep.subr.mxu0 0.0
    %1041 = vmatpush1.msra.mxu0 0.0
    %1042 = vmatprep.subr.mxu0 0.0
    %1043 = vmatpush1.msra.mxu0 0.0
    %1044 = vmatprep.subr.mxu0 0.0
    %1045 = vmatpush1.msra.mxu0 0.0
    %1046 = vmatprep.subr.mxu0 0.0
    %1047 = vmatpush1.msra.mxu0 0.0
    %1048 = vmatprep.subr.mxu0 0.0
    %1049 = vmatpush1.msra.mxu0 0.0
    %1050 = vmatprep.subr.mxu0 0.0
    %1051 = vmatpush1.msra.mxu0 0.0
    %1052 = vmatprep.subr.mxu0 0.0
    %1053 = vmatpush1.msra.mxu0 0.0
    %1054 = vmatprep.subr.mxu0 0.0
    %1055 = vmatpush1.msra.mxu0 0.0
    %1056 = vmatprep.subr.mxu0 0.0
    %1057 = vmatpush1.msra.mxu0 0.0
    %1058 = vmatprep.subr.mxu0 0.0
    %1059 = vmatpush1.msra.mxu0 0.0
    %1060 = vmatprep.subr.mxu0 0.0
    %1061 = vmatpush1.msra.mxu0 0.0
    %1062 = vmatprep.subr.mxu0 0.0
    %1063 = vmatpush1.msra.mxu0 0.0
    %1064 = vmatprep.subr.mxu0 0.0
    %1065 = vmatpush1.msra.mxu0 0.0
    %1066 = vmatprep.mubr.f32.mxu0 0.0
    %1067 = vmatmul.mubr.f32.gmra.mrb[0].mxu0 %v997
    %v1068 = vpop.f32.mrb[0].mxu0
    %v1069 = vadd.f32 %v993, %v1068
    %v1070 = vpop.f32.mrb[0].mxu0
    %1071 = vmatprep.mubr.f32.mxu0 0.0
    %1072 = vmatmul.mubr.f32.gmra.mrb[0].mxu0 %v1000
    %v1073 = vpop.f32.mrb[0].mxu0
    %v1074 = vadd.f32 %v993, %v1073
    %v1075 = vpop.f32.mrb[0].mxu0
    %1076 = vdwg.mxu0
    %v1077 = vmax.f32 %v1069, 0.0
    %v1078 = vmax.f32 %v1074, 0.0
    %v1079 = vadd.f32 %v987, %v1077
    %v1080 = vadd.f32 %v988, %v1078
    %v1081 = vld [vmem:[%s6] sm:$0xff]
    %v1082 = vld [vmem:[%s6 + $0x8] sm:$0xff]
    %v1083 = vld [vmem:[%s6 + $0x10] sm:$0xff]
    %v1084 = vld [vmem:[%s6 + $0x18] sm:$0xff]
    %v1085 = vld [vmem:[%s7] sm:$0x1]
    %v1087 = vlaneseq
    %v1088 = vshrl.u32 %v1087, 7
    %v1089 = vsub.s32 0, %v1088
    %v1090 = vrot.slane %v1085, %v1089
    %v1093 = vsel %vm995, %v1079, 0
    %v1096 = vsel %vm995, %v1080, 0
    %1098 = vmatprep.subr.mxu0 0.0
    %1099 = vmatpush1.msra.mxu0 %v1081
    %1100 = vmatprep.subr.mxu0 0.0
    %1101 = vmatpush1.msra.mxu0 %v1082
    %1102 = vmatprep.subr.mxu0 0.0
    %1103 = vmatpush1.msra.mxu0 %v1083
    %1104 = vmatprep.subr.mxu0 0.0
    %1105 = vmatpush1.msra.mxu0 %v1084
    %1106 = vmatprep.subr.mxu0 0.0
    %1107 = vmatpush1.msra.mxu0 0.0
    %1108 = vmatprep.subr.mxu0 0.0
    %1109 = vmatpush1.msra.mxu0 0.0
    %1110 = vmatprep.subr.mxu0 0.0
    %1111 = vmatpush1.msra.mxu0 0.0
    %1112 = vmatprep.subr.mxu0 0.0
    %1113 = vmatpush1.msra.mxu0 0.0
    %1114 = vmatprep.subr.mxu0 0.0
    %1115 = vmatpush1.msra.mxu0 0.0
    %1116 = vmatprep.subr.mxu0 0.0
    %1117 = vmatpush1.msra.mxu0 0.0
    %1118 = vmatprep.subr.mxu0 0.0
    %1119 = vmatpush1.msra.mxu0 0.0
    %1120 = vmatprep.subr.mxu0 0.0
    %1121 = vmatpush1.msra.mxu0 0.0
    %1122 = vmatprep.subr.mxu0 0.0
    %1123 = vmatpush1.msra.mxu0 0.0
    %1124 = vmatprep.subr.mxu0 0.0
    %1125 = vmatpush1.msra.mxu0 0.0
    %1126 = vmatprep.subr.mxu0 0.0
    %1127 = vmatpush1.msra.mxu0 0.0
    %1128 = vmatprep.subr.mxu0 0.0
    %1129 = vmatpush1.msra.mxu0 0.0
    %1130 = vmatprep.subr.mxu0 0.0
    %1131 = vmatpush1.msra.mxu0 0.0
    %1132 = vmatprep.subr.mxu0 0.0
    %1133 = vmatpush1.msra.mxu0 0.0
    %1134 = vmatprep.subr.mxu0 0.0
    %1135 = vmatpush1.msra.mxu0 0.0
    %1136 = vmatprep.subr.mxu0 0.0
    %1137 = vmatpush1.msra.mxu0 0.0
    %1138 = vmatprep.subr.mxu0 0.0
    %1139 = vmatpush1.msra.mxu0 0.0
    %1140 = vmatprep.subr.mxu0 0.0
    %1141 = vmatpush1.msra.mxu0 0.0
    %1142 = vmatprep.subr.mxu0 0.0
    %1143 = vmatpush1.msra.mxu0 0.0
    %1144 = vmatprep.subr.mxu0 0.0
    %1145 = vmatpush1.msra.mxu0 0.0
    %1146 = vmatprep.subr.mxu0 0.0
    %1147 = vmatpush1.msra.mxu0 0.0
    %1148 = vmatprep.subr.mxu0 0.0
    %1149 = vmatpush1.msra.mxu0 0.0
    %1150 = vmatprep.subr.mxu0 0.0
    %1151 = vmatpush1.msra.mxu0 0.0
    %1152 = vmatprep.subr.mxu0 0.0
    %1153 = vmatpush1.msra.mxu0 0.0
    %1154 = vmatprep.subr.mxu0 0.0
    %1155 = vmatpush1.msra.mxu0 0.0
    %1156 = vmatprep.subr.mxu0 0.0
    %1157 = vmatpush1.msra.mxu0 0.0
    %1158 = vmatprep.subr.mxu0 0.0
    %1159 = vmatpush1.msra.mxu0 0.0
    %1160 = vmatprep.subr.mxu0 0.0
    %1161 = vmatpush1.msra.mxu0 0.0
    %1162 = vmatprep.mubr.f32.mxu0 0.0
    %1163 = vmatmul.mubr.f32.gmra.mrb[0].mxu0 %v1093
    %v1164 = vpop.f32.mrb[0].mxu0
    %v1165 = vadd.f32 %v1090, %v1164
    %v1166 = vpop.f32.mrb[0].mxu0
    %1167 = vmatprep.mubr.f32.mxu0 0.0
    %1168 = vmatmul.mubr.f32.gmra.mrb[0].mxu0 %v1096
    %v1169 = vpop.f32.mrb[0].mxu0
    %v1170 = vadd.f32 %v1090, %v1169
    %v1171 = vpop.f32.mrb[0].mxu0
    %1172 = vdwg.mxu0
    %v1173 = vld [vmem:[%s8] sm:$0xff]
    %v1174 = vld [vmem:[%s8 + $0x8] sm:$0xff]
    %v1175 = vld [vmem:[%s8 + $0x10] sm:$0xff]
    %v1176 = vld [vmem:[%s8 + $0x18] sm:$0xff]
    %v1177 = vld [vmem:[%s9] sm:$0x1]
    %1180 = vrot.lane.b32.xlu0 %v1165, 120
    %v1181 = vpop.permute.xlu0 %1180
    %1182 = vrot.lane.b32.xlu0 %v1170, 120
    %v1183 = vpop.permute.xlu0 %1182
    %1184 = vrot.lane.b32.xlu0 %v1165, 112
    %v1185 = vpop.permute.xlu0 %1184
    %1186 = vrot.lane.b32.xlu0 %v1170, 112
    %v1187 = vpop.permute.xlu0 %1186
    %1188 = vrot.lane.b32.xlu0 %v1165, 104
    %v1189 = vpop.permute.xlu0 %1188
    %1190 = vrot.lane.b32.xlu0 %v1170, 104
    %v1191 = vpop.permute.xlu0 %1190
    %1192 = vrot.lane.b32.xlu0 %v1165, 96
    %v1193 = vpop.permute.xlu0 %1192
    %1194 = vrot.lane.b32.xlu0 %v1170, 96
    %v1195 = vpop.permute.xlu0 %1194
    %v1196 = vsel %vm70, %v1165, 0
    %v1198 = vsel %vm70, %v1170, 0
    %v1200 = vsel %vm70, %v1193, 0
    %v1202 = vsel %vm70, %v1195, 0
    %1204 = vmatprep.subr.mxu0 0.0
    %1205 = vmatpush1.xpose.msra.mxu0 %v1200
    %1206 = vmatprep.subr.mxu0 0.0
    %1207 = vmatpush1.xpose.msra.mxu0 %v1202
    %1208 = vmatprep.subr.mxu0 0.0
    %1209 = vmatpush1.xpose.msra.mxu0 0.0
    %1210 = vmatprep.subr.mxu0 0.0
    %1211 = vmatpush1.xpose.msra.mxu0 0.0
    %1212 = vmatprep.subr.mxu0 0.0
    %1213 = vmatpush1.xpose.msra.mxu0 0.0
    %1214 = vmatprep.subr.mxu0 0.0
    %1215 = vmatpush1.xpose.msra.mxu0 0.0
    %1216 = vmatprep.subr.mxu0 0.0
    %1217 = vmatpush1.xpose.msra.mxu0 0.0
    %1218 = vmatprep.subr.mxu0 0.0
    %1219 = vmatpush1.xpose.msra.mxu0 0.0
    %1220 = vmatprep.subr.mxu0 0.0
    %1221 = vmatpush1.xpose.msra.mxu0 0.0
    %1222 = vmatprep.subr.mxu0 0.0
    %1223 = vmatpush1.xpose.msra.mxu0 0.0
    %1224 = vmatprep.subr.mxu0 0.0
    %1225 = vmatpush1.xpose.msra.mxu0 0.0
    %1226 = vmatprep.subr.mxu0 0.0
    %1227 = vmatpush1.xpose.msra.mxu0 0.0
    %1228 = vmatprep.subr.mxu0 0.0
    %1229 = vmatpush1.xpose.msra.mxu0 0.0
    %1230 = vmatprep.subr.mxu0 0.0
    %1231 = vmatpush1.xpose.msra.mxu0 0.0
    %1232 = vmatprep.subr.mxu0 0.0
    %1233 = vmatpush1.xpose.msra.mxu0 0.0
    %1234 = vmatprep.subr.mxu0 0.0
    %1235 = vmatpush1.xpose.msra.mxu0 0.0
    %1236 = vmatprep.subr.mxu0 0.0
    %1237 = vmatpush1.xpose.msra.mxu0 0.0
    %1238 = vmatprep.subr.mxu0 0.0
    %1239 = vmatpush1.xpose.msra.mxu0 0.0
    %1240 = vmatprep.subr.mxu0 0.0
    %1241 = vmatpush1.xpose.msra.mxu0 0.0
    %1242 = vmatprep.subr.mxu0 0.0
    %1243 = vmatpush1.xpose.msra.mxu0 0.0
    %1244 = vmatprep.subr.mxu0 0.0
    %1245 = vmatpush1.xpose.msra.mxu0 0.0
    %1246 = vmatprep.subr.mxu0 0.0
    %1247 = vmatpush1.xpose.msra.mxu0 0.0
    %1248 = vmatprep.subr.mxu0 0.0
    %1249 = vmatpush1.xpose.msra.mxu0 0.0
    %1250 = vmatprep.subr.mxu0 0.0
    %1251 = vmatpush1.xpose.msra.mxu0 0.0
    %1252 = vmatprep.subr.mxu0 0.0
    %1253 = vmatpush1.xpose.msra.mxu0 0.0
    %1254 = vmatprep.subr.mxu0 0.0
    %1255 = vmatpush1.xpose.msra.mxu0 0.0
    %1256 = vmatprep.subr.mxu0 0.0
    %1257 = vmatpush1.xpose.msra.mxu0 0.0
    %1258 = vmatprep.subr.mxu0 0.0
    %1259 = vmatpush1.xpose.msra.mxu0 0.0
    %1260 = vmatprep.subr.mxu0 0.0
    %1261 = vmatpush1.xpose.msra.mxu0 0.0
    %1262 = vmatprep.subr.mxu0 0.0
    %1263 = vmatpush1.xpose.msra.mxu0 0.0
    %1264 = vmatprep.subr.mxu0 0.0
    %1265 = vmatpush1.xpose.msra.mxu0 0.0
    %1266 = vmatprep.subr.mxu0 0.0
    %1267 = vmatpush1.xpose.msra.mxu0 0.0
    %1268 = vmatprep.mubr.f32.mxu0 0.0
    %1269 = vmatmul.mubr.f32.gmra.mrb[0].mxu0 %v1196
    %v1270 = vpop.f32.mrb[0].mxu0
    %v1271 = vadd.f32 0.0, %v1270
    %v1272 = vpop.f32.mrb[0].mxu0
    %1273 = vmatprep.mubr.f32.mxu0 0.0
    %1274 = vmatmul.mubr.f32.gmra.mrb[0].mxu0 %v1198
    %v1275 = vpop.f32.mrb[0].mxu0
    %v1276 = vadd.f32 0.0, %v1275
    %v1277 = vpop.f32.mrb[0].mxu0
    %1278 = vdwg.mxu0
    %1279 = vrot.lane.b32.xlu0 %v1181, 96
    %v1280 = vpop.permute.xlu0 %1279
    %1281 = vrot.lane.b32.xlu0 %v1183, 96
    %v1282 = vpop.permute.xlu0 %1281
    %v1283 = vsel %vm70, %v1181, 0
    %v1285 = vsel %vm70, %v1183, 0
    %v1287 = vsel %vm70, %v1280, 0
    %v1289 = vsel %vm70, %v1282, 0
    %1291 = vmatprep.subr.mxu0 0.0
    %1292 = vmatpush1.xpose.msra.mxu0 %v1287
    %1293 = vmatprep.subr.mxu0 0.0
    %1294 = vmatpush1.xpose.msra.mxu0 %v1289
    %1295 = vmatprep.subr.mxu0 0.0
    %1296 = vmatpush1.xpose.msra.mxu0 0.0
    %1297 = vmatprep.subr.mxu0 0.0
    %1298 = vmatpush1.xpose.msra.mxu0 0.0
    %1299 = vmatprep.subr.mxu0 0.0
    %1300 = vmatpush1.xpose.msra.mxu0 0.0
    %1301 = vmatprep.subr.mxu0 0.0
    %1302 = vmatpush1.xpose.msra.mxu0 0.0
    %1303 = vmatprep.subr.mxu0 0.0
    %1304 = vmatpush1.xpose.msra.mxu0 0.0
    %1305 = vmatprep.subr.mxu0 0.0
    %1306 = vmatpush1.xpose.msra.mxu0 0.0
    %1307 = vmatprep.subr.mxu0 0.0
    %1308 = vmatpush1.xpose.msra.mxu0 0.0
    %1309 = vmatprep.subr.mxu0 0.0
    %1310 = vmatpush1.xpose.msra.mxu0 0.0
    %1311 = vmatprep.subr.mxu0 0.0
    %1312 = vmatpush1.xpose.msra.mxu0 0.0
    %1313 = vmatprep.subr.mxu0 0.0
    %1314 = vmatpush1.xpose.msra.mxu0 0.0
    %1315 = vmatprep.subr.mxu0 0.0
    %1316 = vmatpush1.xpose.msra.mxu0 0.0
    %1317 = vmatprep.subr.mxu0 0.0
    %1318 = vmatpush1.xpose.msra.mxu0 0.0
    %1319 = vmatprep.subr.mxu0 0.0
    %1320 = vmatpush1.xpose.msra.mxu0 0.0
    %1321 = vmatprep.subr.mxu0 0.0
    %1322 = vmatpush1.xpose.msra.mxu0 0.0
    %1323 = vmatprep.subr.mxu0 0.0
    %1324 = vmatpush1.xpose.msra.mxu0 0.0
    %1325 = vmatprep.subr.mxu0 0.0
    %1326 = vmatpush1.xpose.msra.mxu0 0.0
    %1327 = vmatprep.subr.mxu0 0.0
    %1328 = vmatpush1.xpose.msra.mxu0 0.0
    %1329 = vmatprep.subr.mxu0 0.0
    %1330 = vmatpush1.xpose.msra.mxu0 0.0
    %1331 = vmatprep.subr.mxu0 0.0
    %1332 = vmatpush1.xpose.msra.mxu0 0.0
    %1333 = vmatprep.subr.mxu0 0.0
    %1334 = vmatpush1.xpose.msra.mxu0 0.0
    %1335 = vmatprep.subr.mxu0 0.0
    %1336 = vmatpush1.xpose.msra.mxu0 0.0
    %1337 = vmatprep.subr.mxu0 0.0
    %1338 = vmatpush1.xpose.msra.mxu0 0.0
    %1339 = vmatprep.subr.mxu0 0.0
    %1340 = vmatpush1.xpose.msra.mxu0 0.0
    %1341 = vmatprep.subr.mxu0 0.0
    %1342 = vmatpush1.xpose.msra.mxu0 0.0
    %1343 = vmatprep.subr.mxu0 0.0
    %1344 = vmatpush1.xpose.msra.mxu0 0.0
    %1345 = vmatprep.subr.mxu0 0.0
    %1346 = vmatpush1.xpose.msra.mxu0 0.0
    %1347 = vmatprep.subr.mxu0 0.0
    %1348 = vmatpush1.xpose.msra.mxu0 0.0
    %1349 = vmatprep.subr.mxu0 0.0
    %1350 = vmatpush1.xpose.msra.mxu0 0.0
    %1351 = vmatprep.subr.mxu0 0.0
    %1352 = vmatpush1.xpose.msra.mxu0 0.0
    %1353 = vmatprep.subr.mxu0 0.0
    %1354 = vmatpush1.xpose.msra.mxu0 0.0
    %1355 = vmatprep.mubr.f32.mxu0 0.0
    %1356 = vmatmul.mubr.f32.gmra.mrb[0].mxu0 %v1283
    %v1357 = vpop.f32.mrb[0].mxu0
    %v1358 = vadd.f32 0.0, %v1357
    %v1359 = vpop.f32.mrb[0].mxu0
    %1360 = vmatprep.mubr.f32.mxu0 0.0
    %1361 = vmatmul.mubr.f32.gmra.mrb[0].mxu0 %v1285
    %v1362 = vpop.f32.mrb[0].mxu0
    %v1363 = vadd.f32 0.0, %v1362
    %v1364 = vpop.f32.mrb[0].mxu0
    %1365 = vdwg.mxu0
    %1366 = vrot.lane.b32.xlu0 %v1185, 96
    %v1367 = vpop.permute.xlu0 %1366
    %1368 = vrot.lane.b32.xlu0 %v1187, 96
    %v1369 = vpop.permute.xlu0 %1368
    %v1370 = vsel %vm70, %v1185, 0
    %v1372 = vsel %vm70, %v1187, 0
    %v1374 = vsel %vm70, %v1367, 0
    %v1376 = vsel %vm70, %v1369, 0
    %1378 = vmatprep.subr.mxu0 0.0
    %1379 = vmatpush1.xpose.msra.mxu0 %v1374
    %1380 = vmatprep.subr.mxu0 0.0
    %1381 = vmatpush1.xpose.msra.mxu0 %v1376
    %1382 = vmatprep.subr.mxu0 0.0
    %1383 = vmatpush1.xpose.msra.mxu0 0.0
    %1384 = vmatprep.subr.mxu0 0.0
    %1385 = vmatpush1.xpose.msra.mxu0 0.0
    %1386 = vmatprep.subr.mxu0 0.0
    %1387 = vmatpush1.xpose.msra.mxu0 0.0
    %1388 = vmatprep.subr.mxu0 0.0
    %1389 = vmatpush1.xpose.msra.mxu0 0.0
    %1390 = vmatprep.subr.mxu0 0.0
    %1391 = vmatpush1.xpose.msra.mxu0 0.0
    %1392 = vmatprep.subr.mxu0 0.0
    %1393 = vmatpush1.xpose.msra.mxu0 0.0
    %1394 = vmatprep.subr.mxu0 0.0
    %1395 = vmatpush1.xpose.msra.mxu0 0.0
    %1396 = vmatprep.subr.mxu0 0.0
    %1397 = vmatpush1.xpose.msra.mxu0 0.0
    %1398 = vmatprep.subr.mxu0 0.0
    %1399 = vmatpush1.xpose.msra.mxu0 0.0
    %1400 = vmatprep.subr.mxu0 0.0
    %1401 = vmatpush1.xpose.msra.mxu0 0.0
    %1402 = vmatprep.subr.mxu0 0.0
    %1403 = vmatpush1.xpose.msra.mxu0 0.0
    %1404 = vmatprep.subr.mxu0 0.0
    %1405 = vmatpush1.xpose.msra.mxu0 0.0
    %1406 = vmatprep.subr.mxu0 0.0
    %1407 = vmatpush1.xpose.msra.mxu0 0.0
    %1408 = vmatprep.subr.mxu0 0.0
    %1409 = vmatpush1.xpose.msra.mxu0 0.0
    %1410 = vmatprep.subr.mxu0 0.0
    %1411 = vmatpush1.xpose.msra.mxu0 0.0
    %1412 = vmatprep.subr.mxu0 0.0
    %1413 = vmatpush1.xpose.msra.mxu0 0.0
    %1414 = vmatprep.subr.mxu0 0.0
    %1415 = vmatpush1.xpose.msra.mxu0 0.0
    %1416 = vmatprep.subr.mxu0 0.0
    %1417 = vmatpush1.xpose.msra.mxu0 0.0
    %1418 = vmatprep.subr.mxu0 0.0
    %1419 = vmatpush1.xpose.msra.mxu0 0.0
    %1420 = vmatprep.subr.mxu0 0.0
    %1421 = vmatpush1.xpose.msra.mxu0 0.0
    %1422 = vmatprep.subr.mxu0 0.0
    %1423 = vmatpush1.xpose.msra.mxu0 0.0
    %1424 = vmatprep.subr.mxu0 0.0
    %1425 = vmatpush1.xpose.msra.mxu0 0.0
    %1426 = vmatprep.subr.mxu0 0.0
    %1427 = vmatpush1.xpose.msra.mxu0 0.0
    %1428 = vmatprep.subr.mxu0 0.0
    %1429 = vmatpush1.xpose.msra.mxu0 0.0
    %1430 = vmatprep.subr.mxu0 0.0
    %1431 = vmatpush1.xpose.msra.mxu0 0.0
    %1432 = vmatprep.subr.mxu0 0.0
    %1433 = vmatpush1.xpose.msra.mxu0 0.0
    %1434 = vmatprep.subr.mxu0 0.0
    %1435 = vmatpush1.xpose.msra.mxu0 0.0
    %1436 = vmatprep.subr.mxu0 0.0
    %1437 = vmatpush1.xpose.msra.mxu0 0.0
    %1438 = vmatprep.subr.mxu0 0.0
    %1439 = vmatpush1.xpose.msra.mxu0 0.0
    %1440 = vmatprep.subr.mxu0 0.0
    %1441 = vmatpush1.xpose.msra.mxu0 0.0
    %1442 = vmatprep.mubr.f32.mxu0 0.0
    %1443 = vmatmul.mubr.f32.gmra.mrb[0].mxu0 %v1370
    %v1444 = vpop.f32.mrb[0].mxu0
    %v1445 = vadd.f32 0.0, %v1444
    %v1446 = vpop.f32.mrb[0].mxu0
    %1447 = vmatprep.mubr.f32.mxu0 0.0
    %1448 = vmatmul.mubr.f32.gmra.mrb[0].mxu0 %v1372
    %v1449 = vpop.f32.mrb[0].mxu0
    %v1450 = vadd.f32 0.0, %v1449
    %v1451 = vpop.f32.mrb[0].mxu0
    %1452 = vdwg.mxu0
    %1453 = vrot.lane.b32.xlu0 %v1189, 96
    %v1454 = vpop.permute.xlu0 %1453
    %1455 = vrot.lane.b32.xlu0 %v1191, 96
    %v1456 = vpop.permute.xlu0 %1455
    %v1457 = vsel %vm70, %v1189, 0
    %v1459 = vsel %vm70, %v1191, 0
    %v1461 = vsel %vm70, %v1454, 0
    %v1463 = vsel %vm70, %v1456, 0
    %1465 = vmatprep.subr.mxu0 0.0
    %1466 = vmatpush1.xpose.msra.mxu0 %v1461
    %1467 = vmatprep.subr.mxu0 0.0
    %1468 = vmatpush1.xpose.msra.mxu0 %v1463
    %1469 = vmatprep.subr.mxu0 0.0
    %1470 = vmatpush1.xpose.msra.mxu0 0.0
    %1471 = vmatprep.subr.mxu0 0.0
    %1472 = vmatpush1.xpose.msra.mxu0 0.0
    %1473 = vmatprep.subr.mxu0 0.0
    %1474 = vmatpush1.xpose.msra.mxu0 0.0
    %1475 = vmatprep.subr.mxu0 0.0
    %1476 = vmatpush1.xpose.msra.mxu0 0.0
    %1477 = vmatprep.subr.mxu0 0.0
    %1478 = vmatpush1.xpose.msra.mxu0 0.0
    %1479 = vmatprep.subr.mxu0 0.0
    %1480 = vmatpush1.xpose.msra.mxu0 0.0
    %1481 = vmatprep.subr.mxu0 0.0
    %1482 = vmatpush1.xpose.msra.mxu0 0.0
    %1483 = vmatprep.subr.mxu0 0.0
    %1484 = vmatpush1.xpose.msra.mxu0 0.0
    %1485 = vmatprep.subr.mxu0 0.0
    %1486 = vmatpush1.xpose.msra.mxu0 0.0
    %1487 = vmatprep.subr.mxu0 0.0
    %1488 = vmatpush1.xpose.msra.mxu0 0.0
    %1489 = vmatprep.subr.mxu0 0.0
    %1490 = vmatpush1.xpose.msra.mxu0 0.0
    %1491 = vmatprep.subr.mxu0 0.0
    %1492 = vmatpush1.xpose.msra.mxu0 0.0
    %1493 = vmatprep.subr.mxu0 0.0
    %1494 = vmatpush1.xpose.msra.mxu0 0.0
    %1495 = vmatprep.subr.mxu0 0.0
    %1496 = vmatpush1.xpose.msra.mxu0 0.0
    %1497 = vmatprep.subr.mxu0 0.0
    %1498 = vmatpush1.xpose.msra.mxu0 0.0
    %1499 = vmatprep.subr.mxu0 0.0
    %1500 = vmatpush1.xpose.msra.mxu0 0.0
    %1501 = vmatprep.subr.mxu0 0.0
    %1502 = vmatpush1.xpose.msra.mxu0 0.0
    %1503 = vmatprep.subr.mxu0 0.0
    %1504 = vmatpush1.xpose.msra.mxu0 0.0
    %1505 = vmatprep.subr.mxu0 0.0
    %1506 = vmatpush1.xpose.msra.mxu0 0.0
    %1507 = vmatprep.subr.mxu0 0.0
    %1508 = vmatpush1.xpose.msra.mxu0 0.0
    %1509 = vmatprep.subr.mxu0 0.0
    %1510 = vmatpush1.xpose.msra.mxu0 0.0
    %1511 = vmatprep.subr.mxu0 0.0
    %1512 = vmatpush1.xpose.msra.mxu0 0.0
    %1513 = vmatprep.subr.mxu0 0.0
    %1514 = vmatpush1.xpose.msra.mxu0 0.0
    %1515 = vmatprep.subr.mxu0 0.0
    %1516 = vmatpush1.xpose.msra.mxu0 0.0
    %1517 = vmatprep.subr.mxu0 0.0
    %1518 = vmatpush1.xpose.msra.mxu0 0.0
    %1519 = vmatprep.subr.mxu0 0.0
    %1520 = vmatpush1.xpose.msra.mxu0 0.0
    %1521 = vmatprep.subr.mxu0 0.0
    %1522 = vmatpush1.xpose.msra.mxu0 0.0
    %1523 = vmatprep.subr.mxu0 0.0
    %1524 = vmatpush1.xpose.msra.mxu0 0.0
    %1525 = vmatprep.subr.mxu0 0.0
    %1526 = vmatpush1.xpose.msra.mxu0 0.0
    %1527 = vmatprep.subr.mxu0 0.0
    %1528 = vmatpush1.xpose.msra.mxu0 0.0
    %1529 = vmatprep.mubr.f32.mxu0 0.0
    %1530 = vmatmul.mubr.f32.gmra.mrb[0].mxu0 %v1457
    %v1531 = vpop.f32.mrb[0].mxu0
    %v1532 = vadd.f32 0.0, %v1531
    %v1533 = vpop.f32.mrb[0].mxu0
    %1534 = vmatprep.mubr.f32.mxu0 0.0
    %1535 = vmatmul.mubr.f32.gmra.mrb[0].mxu0 %v1459
    %v1536 = vpop.f32.mrb[0].mxu0
    %v1537 = vadd.f32 0.0, %v1536
    %v1538 = vpop.f32.mrb[0].mxu0
    %1539 = vdwg.mxu0
    %v1540 = vsel %vm519, %v1271, -inf
    %1541 = vmax.xlane.f32.xlu0 %v1540
    %v1542 = vpop.xlane.xlu0 %1541
    %v1543 = vsel %vm519, %v1276, -inf
    %1544 = vmax.xlane.f32.xlu0 %v1543
    %v1545 = vpop.xlane.xlu0 %1544
    %v1546 = vsel %vm519, %v1358, -inf
    %1547 = vmax.xlane.f32.xlu0 %v1546
    %v1548 = vpop.xlane.xlu0 %1547
    %v1549 = vsel %vm519, %v1363, -inf
    %1550 = vmax.xlane.f32.xlu0 %v1549
    %v1551 = vpop.xlane.xlu0 %1550
    %v1552 = vsel %vm519, %v1445, -inf
    %1553 = vmax.xlane.f32.xlu0 %v1552
    %v1554 = vpop.xlane.xlu0 %1553
    %v1555 = vsel %vm519, %v1450, -inf
    %1556 = vmax.xlane.f32.xlu0 %v1555
    %v1557 = vpop.xlane.xlu0 %1556
    %v1558 = vsel %vm519, %v1532, -inf
    %1559 = vmax.xlane.f32.xlu0 %v1558
    %v1560 = vpop.xlane.xlu0 %1559
    %v1561 = vsel %vm519, %v1537, -inf
    %1562 = vmax.xlane.f32.xlu0 %v1561
    %v1563 = vpop.xlane.xlu0 %1562
    %v1564 = vsub.f32 %v1271, %v1542
    %v1565 = vsub.f32 %v1276, %v1545
    %v1566 = vsub.f32 %v1358, %v1548
    %v1567 = vsub.f32 %v1363, %v1551
    %v1568 = vsub.f32 %v1445, %v1554
    %v1569 = vsub.f32 %v1450, %v1557
    %v1570 = vsub.f32 %v1532, %v1560
    %v1571 = vsub.f32 %v1537, %v1563
    %v1572 = vmul.f32 %v1564, 1.442695
    %v1573 = vpow.pop %v1572
    %v1574 = vmul.f32 %v1565, 1.442695
    %v1575 = vpow.pop %v1574
    %v1576 = vmul.f32 %v1566, 1.442695
    %v1577 = vpow.pop %v1576
    %v1578 = vmul.f32 %v1567, 1.442695
    %v1579 = vpow.pop %v1578
    %v1580 = vmul.f32 %v1568, 1.442695
    %v1581 = vpow.pop %v1580
    %v1582 = vmul.f32 %v1569, 1.442695
    %v1583 = vpow.pop %v1582
    %v1584 = vmul.f32 %v1570, 1.442695
    %v1585 = vpow.pop %v1584
    %v1586 = vmul.f32 %v1571, 1.442695
    %v1587 = vpow.pop %v1586
    %v1588 = vsel %vm519, %v1573, 0.0
    %1589 = vadd.xlane.f32.xlu0 %v1588
    %v1590 = vpop.xlane.xlu0 %1589
    %v1591 = vsel %vm519, %v1575, 0.0
    %1592 = vadd.xlane.f32.xlu0 %v1591
    %v1593 = vpop.xlane.xlu0 %1592
    %v1594 = vsel %vm519, %v1577, 0.0
    %1595 = vadd.xlane.f32.xlu0 %v1594
    %v1596 = vpop.xlane.xlu0 %1595
    %v1597 = vsel %vm519, %v1579, 0.0
    %1598 = vadd.xlane.f32.xlu0 %v1597
    %v1599 = vpop.xlane.xlu0 %1598
    %v1600 = vsel %vm519, %v1581, 0.0
    %1601 = vadd.xlane.f32.xlu0 %v1600
    %v1602 = vpop.xlane.xlu0 %1601
    %v1603 = vsel %vm519, %v1583, 0.0
    %1604 = vadd.xlane.f32.xlu0 %v1603
    %v1605 = vpop.xlane.xlu0 %1604
    %v1606 = vsel %vm519, %v1585, 0.0
    %1607 = vadd.xlane.f32.xlu0 %v1606
    %v1608 = vpop.xlane.xlu0 %1607
    %v1609 = vsel %vm519, %v1587, 0.0
    %1610 = vadd.xlane.f32.xlu0 %v1609
    %v1611 = vpop.xlane.xlu0 %1610
    %v1612 = vrcp.pop %v1590
    %v1613 = vrcp.pop %v1593
    %v1614 = vrcp.pop %v1596
    %v1615 = vrcp.pop %v1599
    %v1616 = vrcp.pop %v1602
    %v1617 = vrcp.pop %v1605
    %v1618 = vrcp.pop %v1608
    %v1619 = vrcp.pop %v1611
    %v1620 = vmul.f32 %v1573, %v1612
    %v1621 = vmul.f32 %v1575, %v1613
    %v1622 = vmul.f32 %v1577, %v1614
    %v1623 = vmul.f32 %v1579, %v1615
    %v1624 = vmul.f32 %v1581, %v1616
    %v1625 = vmul.f32 %v1583, %v1617
    %v1626 = vmul.f32 %v1585, %v1618
    %v1627 = vmul.f32 %v1587, %v1619
    %1628 = vrot.lane.b32.xlu0 %v1165, 64
    %v1629 = vpop.permute.xlu0 %1628
    %1630 = vrot.lane.b32.xlu0 %v1170, 64
    %v1631 = vpop.permute.xlu0 %1630
    %v1635 = vsel %vm519, %v1620, 0
    %v1638 = vsel %vm519, %v1621, 0
    %1640 = vmatprep.subr.mxu0 0.0
    %1641 = vmatpush1.msra.mxu0 %v1629
    %1642 = vmatprep.subr.mxu0 0.0
    %1643 = vmatpush1.msra.mxu0 %v1631
    %1644 = vmatprep.subr.mxu0 0.0
    %1645 = vmatpush1.msra.mxu0 0.0
    %1646 = vmatprep.subr.mxu0 0.0
    %1647 = vmatpush1.msra.mxu0 0.0
    %1648 = vmatprep.subr.mxu0 0.0
    %1649 = vmatpush1.msra.mxu0 0.0
    %1650 = vmatprep.subr.mxu0 0.0
    %1651 = vmatpush1.msra.mxu0 0.0
    %1652 = vmatprep.subr.mxu0 0.0
    %1653 = vmatpush1.msra.mxu0 0.0
    %1654 = vmatprep.subr.mxu0 0.0
    %1655 = vmatpush1.msra.mxu0 0.0
    %1656 = vmatprep.subr.mxu0 0.0
    %1657 = vmatpush1.msra.mxu0 0.0
    %1658 = vmatprep.subr.mxu0 0.0
    %1659 = vmatpush1.msra.mxu0 0.0
    %1660 = vmatprep.subr.mxu0 0.0
    %1661 = vmatpush1.msra.mxu0 0.0
    %1662 = vmatprep.subr.mxu0 0.0
    %1663 = vmatpush1.msra.mxu0 0.0
    %1664 = vmatprep.subr.mxu0 0.0
    %1665 = vmatpush1.msra.mxu0 0.0
    %1666 = vmatprep.subr.mxu0 0.0
    %1667 = vmatpush1.msra.mxu0 0.0
    %1668 = vmatprep.subr.mxu0 0.0
    %1669 = vmatpush1.msra.mxu0 0.0
    %1670 = vmatprep.subr.mxu0 0.0
    %1671 = vmatpush1.msra.mxu0 0.0
    %1672 = vmatprep.subr.mxu0 0.0
    %1673 = vmatpush1.msra.mxu0 0.0
    %1674 = vmatprep.subr.mxu0 0.0
    %1675 = vmatpush1.msra.mxu0 0.0
    %1676 = vmatprep.subr.mxu0 0.0
    %1677 = vmatpush1.msra.mxu0 0.0
    %1678 = vmatprep.subr.mxu0 0.0
    %1679 = vmatpush1.msra.mxu0 0.0
    %1680 = vmatprep.subr.mxu0 0.0
    %1681 = vmatpush1.msra.mxu0 0.0
    %1682 = vmatprep.subr.mxu0 0.0
    %1683 = vmatpush1.msra.mxu0 0.0
    %1684 = vmatprep.subr.mxu0 0.0
    %1685 = vmatpush1.msra.mxu0 0.0
    %1686 = vmatprep.subr.mxu0 0.0
    %1687 = vmatpush1.msra.mxu0 0.0
    %1688 = vmatprep.subr.mxu0 0.0
    %1689 = vmatpush1.msra.mxu0 0.0
    %1690 = vmatprep.subr.mxu0 0.0
    %1691 = vmatpush1.msra.mxu0 0.0
    %1692 = vmatprep.subr.mxu0 0.0
    %1693 = vmatpush1.msra.mxu0 0.0
    %1694 = vmatprep.subr.mxu0 0.0
    %1695 = vmatpush1.msra.mxu0 0.0
    %1696 = vmatprep.subr.mxu0 0.0
    %1697 = vmatpush1.msra.mxu0 0.0
    %1698 = vmatprep.subr.mxu0 0.0
    %1699 = vmatpush1.msra.mxu0 0.0
    %1700 = vmatprep.subr.mxu0 0.0
    %1701 = vmatpush1.msra.mxu0 0.0
    %1702 = vmatprep.subr.mxu0 0.0
    %1703 = vmatpush1.msra.mxu0 0.0
    %1704 = vmatprep.mubr.f32.mxu0 0.0
    %1705 = vmatmul.mubr.f32.gmra.mrb[0].mxu0 %v1635
    %v1706 = vpop.f32.mrb[0].mxu0
    %v1707 = vadd.f32 0.0, %v1706
    %v1708 = vpop.f32.mrb[0].mxu0
    %1709 = vmatprep.mubr.f32.mxu0 0.0
    %1710 = vmatmul.mubr.f32.gmra.mrb[0].mxu0 %v1638
    %v1711 = vpop.f32.mrb[0].mxu0
    %v1712 = vadd.f32 0.0, %v1711
    %v1713 = vpop.f32.mrb[0].mxu0
    %1714 = vdwg.mxu0
    %1715 = vrot.lane.b32.xlu0 %v1181, 64
    %v1716 = vpop.permute.xlu0 %1715
    %1717 = vrot.lane.b32.xlu0 %v1183, 64
    %v1718 = vpop.permute.xlu0 %1717
    %v1722 = vsel %vm519, %v1622, 0
    %v1725 = vsel %vm519, %v1623, 0
    %1727 = vmatprep.subr.mxu0 0.0
    %1728 = vmatpush1.msra.mxu0 %v1716
    %1729 = vmatprep.subr.mxu0 0.0
    %1730 = vmatpush1.msra.mxu0 %v1718
    %1731 = vmatprep.subr.mxu0 0.0
    %1732 = vmatpush1.msra.mxu0 0.0
    %1733 = vmatprep.subr.mxu0 0.0
    %1734 = vmatpush1.msra.mxu0 0.0
    %1735 = vmatprep.subr.mxu0 0.0
    %1736 = vmatpush1.msra.mxu0 0.0
    %1737 = vmatprep.subr.mxu0 0.0
    %1738 = vmatpush1.msra.mxu0 0.0
    %1739 = vmatprep.subr.mxu0 0.0
    %1740 = vmatpush1.msra.mxu0 0.0
    %1741 = vmatprep.subr.mxu0 0.0
    %1742 = vmatpush1.msra.mxu0 0.0
    %1743 = vmatprep.subr.mxu0 0.0
    %1744 = vmatpush1.msra.mxu0 0.0
    %1745 = vmatprep.subr.mxu0 0.0
    %1746 = vmatpush1.msra.mxu0 0.0
    %1747 = vmatprep.subr.mxu0 0.0
    %1748 = vmatpush1.msra.mxu0 0.0
    %1749 = vmatprep.subr.mxu0 0.0
    %1750 = vmatpush1.msra.mxu0 0.0
    %1751 = vmatprep.subr.mxu0 0.0
    %1752 = vmatpush1.msra.mxu0 0.0
    %1753 = vmatprep.subr.mxu0 0.0
    %1754 = vmatpush1.msra.mxu0 0.0
    %1755 = vmatprep.subr.mxu0 0.0
    %1756 = vmatpush1.msra.mxu0 0.0
    %1757 = vmatprep.subr.mxu0 0.0
    %1758 = vmatpush1.msra.mxu0 0.0
    %1759 = vmatprep.subr.mxu0 0.0
    %1760 = vmatpush1.msra.mxu0 0.0
    %1761 = vmatprep.subr.mxu0 0.0
    %1762 = vmatpush1.msra.mxu0 0.0
    %1763 = vmatprep.subr.mxu0 0.0
    %1764 = vmatpush1.msra.mxu0 0.0
    %1765 = vmatprep.subr.mxu0 0.0
    %1766 = vmatpush1.msra.mxu0 0.0
    %1767 = vmatprep.subr.mxu0 0.0
    %1768 = vmatpush1.msra.mxu0 0.0
    %1769 = vmatprep.subr.mxu0 0.0
    %1770 = vmatpush1.msra.mxu0 0.0
    %1771 = vmatprep.subr.mxu0 0.0
    %1772 = vmatpush1.msra.mxu0 0.0
    %1773 = vmatprep.subr.mxu0 0.0
    %1774 = vmatpush1.msra.mxu0 0.0
    %1775 = vmatprep.subr.mxu0 0.0
    %1776 = vmatpush1.msra.mxu0 0.0
    %1777 = vmatprep.subr.mxu0 0.0
    %1778 = vmatpush1.msra.mxu0 0.0
    %1779 = vmatprep.subr.mxu0 0.0
    %1780 = vmatpush1.msra.mxu0 0.0
    %1781 = vmatprep.subr.mxu0 0.0
    %1782 = vmatpush1.msra.mxu0 0.0
    %1783 = vmatprep.subr.mxu0 0.0
    %1784 = vmatpush1.msra.mxu0 0.0
    %1785 = vmatprep.subr.mxu0 0.0
    %1786 = vmatpush1.msra.mxu0 0.0
    %1787 = vmatprep.subr.mxu0 0.0
    %1788 = vmatpush1.msra.mxu0 0.0
    %1789 = vmatprep.subr.mxu0 0.0
    %1790 = vmatpush1.msra.mxu0 0.0
    %1791 = vmatprep.mubr.f32.mxu0 0.0
    %1792 = vmatmul.mubr.f32.gmra.mrb[0].mxu0 %v1722
    %v1793 = vpop.f32.mrb[0].mxu0
    %v1794 = vadd.f32 0.0, %v1793
    %v1795 = vpop.f32.mrb[0].mxu0
    %1796 = vmatprep.mubr.f32.mxu0 0.0
    %1797 = vmatmul.mubr.f32.gmra.mrb[0].mxu0 %v1725
    %v1798 = vpop.f32.mrb[0].mxu0
    %v1799 = vadd.f32 0.0, %v1798
    %v1800 = vpop.f32.mrb[0].mxu0
    %1801 = vdwg.mxu0
    %1802 = vrot.lane.b32.xlu0 %v1185, 64
    %v1803 = vpop.permute.xlu0 %1802
    %1804 = vrot.lane.b32.xlu0 %v1187, 64
    %v1805 = vpop.permute.xlu0 %1804
    %v1809 = vsel %vm519, %v1624, 0
    %v1812 = vsel %vm519, %v1625, 0
    %1814 = vmatprep.subr.mxu0 0.0
    %1815 = vmatpush1.msra.mxu0 %v1803
    %1816 = vmatprep.subr.mxu0 0.0
    %1817 = vmatpush1.msra.mxu0 %v1805
    %1818 = vmatprep.subr.mxu0 0.0
    %1819 = vmatpush1.msra.mxu0 0.0
    %1820 = vmatprep.subr.mxu0 0.0
    %1821 = vmatpush1.msra.mxu0 0.0
    %1822 = vmatprep.subr.mxu0 0.0
    %1823 = vmatpush1.msra.mxu0 0.0
    %1824 = vmatprep.subr.mxu0 0.0
    %1825 = vmatpush1.msra.mxu0 0.0
    %1826 = vmatprep.subr.mxu0 0.0
    %1827 = vmatpush1.msra.mxu0 0.0
    %1828 = vmatprep.subr.mxu0 0.0
    %1829 = vmatpush1.msra.mxu0 0.0
    %1830 = vmatprep.subr.mxu0 0.0
    %1831 = vmatpush1.msra.mxu0 0.0
    %1832 = vmatprep.subr.mxu0 0.0
    %1833 = vmatpush1.msra.mxu0 0.0
    %1834 = vmatprep.subr.mxu0 0.0
    %1835 = vmatpush1.msra.mxu0 0.0
    %1836 = vmatprep.subr.mxu0 0.0
    %1837 = vmatpush1.msra.mxu0 0.0
    %1838 = vmatprep.subr.mxu0 0.0
    %1839 = vmatpush1.msra.mxu0 0.0
    %1840 = vmatprep.subr.mxu0 0.0
    %1841 = vmatpush1.msra.mxu0 0.0
    %1842 = vmatprep.subr.mxu0 0.0
    %1843 = vmatpush1.msra.mxu0 0.0
    %1844 = vmatprep.subr.mxu0 0.0
    %1845 = vmatpush1.msra.mxu0 0.0
    %1846 = vmatprep.subr.mxu0 0.0
    %1847 = vmatpush1.msra.mxu0 0.0
    %1848 = vmatprep.subr.mxu0 0.0
    %1849 = vmatpush1.msra.mxu0 0.0
    %1850 = vmatprep.subr.mxu0 0.0
    %1851 = vmatpush1.msra.mxu0 0.0
    %1852 = vmatprep.subr.mxu0 0.0
    %1853 = vmatpush1.msra.mxu0 0.0
    %1854 = vmatprep.subr.mxu0 0.0
    %1855 = vmatpush1.msra.mxu0 0.0
    %1856 = vmatprep.subr.mxu0 0.0
    %1857 = vmatpush1.msra.mxu0 0.0
    %1858 = vmatprep.subr.mxu0 0.0
    %1859 = vmatpush1.msra.mxu0 0.0
    %1860 = vmatprep.subr.mxu0 0.0
    %1861 = vmatpush1.msra.mxu0 0.0
    %1862 = vmatprep.subr.mxu0 0.0
    %1863 = vmatpush1.msra.mxu0 0.0
    %1864 = vmatprep.subr.mxu0 0.0
    %1865 = vmatpush1.msra.mxu0 0.0
    %1866 = vmatprep.subr.mxu0 0.0
    %1867 = vmatpush1.msra.mxu0 0.0
    %1868 = vmatprep.subr.mxu0 0.0
    %1869 = vmatpush1.msra.mxu0 0.0
    %1870 = vmatprep.subr.mxu0 0.0
    %1871 = vmatpush1.msra.mxu0 0.0
    %1872 = vmatprep.subr.mxu0 0.0
    %1873 = vmatpush1.msra.mxu0 0.0
    %1874 = vmatprep.subr.mxu0 0.0
    %1875 = vmatpush1.msra.mxu0 0.0
    %1876 = vmatprep.subr.mxu0 0.0
    %1877 = vmatpush1.msra.mxu0 0.0
    %1878 = vmatprep.mubr.f32.mxu0 0.0
    %1879 = vmatmul.mubr.f32.gmra.mrb[0].mxu0 %v1809
    %v1880 = vpop.f32.mrb[0].mxu0
    %v1881 = vadd.f32 0.0, %v1880
    %v1882 = vpop.f32.mrb[0].mxu0
    %1883 = vmatprep.mubr.f32.mxu0 0.0
    %1884 = vmatmul.mubr.f32.gmra.mrb[0].mxu0 %v1812
    %v1885 = vpop.f32.mrb[0].mxu0
    %v1886 = vadd.f32 0.0, %v1885
    %v1887 = vpop.f32.mrb[0].mxu0
    %1888 = vdwg.mxu0
    %1889 = vrot.lane.b32.xlu0 %v1189, 64
    %v1890 = vpop.permute.xlu0 %1889
    %1891 = vrot.lane.b32.xlu0 %v1191, 64
    %v1892 = vpop.permute.xlu0 %1891
    %v1896 = vsel %vm519, %v1626, 0
    %v1899 = vsel %vm519, %v1627, 0
    %1901 = vmatprep.subr.mxu0 0.0
    %1902 = vmatpush1.msra.mxu0 %v1890
    %1903 = vmatprep.subr.mxu0 0.0
    %1904 = vmatpush1.msra.mxu0 %v1892
    %1905 = vmatprep.subr.mxu0 0.0
    %1906 = vmatpush1.msra.mxu0 0.0
    %1907 = vmatprep.subr.mxu0 0.0
    %1908 = vmatpush1.msra.mxu0 0.0
    %1909 = vmatprep.subr.mxu0 0.0
    %1910 = vmatpush1.msra.mxu0 0.0
    %1911 = vmatprep.subr.mxu0 0.0
    %1912 = vmatpush1.msra.mxu0 0.0
    %1913 = vmatprep.subr.mxu0 0.0
    %1914 = vmatpush1.msra.mxu0 0.0
    %1915 = vmatprep.subr.mxu0 0.0
    %1916 = vmatpush1.msra.mxu0 0.0
    %1917 = vmatprep.subr.mxu0 0.0
    %1918 = vmatpush1.msra.mxu0 0.0
    %1919 = vmatprep.subr.mxu0 0.0
    %1920 = vmatpush1.msra.mxu0 0.0
    %1921 = vmatprep.subr.mxu0 0.0
    %1922 = vmatpush1.msra.mxu0 0.0
    %1923 = vmatprep.subr.mxu0 0.0
    %1924 = vmatpush1.msra.mxu0 0.0
    %1925 = vmatprep.subr.mxu0 0.0
    %1926 = vmatpush1.msra.mxu0 0.0
    %1927 = vmatprep.subr.mxu0 0.0
    %1928 = vmatpush1.msra.mxu0 0.0
    %1929 = vmatprep.subr.mxu0 0.0
    %1930 = vmatpush1.msra.mxu0 0.0
    %1931 = vmatprep.subr.mxu0 0.0
    %1932 = vmatpush1.msra.mxu0 0.0
    %1933 = vmatprep.subr.mxu0 0.0
    %1934 = vmatpush1.msra.mxu0 0.0
    %1935 = vmatprep.subr.mxu0 0.0
    %1936 = vmatpush1.msra.mxu0 0.0
    %1937 = vmatprep.subr.mxu0 0.0
    %1938 = vmatpush1.msra.mxu0 0.0
    %1939 = vmatprep.subr.mxu0 0.0
    %1940 = vmatpush1.msra.mxu0 0.0
    %1941 = vmatprep.subr.mxu0 0.0
    %1942 = vmatpush1.msra.mxu0 0.0
    %1943 = vmatprep.subr.mxu0 0.0
    %1944 = vmatpush1.msra.mxu0 0.0
    %1945 = vmatprep.subr.mxu0 0.0
    %1946 = vmatpush1.msra.mxu0 0.0
    %1947 = vmatprep.subr.mxu0 0.0
    %1948 = vmatpush1.msra.mxu0 0.0
    %1949 = vmatprep.subr.mxu0 0.0
    %1950 = vmatpush1.msra.mxu0 0.0
    %1951 = vmatprep.subr.mxu0 0.0
    %1952 = vmatpush1.msra.mxu0 0.0
    %1953 = vmatprep.subr.mxu0 0.0
    %1954 = vmatpush1.msra.mxu0 0.0
    %1955 = vmatprep.subr.mxu0 0.0
    %1956 = vmatpush1.msra.mxu0 0.0
    %1957 = vmatprep.subr.mxu0 0.0
    %1958 = vmatpush1.msra.mxu0 0.0
    %1959 = vmatprep.subr.mxu0 0.0
    %1960 = vmatpush1.msra.mxu0 0.0
    %1961 = vmatprep.subr.mxu0 0.0
    %1962 = vmatpush1.msra.mxu0 0.0
    %1963 = vmatprep.subr.mxu0 0.0
    %1964 = vmatpush1.msra.mxu0 0.0
    %1965 = vmatprep.mubr.f32.mxu0 0.0
    %1966 = vmatmul.mubr.f32.gmra.mrb[0].mxu0 %v1896
    %v1967 = vpop.f32.mrb[0].mxu0
    %v1968 = vadd.f32 0.0, %v1967
    %v1969 = vpop.f32.mrb[0].mxu0
    %1970 = vmatprep.mubr.f32.mxu0 0.0
    %1971 = vmatmul.mubr.f32.gmra.mrb[0].mxu0 %v1899
    %v1972 = vpop.f32.mrb[0].mxu0
    %v1973 = vadd.f32 0.0, %v1972
    %v1974 = vpop.f32.mrb[0].mxu0
    %1975 = vdwg.mxu0
    %1978 = vrot.lane.b32.xlu0 %v1794, 8
    %v1979 = vpop.permute.xlu0 %1978
    %1980 = vrot.lane.b32.xlu0 %v1799, 8
    %v1981 = vpop.permute.xlu0 %1980
    %1986 = vrot.lane.b32.xlu0 %v1881, 16
    %v1987 = vpop.permute.xlu0 %1986
    %1988 = vrot.lane.b32.xlu0 %v1886, 16
    %v1989 = vpop.permute.xlu0 %1988
    %1994 = vrot.lane.b32.xlu0 %v1968, 24
    %v1995 = vpop.permute.xlu0 %1994
    %1996 = vrot.lane.b32.xlu0 %v1973, 24
    %v1997 = vpop.permute.xlu0 %1996
    %v2000 = vsel %vm70, %v1707, %v1979
    %v2001 = vsel %vm70, %v1712, %v1981
    %v2002 = vsel %vm519, %v2000, %v1987
    %v2003 = vsel %vm519, %v2001, %v1989
    %v2004 = vsel %vm984, %v2002, %v1995
    %v2005 = vsel %vm984, %v2003, %v1997
    %v2006 = vadd.f32 %v1165, %v2004
    %v2007 = vadd.f32 %v1170, %v2005
    %v2009 = vlaneseq
    %v2010 = vshrl.u32 %v2009, 7
    %v2011 = vsub.s32 0, %v2010
    %v2012 = vrot.slane %v1177, %v2011
    %v2015 = vsel %vm995, %v2006, 0
    %v2018 = vsel %vm995, %v2007, 0
    %2020 = vmatprep.subr.mxu0 0.0
    %2021 = vmatpush1.msra.mxu0 %v1173
    %2022 = vmatprep.subr.mxu0 0.0
    %2023 = vmatpush1.msra.mxu0 %v1174
    %2024 = vmatprep.subr.mxu0 0.0
    %2025 = vmatpush1.msra.mxu0 %v1175
    %2026 = vmatprep.subr.mxu0 0.0
    %2027 = vmatpush1.msra.mxu0 %v1176
    %2028 = vmatprep.subr.mxu0 0.0
    %2029 = vmatpush1.msra.mxu0 0.0
    %2030 = vmatprep.subr.mxu0 0.0
    %2031 = vmatpush1.msra.mxu0 0.0
    %2032 = vmatprep.subr.mxu0 0.0
    %2033 = vmatpush1.msra.mxu0 0.0
    %2034 = vmatprep.subr.mxu0 0.0
    %2035 = vmatpush1.msra.mxu0 0.0
    %2036 = vmatprep.subr.mxu0 0.0
    %2037 = vmatpush1.msra.mxu0 0.0
    %2038 = vmatprep.subr.mxu0 0.0
    %2039 = vmatpush1.msra.mxu0 0.0
    %2040 = vmatprep.subr.mxu0 0.0
    %2041 = vmatpush1.msra.mxu0 0.0
    %2042 = vmatprep.subr.mxu0 0.0
    %2043 = vmatpush1.msra.mxu0 0.0
    %2044 = vmatprep.subr.mxu0 0.0
    %2045 = vmatpush1.msra.mxu0 0.0
    %2046 = vmatprep.subr.mxu0 0.0
    %2047 = vmatpush1.msra.mxu0 0.0
    %2048 = vmatprep.subr.mxu0 0.0
    %2049 = vmatpush1.msra.mxu0 0.0
    %2050 = vmatprep.subr.mxu0 0.0
    %2051 = vmatpush1.msra.mxu0 0.0
    %2052 = vmatprep.subr.mxu0 0.0
    %2053 = vmatpush1.msra.mxu0 0.0
    %2054 = vmatprep.subr.mxu0 0.0
    %2055 = vmatpush1.msra.mxu0 0.0
    %2056 = vmatprep.subr.mxu0 0.0
    %2057 = vmatpush1.msra.mxu0 0.0
    %2058 = vmatprep.subr.mxu0 0.0
    %2059 = vmatpush1.msra.mxu0 0.0
    %2060 = vmatprep.subr.mxu0 0.0
    %2061 = vmatpush1.msra.mxu0 0.0
    %2062 = vmatprep.subr.mxu0 0.0
    %2063 = vmatpush1.msra.mxu0 0.0
    %2064 = vmatprep.subr.mxu0 0.0
    %2065 = vmatpush1.msra.mxu0 0.0
    %2066 = vmatprep.subr.mxu0 0.0
    %2067 = vmatpush1.msra.mxu0 0.0
    %2068 = vmatprep.subr.mxu0 0.0
    %2069 = vmatpush1.msra.mxu0 0.0
    %2070 = vmatprep.subr.mxu0 0.0
    %2071 = vmatpush1.msra.mxu0 0.0
    %2072 = vmatprep.subr.mxu0 0.0
    %2073 = vmatpush1.msra.mxu0 0.0
    %2074 = vmatprep.subr.mxu0 0.0
    %2075 = vmatpush1.msra.mxu0 0.0
    %2076 = vmatprep.subr.mxu0 0.0
    %2077 = vmatpush1.msra.mxu0 0.0
    %2078 = vmatprep.subr.mxu0 0.0
    %2079 = vmatpush1.msra.mxu0 0.0
    %2080 = vmatprep.subr.mxu0 0.0
    %2081 = vmatpush1.msra.mxu0 0.0
    %2082 = vmatprep.subr.mxu0 0.0
    %2083 = vmatpush1.msra.mxu0 0.0
    %2084 = vmatprep.mubr.f32.mxu0 0.0
    %2085 = vmatmul.mubr.f32.gmra.mrb[0].mxu0 %v2015
    %v2086 = vpop.f32.mrb[0].mxu0
    %v2087 = vadd.f32 %v2012, %v2086
    %v2088 = vpop.f32.mrb[0].mxu0
    %2089 = vmatprep.mubr.f32.mxu0 0.0
    %2090 = vmatmul.mubr.f32.gmra.mrb[0].mxu0 %v2018
    %v2091 = vpop.f32.mrb[0].mxu0
    %v2092 = vadd.f32 %v2012, %v2091
    %v2093 = vpop.f32.mrb[0].mxu0
    %2094 = vdwg.mxu0
    %v2095 = vmax.f32 %v2087, 0.0
    %v2096 = vmax.f32 %v2092, 0.0
    %v2097 = vadd.f32 %v2006, %v2095
    %v2098 = vadd.f32 %v2007, %v2096
    %v2099 = vld [vmem:[%s1] sm:$0x1]
    %v2100 = vld [vmem:[%s10] sm:$0xff]
    %v2101 = vld [vmem:[%s10 + $0x8] sm:$0xff]
    %v2102 = vld [vmem:[%s10 + $0x10] sm:$0xff]
    %v2103 = vld [vmem:[%s10 + $0x18] sm:$0xff]
    %v2104 = vld [vmem:[%s11] sm:$0x1]
    %v2106 = vsel %vm995, %v2099, 0
    %2108 = vmatprep.subr.mxu0 0.0
    %2109 = vmatpush1.msra.mxu0 %v2100
    %2110 = vmatprep.subr.mxu0 0.0
    %2111 = vmatpush1.msra.mxu0 %v2101
    %2112 = vmatprep.subr.mxu0 0.0
    %2113 = vmatpush1.msra.mxu0 %v2102
    %2114 = vmatprep.subr.mxu0 0.0
    %2115 = vmatpush1.msra.mxu0 %v2103
    %2116 = vmatprep.subr.mxu0 0.0
    %2117 = vmatpush1.msra.mxu0 0.0
    %2118 = vmatprep.subr.mxu0 0.0
    %2119 = vmatpush1.msra.mxu0 0.0
    %2120 = vmatprep.subr.mxu0 0.0
    %2121 = vmatpush1.msra.mxu0 0.0
    %2122 = vmatprep.subr.mxu0 0.0
    %2123 = vmatpush1.msra.mxu0 0.0
    %2124 = vmatprep.subr.mxu0 0.0
    %2125 = vmatpush1.msra.mxu0 0.0
    %2126 = vmatprep.subr.mxu0 0.0
    %2127 = vmatpush1.msra.mxu0 0.0
    %2128 = vmatprep.subr.mxu0 0.0
    %2129 = vmatpush1.msra.mxu0 0.0
    %2130 = vmatprep.subr.mxu0 0.0
    %2131 = vmatpush1.msra.mxu0 0.0
    %2132 = vmatprep.subr.mxu0 0.0
    %2133 = vmatpush1.msra.mxu0 0.0
    %2134 = vmatprep.subr.mxu0 0.0
    %2135 = vmatpush1.msra.mxu0 0.0
    %2136 = vmatprep.subr.mxu0 0.0
    %2137 = vmatpush1.msra.mxu0 0.0
    %2138 = vmatprep.subr.mxu0 0.0
    %2139 = vmatpush1.msra.mxu0 0.0
    %2140 = vmatprep.subr.mxu0 0.0
    %2141 = vmatpush1.msra.mxu0 0.0
    %2142 = vmatprep.subr.mxu0 0.0
    %2143 = vmatpush1.msra.mxu0 0.0
    %2144 = vmatprep.subr.mxu0 0.0
    %2145 = vmatpush1.msra.mxu0 0.0
    %2146 = vmatprep.subr.mxu0 0.0
    %2147 = vmatpush1.msra.mxu0 0.0
    %2148 = vmatprep.subr.mxu0 0.0
    %2149 = vmatpush1.msra.mxu0 0.0
    %2150 = vmatprep.subr.mxu0 0.0
    %2151 = vmatpush1.msra.mxu0 0.0
    %2152 = vmatprep.subr.mxu0 0.0
    %2153 = vmatpush1.msra.mxu0 0.0
    %2154 = vmatprep.subr.mxu0 0.0
    %2155 = vmatpush1.msra.mxu0 0.0
    %2156 = vmatprep.subr.mxu0 0.0
    %2157 = vmatpush1.msra.mxu0 0.0
    %2158 = vmatprep.subr.mxu0 0.0
    %2159 = vmatpush1.msra.mxu0 0.0
    %2160 = vmatprep.subr.mxu0 0.0
    %2161 = vmatpush1.msra.mxu0 0.0
    %2162 = vmatprep.subr.mxu0 0.0
    %2163 = vmatpush1.msra.mxu0 0.0
    %2164 = vmatprep.subr.mxu0 0.0
    %2165 = vmatpush1.msra.mxu0 0.0
    %2166 = vmatprep.subr.mxu0 0.0
    %2167 = vmatpush1.msra.mxu0 0.0
    %2168 = vmatprep.subr.mxu0 0.0
    %2169 = vmatpush1.msra.mxu0 0.0
    %2170 = vmatprep.subr.mxu0 0.0
    %2171 = vmatpush1.msra.mxu0 0.0
    %2172 = vmatprep.mubr.f32.mxu0 0.0
    %2173 = vmatmul.mubr.f32.gmra.mrb[0].mxu0 %v2106
    %v2174 = vpop.f32.mrb[0].mxu0
    %v2175 = vadd.f32 %v2104, %v2174
    %v2176 = vpop.f32.mrb[0].mxu0
    %2177 = vdwg.mxu0
    %v2178 = vld [vmem:[%s12] sm:$0xff]
    %v2179 = vld [vmem:[%s12 + $0x8] sm:$0xff]
    %v2180 = vld [vmem:[%s12 + $0x10] sm:$0xff]
    %v2181 = vld [vmem:[%s12 + $0x18] sm:$0xff]
    %v2182 = vld [vmem:[%s13] sm:$0x1]
    %v2184 = vlaneseq
    %v2185 = vshrl.u32 %v2184, 7
    %v2186 = vsub.s32 0, %v2185
    %v2187 = vrot.slane %v2182, %v2186
    %v2190 = vsel %vm995, %v2097, 0
    %v2193 = vsel %vm995, %v2098, 0
    %2195 = vmatprep.subr.mxu0 0.0
    %2196 = vmatpush1.msra.mxu0 %v2178
    %2197 = vmatprep.subr.mxu0 0.0
    %2198 = vmatpush1.msra.mxu0 %v2179
    %2199 = vmatprep.subr.mxu0 0.0
    %2200 = vmatpush1.msra.mxu0 %v2180
    %2201 = vmatprep.subr.mxu0 0.0
    %2202 = vmatpush1.msra.mxu0 %v2181
    %2203 = vmatprep.subr.mxu0 0.0
    %2204 = vmatpush1.msra.mxu0 0.0
    %2205 = vmatprep.subr.mxu0 0.0
    %2206 = vmatpush1.msra.mxu0 0.0
    %2207 = vmatprep.subr.mxu0 0.0
    %2208 = vmatpush1.msra.mxu0 0.0
    %2209 = vmatprep.subr.mxu0 0.0
    %2210 = vmatpush1.msra.mxu0 0.0
    %2211 = vmatprep.subr.mxu0 0.0
    %2212 = vmatpush1.msra.mxu0 0.0
    %2213 = vmatprep.subr.mxu0 0.0
    %2214 = vmatpush1.msra.mxu0 0.0
    %2215 = vmatprep.subr.mxu0 0.0
    %2216 = vmatpush1.msra.mxu0 0.0
    %2217 = vmatprep.subr.mxu0 0.0
    %2218 = vmatpush1.msra.mxu0 0.0
    %2219 = vmatprep.subr.mxu0 0.0
    %2220 = vmatpush1.msra.mxu0 0.0
    %2221 = vmatprep.subr.mxu0 0.0
    %2222 = vmatpush1.msra.mxu0 0.0
    %2223 = vmatprep.subr.mxu0 0.0
    %2224 = vmatpush1.msra.mxu0 0.0
    %2225 = vmatprep.subr.mxu0 0.0
    %2226 = vmatpush1.msra.mxu0 0.0
    %2227 = vmatprep.subr.mxu0 0.0
    %2228 = vmatpush1.msra.mxu0 0.0
    %2229 = vmatprep.subr.mxu0 0.0
    %2230 = vmatpush1.msra.mxu0 0.0
    %2231 = vmatprep.subr.mxu0 0.0
    %2232 = vmatpush1.msra.mxu0 0.0
    %2233 = vmatprep.subr.mxu0 0.0
    %2234 = vmatpush1.msra.mxu0 0.0
    %2235 = vmatprep.subr.mxu0 0.0
    %2236 = vmatpush1.msra.mxu0 0.0
    %2237 = vmatprep.subr.mxu0 0.0
    %2238 = vmatpush1.msra.mxu0 0.0
    %2239 = vmatprep.subr.mxu0 0.0
    %2240 = vmatpush1.msra.mxu0 0.0
    %2241 = vmatprep.subr.mxu0 0.0
    %2242 = vmatpush1.msra.mxu0 0.0
    %2243 = vmatprep.subr.mxu0 0.0
    %2244 = vmatpush1.msra.mxu0 0.0
    %2245 = vmatprep.subr.mxu0 0.0
    %2246 = vmatpush1.msra.mxu0 0.0
    %2247 = vmatprep.subr.mxu0 0.0
    %2248 = vmatpush1.msra.mxu0 0.0
    %2249 = vmatprep.subr.mxu0 0.0
    %2250 = vmatpush1.msra.mxu0 0.0
    %2251 = vmatprep.subr.mxu0 0.0
    %2252 = vmatpush1.msra.mxu0 0.0
    %2253 = vmatprep.subr.mxu0 0.0
    %2254 = vmatpush1.msra.mxu0 0.0
    %2255 = vmatprep.subr.mxu0 0.0
    %2256 = vmatpush1.msra.mxu0 0.0
    %2257 = vmatprep.subr.mxu0 0.0
    %2258 = vmatpush1.msra.mxu0 0.0
    %2259 = vmatprep.mubr.f32.mxu0 0.0
    %2260 = vmatmul.mubr.f32.gmra.mrb[0].mxu0 %v2190
    %v2261 = vpop.f32.mrb[0].mxu0
    %v2262 = vadd.f32 %v2187, %v2261
    %v2263 = vpop.f32.mrb[0].mxu0
    %2264 = vmatprep.mubr.f32.mxu0 0.0
    %2265 = vmatmul.mubr.f32.gmra.mrb[0].mxu0 %v2193
    %v2266 = vpop.f32.mrb[0].mxu0
    %v2267 = vadd.f32 %v2187, %v2266
    %v2268 = vpop.f32.mrb[0].mxu0
    %2269 = vdwg.mxu0
    %v2270 = vld [vmem:[%s14] sm:$0xff]
    %v2271 = vld [vmem:[%s14 + $0x8] sm:$0xff]
    %v2272 = vld [vmem:[%s14 + $0x10] sm:$0xff]
    %v2273 = vld [vmem:[%s14 + $0x18] sm:$0xff]
    %v2274 = vld [vmem:[%s15] sm:$0x1]
    %2276 = vrot.lane.b32.xlu0 %v2175, 120
    %v2277 = vpop.permute.xlu0 %2276
    %2278 = vrot.lane.b32.xlu0 %v2175, 112
    %v2279 = vpop.permute.xlu0 %2278
    %2280 = vrot.lane.b32.xlu0 %v2175, 104
    %v2281 = vpop.permute.xlu0 %2280
    %2284 = vrot.lane.b32.xlu0 %v2262, 120
    %v2285 = vpop.permute.xlu0 %2284
    %2286 = vrot.lane.b32.xlu0 %v2267, 120
    %v2287 = vpop.permute.xlu0 %2286
    %2288 = vrot.lane.b32.xlu0 %v2262, 112
    %v2289 = vpop.permute.xlu0 %2288
    %2290 = vrot.lane.b32.xlu0 %v2267, 112
    %v2291 = vpop.permute.xlu0 %2290
    %2292 = vrot.lane.b32.xlu0 %v2262, 104
    %v2293 = vpop.permute.xlu0 %2292
    %2294 = vrot.lane.b32.xlu0 %v2267, 104
    %v2295 = vpop.permute.xlu0 %2294
    %v2296 = vsel %vm70, %v2175, 0
    %v2298 = vsel %vm70, %v2262, 0
    %v2300 = vsel %vm70, %v2267, 0
    %2302 = vmatprep.subr.mxu0 0.0
    %2303 = vmatpush1.xpose.msra.mxu0 %v2298
    %2304 = vmatprep.subr.mxu0 0.0
    %2305 = vmatpush1.xpose.msra.mxu0 %v2300
    %2306 = vmatprep.subr.mxu0 0.0
    %2307 = vmatpush1.xpose.msra.mxu0 0.0
    %2308 = vmatprep.subr.mxu0 0.0
    %2309 = vmatpush1.xpose.msra.mxu0 0.0
    %2310 = vmatprep.subr.mxu0 0.0
    %2311 = vmatpush1.xpose.msra.mxu0 0.0
    %2312 = vmatprep.subr.mxu0 0.0
    %2313 = vmatpush1.xpose.msra.mxu0 0.0
    %2314 = vmatprep.subr.mxu0 0.0
    %2315 = vmatpush1.xpose.msra.mxu0 0.0
    %2316 = vmatprep.subr.mxu0 0.0
    %2317 = vmatpush1.xpose.msra.mxu0 0.0
    %2318 = vmatprep.subr.mxu0 0.0
    %2319 = vmatpush1.xpose.msra.mxu0 0.0
    %2320 = vmatprep.subr.mxu0 0.0
    %2321 = vmatpush1.xpose.msra.mxu0 0.0
    %2322 = vmatprep.subr.mxu0 0.0
    %2323 = vmatpush1.xpose.msra.mxu0 0.0
    %2324 = vmatprep.subr.mxu0 0.0
    %2325 = vmatpush1.xpose.msra.mxu0 0.0
    %2326 = vmatprep.subr.mxu0 0.0
    %2327 = vmatpush1.xpose.msra.mxu0 0.0
    %2328 = vmatprep.subr.mxu0 0.0
    %2329 = vmatpush1.xpose.msra.mxu0 0.0
    %2330 = vmatprep.subr.mxu0 0.0
    %2331 = vmatpush1.xpose.msra.mxu0 0.0
    %2332 = vmatprep.subr.mxu0 0.0
    %2333 = vmatpush1.xpose.msra.mxu0 0.0
    %2334 = vmatprep.subr.mxu0 0.0
    %2335 = vmatpush1.xpose.msra.mxu0 0.0
    %2336 = vmatprep.subr.mxu0 0.0
    %2337 = vmatpush1.xpose.msra.mxu0 0.0
    %2338 = vmatprep.subr.mxu0 0.0
    %2339 = vmatpush1.xpose.msra.mxu0 0.0
    %2340 = vmatprep.subr.mxu0 0.0
    %2341 = vmatpush1.xpose.msra.mxu0 0.0
    %2342 = vmatprep.subr.mxu0 0.0
    %2343 = vmatpush1.xpose.msra.mxu0 0.0
    %2344 = vmatprep.subr.mxu0 0.0
    %2345 = vmatpush1.xpose.msra.mxu0 0.0
    %2346 = vmatprep.subr.mxu0 0.0
    %2347 = vmatpush1.xpose.msra.mxu0 0.0
    %2348 = vmatprep.subr.mxu0 0.0
    %2349 = vmatpush1.xpose.msra.mxu0 0.0
    %2350 = vmatprep.subr.mxu0 0.0
    %2351 = vmatpush1.xpose.msra.mxu0 0.0
    %2352 = vmatprep.subr.mxu0 0.0
    %2353 = vmatpush1.xpose.msra.mxu0 0.0
    %2354 = vmatprep.subr.mxu0 0.0
    %2355 = vmatpush1.xpose.msra.mxu0 0.0
    %2356 = vmatprep.subr.mxu0 0.0
    %2357 = vmatpush1.xpose.msra.mxu0 0.0
    %2358 = vmatprep.subr.mxu0 0.0
    %2359 = vmatpush1.xpose.msra.mxu0 0.0
    %2360 = vmatprep.subr.mxu0 0.0
    %2361 = vmatpush1.xpose.msra.mxu0 0.0
    %2362 = vmatprep.subr.mxu0 0.0
    %2363 = vmatpush1.xpose.msra.mxu0 0.0
    %2364 = vmatprep.subr.mxu0 0.0
    %2365 = vmatpush1.xpose.msra.mxu0 0.0
    %2366 = vmatprep.mubr.f32.mxu0 0.0
    %2367 = vmatmul.mubr.f32.gmra.mrb[0].mxu0 %v2296
    %v2368 = vpop.f32.mrb[0].mxu0
    %v2369 = vadd.f32 0.0, %v2368
    %v2370 = vpop.f32.mrb[0].mxu0
    %2371 = vdwg.mxu0
    %v2372 = vsel %vm70, %v2277, 0
    %v2374 = vsel %vm70, %v2285, 0
    %v2376 = vsel %vm70, %v2287, 0
    %2378 = vmatprep.subr.mxu0 0.0
    %2379 = vmatpush1.xpose.msra.mxu0 %v2374
    %2380 = vmatprep.subr.mxu0 0.0
    %2381 = vmatpush1.xpose.msra.mxu0 %v2376
    %2382 = vmatprep.subr.mxu0 0.0
    %2383 = vmatpush1.xpose.msra.mxu0 0.0
    %2384 = vmatprep.subr.mxu0 0.0
    %2385 = vmatpush1.xpose.msra.mxu0 0.0
    %2386 = vmatprep.subr.mxu0 0.0
    %2387 = vmatpush1.xpose.msra.mxu0 0.0
    %2388 = vmatprep.subr.mxu0 0.0
    %2389 = vmatpush1.xpose.msra.mxu0 0.0
    %2390 = vmatprep.subr.mxu0 0.0
    %2391 = vmatpush1.xpose.msra.mxu0 0.0
    %2392 = vmatprep.subr.mxu0 0.0
    %2393 = vmatpush1.xpose.msra.mxu0 0.0
    %2394 = vmatprep.subr.mxu0 0.0
    %2395 = vmatpush1.xpose.msra.mxu0 0.0
    %2396 = vmatprep.subr.mxu0 0.0
    %2397 = vmatpush1.xpose.msra.mxu0 0.0
    %2398 = vmatprep.subr.mxu0 0.0
    %2399 = vmatpush1.xpose.msra.mxu0 0.0
    %2400 = vmatprep.subr.mxu0 0.0
    %2401 = vmatpush1.xpose.msra.mxu0 0.0
    %2402 = vmatprep.subr.mxu0 0.0
    %2403 = vmatpush1.xpose.msra.mxu0 0.0
    %2404 = vmatprep.subr.mxu0 0.0
    %2405 = vmatpush1.xpose.msra.mxu0 0.0
    %2406 = vmatprep.subr.mxu0 0.0
    %2407 = vmatpush1.xpose.msra.mxu0 0.0
    %2408 = vmatprep.subr.mxu0 0.0
    %2409 = vmatpush1.xpose.msra.mxu0 0.0
    %2410 = vmatprep.subr.mxu0 0.0
    %2411 = vmatpush1.xpose.msra.mxu0 0.0
    %2412 = vmatprep.subr.mxu0 0.0
    %2413 = vmatpush1.xpose.msra.mxu0 0.0
    %2414 = vmatprep.subr.mxu0 0.0
    %2415 = vmatpush1.xpose.msra.mxu0 0.0
    %2416 = vmatprep.subr.mxu0 0.0
    %2417 = vmatpush1.xpose.msra.mxu0 0.0
    %2418 = vmatprep.subr.mxu0 0.0
    %2419 = vmatpush1.xpose.msra.mxu0 0.0
    %2420 = vmatprep.subr.mxu0 0.0
    %2421 = vmatpush1.xpose.msra.mxu0 0.0
    %2422 = vmatprep.subr.mxu0 0.0
    %2423 = vmatpush1.xpose.msra.mxu0 0.0
    %2424 = vmatprep.subr.mxu0 0.0
    %2425 = vmatpush1.xpose.msra.mxu0 0.0
    %2426 = vmatprep.subr.mxu0 0.0
    %2427 = vmatpush1.xpose.msra.mxu0 0.0
    %2428 = vmatprep.subr.mxu0 0.0
    %2429 = vmatpush1.xpose.msra.mxu0 0.0
    %2430 = vmatprep.subr.mxu0 0.0
    %2431 = vmatpush1.xpose.msra.mxu0 0.0
    %2432 = vmatprep.subr.mxu0 0.0
    %2433 = vmatpush1.xpose.msra.mxu0 0.0
    %2434 = vmatprep.subr.mxu0 0.0
    %2435 = vmatpush1.xpose.msra.mxu0 0.0
    %2436 = vmatprep.subr.mxu0 0.0
    %2437 = vmatpush1.xpose.msra.mxu0 0.0
    %2438 = vmatprep.subr.mxu0 0.0
    %2439 = vmatpush1.xpose.msra.mxu0 0.0
    %2440 = vmatprep.subr.mxu0 0.0
    %2441 = vmatpush1.xpose.msra.mxu0 0.0
    %2442 = vmatprep.mubr.f32.mxu0 0.0
    %2443 = vmatmul.mubr.f32.gmra.mrb[0].mxu0 %v2372
    %v2444 = vpop.f32.mrb[0].mxu0
    %v2445 = vadd.f32 0.0, %v2444
    %v2446 = vpop.f32.mrb[0].mxu0
    %2447 = vdwg.mxu0
    %v2448 = vsel %vm70, %v2279, 0
    %v2450 = vsel %vm70, %v2289, 0
    %v2452 = vsel %vm70, %v2291, 0
    %2454 = vmatprep.subr.mxu0 0.0
    %2455 = vmatpush1.xpose.msra.mxu0 %v2450
    %2456 = vmatprep.subr.mxu0 0.0
    %2457 = vmatpush1.xpose.msra.mxu0 %v2452
    %2458 = vmatprep.subr.mxu0 0.0
    %2459 = vmatpush1.xpose.msra.mxu0 0.0
    %2460 = vmatprep.subr.mxu0 0.0
    %2461 = vmatpush1.xpose.msra.mxu0 0.0
    %2462 = vmatprep.subr.mxu0 0.0
    %2463 = vmatpush1.xpose.msra.mxu0 0.0
    %2464 = vmatprep.subr.mxu0 0.0
    %2465 = vmatpush1.xpose.msra.mxu0 0.0
    %2466 = vmatprep.subr.mxu0 0.0
    %2467 = vmatpush1.xpose.msra.mxu0 0.0
    %2468 = vmatprep.subr.mxu0 0.0
    %2469 = vmatpush1.xpose.msra.mxu0 0.0
    %2470 = vmatprep.subr.mxu0 0.0
    %2471 = vmatpush1.xpose.msra.mxu0 0.0
    %2472 = vmatprep.subr.mxu0 0.0
    %2473 = vmatpush1.xpose.msra.mxu0 0.0
    %2474 = vmatprep.subr.mxu0 0.0
    %2475 = vmatpush1.xpose.msra.mxu0 0.0
    %2476 = vmatprep.subr.mxu0 0.0
    %2477 = vmatpush1.xpose.msra.mxu0 0.0
    %2478 = vmatprep.subr.mxu0 0.0
    %2479 = vmatpush1.xpose.msra.mxu0 0.0
    %2480 = vmatprep.subr.mxu0 0.0
    %2481 = vmatpush1.xpose.msra.mxu0 0.0
    %2482 = vmatprep.subr.mxu0 0.0
    %2483 = vmatpush1.xpose.msra.mxu0 0.0
    %2484 = vmatprep.subr.mxu0 0.0
    %2485 = vmatpush1.xpose.msra.mxu0 0.0
    %2486 = vmatprep.subr.mxu0 0.0
    %2487 = vmatpush1.xpose.msra.mxu0 0.0
    %2488 = vmatprep.subr.mxu0 0.0
    %2489 = vmatpush1.xpose.msra.mxu0 0.0
    %2490 = vmatprep.subr.mxu0 0.0
    %2491 = vmatpush1.xpose.msra.mxu0 0.0
    %2492 = vmatprep.subr.mxu0 0.0
    %2493 = vmatpush1.xpose.msra.mxu0 0.0
    %2494 = vmatprep.subr.mxu0 0.0
    %2495 = vmatpush1.xpose.msra.mxu0 0.0
    %2496 = vmatprep.subr.mxu0 0.0
    %2497 = vmatpush1.xpose.msra.mxu0 0.0
    %2498 = vmatprep.subr.mxu0 0.0
    %2499 = vmatpush1.xpose.msra.mxu0 0.0
    %2500 = vmatprep.subr.mxu0 0.0
    %2501 = vmatpush1.xpose.msra.mxu0 0.0
    %2502 = vmatprep.subr.mxu0 0.0
    %2503 = vmatpush1.xpose.msra.mxu0 0.0
    %2504 = vmatprep.subr.mxu0 0.0
    %2505 = vmatpush1.xpose.msra.mxu0 0.0
    %2506 = vmatprep.subr.mxu0 0.0
    %2507 = vmatpush1.xpose.msra.mxu0 0.0
    %2508 = vmatprep.subr.mxu0 0.0
    %2509 = vmatpush1.xpose.msra.mxu0 0.0
    %2510 = vmatprep.subr.mxu0 0.0
    %2511 = vmatpush1.xpose.msra.mxu0 0.0
    %2512 = vmatprep.subr.mxu0 0.0
    %2513 = vmatpush1.xpose.msra.mxu0 0.0
    %2514 = vmatprep.subr.mxu0 0.0
    %2515 = vmatpush1.xpose.msra.mxu0 0.0
    %2516 = vmatprep.subr.mxu0 0.0
    %2517 = vmatpush1.xpose.msra.mxu0 0.0
    %2518 = vmatprep.mubr.f32.mxu0 0.0
    %2519 = vmatmul.mubr.f32.gmra.mrb[0].mxu0 %v2448
    %v2520 = vpop.f32.mrb[0].mxu0
    %v2521 = vadd.f32 0.0, %v2520
    %v2522 = vpop.f32.mrb[0].mxu0
    %2523 = vdwg.mxu0
    %v2524 = vsel %vm70, %v2281, 0
    %v2526 = vsel %vm70, %v2293, 0
    %v2528 = vsel %vm70, %v2295, 0
    %2530 = vmatprep.subr.mxu0 0.0
    %2531 = vmatpush1.xpose.msra.mxu0 %v2526
    %2532 = vmatprep.subr.mxu0 0.0
    %2533 = vmatpush1.xpose.msra.mxu0 %v2528
    %2534 = vmatprep.subr.mxu0 0.0
    %2535 = vmatpush1.xpose.msra.mxu0 0.0
    %2536 = vmatprep.subr.mxu0 0.0
    %2537 = vmatpush1.xpose.msra.mxu0 0.0
    %2538 = vmatprep.subr.mxu0 0.0
    %2539 = vmatpush1.xpose.msra.mxu0 0.0
    %2540 = vmatprep.subr.mxu0 0.0
    %2541 = vmatpush1.xpose.msra.mxu0 0.0
    %2542 = vmatprep.subr.mxu0 0.0
    %2543 = vmatpush1.xpose.msra.mxu0 0.0
    %2544 = vmatprep.subr.mxu0 0.0
    %2545 = vmatpush1.xpose.msra.mxu0 0.0
    %2546 = vmatprep.subr.mxu0 0.0
    %2547 = vmatpush1.xpose.msra.mxu0 0.0
    %2548 = vmatprep.subr.mxu0 0.0
    %2549 = vmatpush1.xpose.msra.mxu0 0.0
    %2550 = vmatprep.subr.mxu0 0.0
    %2551 = vmatpush1.xpose.msra.mxu0 0.0
    %2552 = vmatprep.subr.mxu0 0.0
    %2553 = vmatpush1.xpose.msra.mxu0 0.0
    %2554 = vmatprep.subr.mxu0 0.0
    %2555 = vmatpush1.xpose.msra.mxu0 0.0
    %2556 = vmatprep.subr.mxu0 0.0
    %2557 = vmatpush1.xpose.msra.mxu0 0.0
    %2558 = vmatprep.subr.mxu0 0.0
    %2559 = vmatpush1.xpose.msra.mxu0 0.0
    %2560 = vmatprep.subr.mxu0 0.0
    %2561 = vmatpush1.xpose.msra.mxu0 0.0
    %2562 = vmatprep.subr.mxu0 0.0
    %2563 = vmatpush1.xpose.msra.mxu0 0.0
    %2564 = vmatprep.subr.mxu0 0.0
    %2565 = vmatpush1.xpose.msra.mxu0 0.0
    %2566 = vmatprep.subr.mxu0 0.0
    %2567 = vmatpush1.xpose.msra.mxu0 0.0
    %2568 = vmatprep.subr.mxu0 0.0
    %2569 = vmatpush1.xpose.msra.mxu0 0.0
    %2570 = vmatprep.subr.mxu0 0.0
    %2571 = vmatpush1.xpose.msra.mxu0 0.0
    %2572 = vmatprep.subr.mxu0 0.0
    %2573 = vmatpush1.xpose.msra.mxu0 0.0
    %2574 = vmatprep.subr.mxu0 0.0
    %2575 = vmatpush1.xpose.msra.mxu0 0.0
    %2576 = vmatprep.subr.mxu0 0.0
    %2577 = vmatpush1.xpose.msra.mxu0 0.0
    %2578 = vmatprep.subr.mxu0 0.0
    %2579 = vmatpush1.xpose.msra.mxu0 0.0
    %2580 = vmatprep.subr.mxu0 0.0
    %2581 = vmatpush1.xpose.msra.mxu0 0.0
    %2582 = vmatprep.subr.mxu0 0.0
    %2583 = vmatpush1.xpose.msra.mxu0 0.0
    %2584 = vmatprep.subr.mxu0 0.0
    %2585 = vmatpush1.xpose.msra.mxu0 0.0
    %2586 = vmatprep.subr.mxu0 0.0
    %2587 = vmatpush1.xpose.msra.mxu0 0.0
    %2588 = vmatprep.subr.mxu0 0.0
    %2589 = vmatpush1.xpose.msra.mxu0 0.0
    %2590 = vmatprep.subr.mxu0 0.0
    %2591 = vmatpush1.xpose.msra.mxu0 0.0
    %2592 = vmatprep.subr.mxu0 0.0
    %2593 = vmatpush1.xpose.msra.mxu0 0.0
    %2594 = vmatprep.mubr.f32.mxu0 0.0
    %2595 = vmatmul.mubr.f32.gmra.mrb[0].mxu0 %v2524
    %v2596 = vpop.f32.mrb[0].mxu0
    %v2597 = vadd.f32 0.0, %v2596
    %v2598 = vpop.f32.mrb[0].mxu0
    %2599 = vdwg.mxu0
    %vm2600 = vcmask 122880
    %v2601 = vsel %vm2600, %v2369, -inf
    %2602 = vmax.xlane.f32.xlu0 %v2601
    %v2603 = vpop.xlane.xlu0 %2602
    %v2604 = vsel %vm2600, %v2445, -inf
    %2605 = vmax.xlane.f32.xlu0 %v2604
    %v2606 = vpop.xlane.xlu0 %2605
    %v2607 = vsel %vm2600, %v2521, -inf
    %2608 = vmax.xlane.f32.xlu0 %v2607
    %v2609 = vpop.xlane.xlu0 %2608
    %v2610 = vsel %vm2600, %v2597, -inf
    %2611 = vmax.xlane.f32.xlu0 %v2610
    %v2612 = vpop.xlane.xlu0 %2611
    %v2613 = vsub.f32 %v2369, %v2603
    %v2614 = vsub.f32 %v2445, %v2606
    %v2615 = vsub.f32 %v2521, %v2609
    %v2616 = vsub.f32 %v2597, %v2612
    %v2617 = vmul.f32 %v2613, 1.442695
    %v2618 = vpow.pop %v2617
    %v2619 = vmul.f32 %v2614, 1.442695
    %v2620 = vpow.pop %v2619
    %v2621 = vmul.f32 %v2615, 1.442695
    %v2622 = vpow.pop %v2621
    %v2623 = vmul.f32 %v2616, 1.442695
    %v2624 = vpow.pop %v2623
    %v2625 = vsel %vm2600, %v2618, 0.0
    %2626 = vadd.xlane.f32.xlu0 %v2625
    %v2627 = vpop.xlane.xlu0 %2626
    %v2628 = vsel %vm2600, %v2620, 0.0
    %2629 = vadd.xlane.f32.xlu0 %v2628
    %v2630 = vpop.xlane.xlu0 %2629
    %v2631 = vsel %vm2600, %v2622, 0.0
    %2632 = vadd.xlane.f32.xlu0 %v2631
    %v2633 = vpop.xlane.xlu0 %2632
    %v2634 = vsel %vm2600, %v2624, 0.0
    %2635 = vadd.xlane.f32.xlu0 %v2634
    %v2636 = vpop.xlane.xlu0 %2635
    %v2637 = vrcp.pop %v2627
    %v2638 = vrcp.pop %v2630
    %v2639 = vrcp.pop %v2633
    %v2640 = vrcp.pop %v2636
    %v2641 = vmul.f32 %v2618, %v2637
    %v2642 = vmul.f32 %v2620, %v2638
    %v2643 = vmul.f32 %v2622, %v2639
    %v2644 = vmul.f32 %v2624, %v2640
    %2645 = vrot.lane.b32.xlu0 %v2262, 96
    %v2646 = vpop.permute.xlu0 %2645
    %2647 = vrot.lane.b32.xlu0 %v2267, 96
    %v2648 = vpop.permute.xlu0 %2647
    %v2652 = vsel %vm519, %v2641, 0
    %2654 = vmatprep.subr.mxu0 0.0
    %2655 = vmatpush1.msra.mxu0 %v2646
    %2656 = vmatprep.subr.mxu0 0.0
    %2657 = vmatpush1.msra.mxu0 %v2648
    %2658 = vmatprep.subr.mxu0 0.0
    %2659 = vmatpush1.msra.mxu0 0.0
    %2660 = vmatprep.subr.mxu0 0.0
    %2661 = vmatpush1.msra.mxu0 0.0
    %2662 = vmatprep.subr.mxu0 0.0
    %2663 = vmatpush1.msra.mxu0 0.0
    %2664 = vmatprep.subr.mxu0 0.0
    %2665 = vmatpush1.msra.mxu0 0.0
    %2666 = vmatprep.subr.mxu0 0.0
    %2667 = vmatpush1.msra.mxu0 0.0
    %2668 = vmatprep.subr.mxu0 0.0
    %2669 = vmatpush1.msra.mxu0 0.0
    %2670 = vmatprep.subr.mxu0 0.0
    %2671 = vmatpush1.msra.mxu0 0.0
    %2672 = vmatprep.subr.mxu0 0.0
    %2673 = vmatpush1.msra.mxu0 0.0
    %2674 = vmatprep.subr.mxu0 0.0
    %2675 = vmatpush1.msra.mxu0 0.0
    %2676 = vmatprep.subr.mxu0 0.0
    %2677 = vmatpush1.msra.mxu0 0.0
    %2678 = vmatprep.subr.mxu0 0.0
    %2679 = vmatpush1.msra.mxu0 0.0
    %2680 = vmatprep.subr.mxu0 0.0
    %2681 = vmatpush1.msra.mxu0 0.0
    %2682 = vmatprep.subr.mxu0 0.0
    %2683 = vmatpush1.msra.mxu0 0.0
    %2684 = vmatprep.subr.mxu0 0.0
    %2685 = vmatpush1.msra.mxu0 0.0
    %2686 = vmatprep.subr.mxu0 0.0
    %2687 = vmatpush1.msra.mxu0 0.0
    %2688 = vmatprep.subr.mxu0 0.0
    %2689 = vmatpush1.msra.mxu0 0.0
    %2690 = vmatprep.subr.mxu0 0.0
    %2691 = vmatpush1.msra.mxu0 0.0
    %2692 = vmatprep.subr.mxu0 0.0
    %2693 = vmatpush1.msra.mxu0 0.0
    %2694 = vmatprep.subr.mxu0 0.0
    %2695 = vmatpush1.msra.mxu0 0.0
    %2696 = vmatprep.subr.mxu0 0.0
    %2697 = vmatpush1.msra.mxu0 0.0
    %2698 = vmatprep.subr.mxu0 0.0
    %2699 = vmatpush1.msra.mxu0 0.0
    %2700 = vmatprep.subr.mxu0 0.0
    %2701 = vmatpush1.msra.mxu0 0.0
    %2702 = vmatprep.subr.mxu0 0.0
    %2703 = vmatpush1.msra.mxu0 0.0
    %2704 = vmatprep.subr.mxu0 0.0
    %2705 = vmatpush1.msra.mxu0 0.0
    %2706 = vmatprep.subr.mxu0 0.0
    %2707 = vmatpush1.msra.mxu0 0.0
    %2708 = vmatprep.subr.mxu0 0.0
    %2709 = vmatpush1.msra.mxu0 0.0
    %2710 = vmatprep.subr.mxu0 0.0
    %2711 = vmatpush1.msra.mxu0 0.0
    %2712 = vmatprep.subr.mxu0 0.0
    %2713 = vmatpush1.msra.mxu0 0.0
    %2714 = vmatprep.subr.mxu0 0.0
    %2715 = vmatpush1.msra.mxu0 0.0
    %2716 = vmatprep.subr.mxu0 0.0
    %2717 = vmatpush1.msra.mxu0 0.0
    %2718 = vmatprep.mubr.f32.mxu0 0.0
    %2719 = vmatmul.mubr.f32.gmra.mrb[0].mxu0 %v2652
    %v2720 = vpop.f32.mrb[0].mxu0
    %v2721 = vadd.f32 0.0, %v2720
    %v2722 = vpop.f32.mrb[0].mxu0
    %2723 = vdwg.mxu0
    %2724 = vrot.lane.b32.xlu0 %v2285, 96
    %v2725 = vpop.permute.xlu0 %2724
    %2726 = vrot.lane.b32.xlu0 %v2287, 96
    %v2727 = vpop.permute.xlu0 %2726
    %v2731 = vsel %vm519, %v2642, 0
    %2733 = vmatprep.subr.mxu0 0.0
    %2734 = vmatpush1.msra.mxu0 %v2725
    %2735 = vmatprep.subr.mxu0 0.0
    %2736 = vmatpush1.msra.mxu0 %v2727
    %2737 = vmatprep.subr.mxu0 0.0
    %2738 = vmatpush1.msra.mxu0 0.0
    %2739 = vmatprep.subr.mxu0 0.0
    %2740 = vmatpush1.msra.mxu0 0.0
    %2741 = vmatprep.subr.mxu0 0.0
    %2742 = vmatpush1.msra.mxu0 0.0
    %2743 = vmatprep.subr.mxu0 0.0
    %2744 = vmatpush1.msra.mxu0 0.0
    %2745 = vmatprep.subr.mxu0 0.0
    %2746 = vmatpush1.msra.mxu0 0.0
    %2747 = vmatprep.subr.mxu0 0.0
    %2748 = vmatpush1.msra.mxu0 0.0
    %2749 = vmatprep.subr.mxu0 0.0
    %2750 = vmatpush1.msra.mxu0 0.0
    %2751 = vmatprep.subr.mxu0 0.0
    %2752 = vmatpush1.msra.mxu0 0.0
    %2753 = vmatprep.subr.mxu0 0.0
    %2754 = vmatpush1.msra.mxu0 0.0
    %2755 = vmatprep.subr.mxu0 0.0
    %2756 = vmatpush1.msra.mxu0 0.0
    %2757 = vmatprep.subr.mxu0 0.0
    %2758 = vmatpush1.msra.mxu0 0.0
    %2759 = vmatprep.subr.mxu0 0.0
    %2760 = vmatpush1.msra.mxu0 0.0
    %2761 = vmatprep.subr.mxu0 0.0
    %2762 = vmatpush1.msra.mxu0 0.0
    %2763 = vmatprep.subr.mxu0 0.0
    %2764 = vmatpush1.msra.mxu0 0.0
    %2765 = vmatprep.subr.mxu0 0.0
    %2766 = vmatpush1.msra.mxu0 0.0
    %2767 = vmatprep.subr.mxu0 0.0
    %2768 = vmatpush1.msra.mxu0 0.0
    %2769 = vmatprep.subr.mxu0 0.0
    %2770 = vmatpush1.msra.mxu0 0.0
    %2771 = vmatprep.subr.mxu0 0.0
    %2772 = vmatpush1.msra.mxu0 0.0
    %2773 = vmatprep.subr.mxu0 0.0
    %2774 = vmatpush1.msra.mxu0 0.0
    %2775 = vmatprep.subr.mxu0 0.0
    %2776 = vmatpush1.msra.mxu0 0.0
    %2777 = vmatprep.subr.mxu0 0.0
    %2778 = vmatpush1.msra.mxu0 0.0
    %2779 = vmatprep.subr.mxu0 0.0
    %2780 = vmatpush1.msra.mxu0 0.0
    %2781 = vmatprep.subr.mxu0 0.0
    %2782 = vmatpush1.msra.mxu0 0.0
    %2783 = vmatprep.subr.mxu0 0.0
    %2784 = vmatpush1.msra.mxu0 0.0
    %2785 = vmatprep.subr.mxu0 0.0
    %2786 = vmatpush1.msra.mxu0 0.0
    %2787 = vmatprep.subr.mxu0 0.0
    %2788 = vmatpush1.msra.mxu0 0.0
    %2789 = vmatprep.subr.mxu0 0.0
    %2790 = vmatpush1.msra.mxu0 0.0
    %2791 = vmatprep.subr.mxu0 0.0
    %2792 = vmatpush1.msra.mxu0 0.0
    %2793 = vmatprep.subr.mxu0 0.0
    %2794 = vmatpush1.msra.mxu0 0.0
    %2795 = vmatprep.subr.mxu0 0.0
    %2796 = vmatpush1.msra.mxu0 0.0
    %2797 = vmatprep.mubr.f32.mxu0 0.0
    %2798 = vmatmul.mubr.f32.gmra.mrb[0].mxu0 %v2731
    %v2799 = vpop.f32.mrb[0].mxu0
    %v2800 = vadd.f32 0.0, %v2799
    %v2801 = vpop.f32.mrb[0].mxu0
    %2802 = vdwg.mxu0
    %2803 = vrot.lane.b32.xlu0 %v2289, 96
    %v2804 = vpop.permute.xlu0 %2803
    %2805 = vrot.lane.b32.xlu0 %v2291, 96
    %v2806 = vpop.permute.xlu0 %2805
    %v2810 = vsel %vm519, %v2643, 0
    %2812 = vmatprep.subr.mxu0 0.0
    %2813 = vmatpush1.msra.mxu0 %v2804
    %2814 = vmatprep.subr.mxu0 0.0
    %2815 = vmatpush1.msra.mxu0 %v2806
    %2816 = vmatprep.subr.mxu0 0.0
    %2817 = vmatpush1.msra.mxu0 0.0
    %2818 = vmatprep.subr.mxu0 0.0
    %2819 = vmatpush1.msra.mxu0 0.0
    %2820 = vmatprep.subr.mxu0 0.0
    %2821 = vmatpush1.msra.mxu0 0.0
    %2822 = vmatprep.subr.mxu0 0.0
    %2823 = vmatpush1.msra.mxu0 0.0
    %2824 = vmatprep.subr.mxu0 0.0
    %2825 = vmatpush1.msra.mxu0 0.0
    %2826 = vmatprep.subr.mxu0 0.0
    %2827 = vmatpush1.msra.mxu0 0.0
    %2828 = vmatprep.subr.mxu0 0.0
    %2829 = vmatpush1.msra.mxu0 0.0
    %2830 = vmatprep.subr.mxu0 0.0
    %2831 = vmatpush1.msra.mxu0 0.0
    %2832 = vmatprep.subr.mxu0 0.0
    %2833 = vmatpush1.msra.mxu0 0.0
    %2834 = vmatprep.subr.mxu0 0.0
    %2835 = vmatpush1.msra.mxu0 0.0
    %2836 = vmatprep.subr.mxu0 0.0
    %2837 = vmatpush1.msra.mxu0 0.0
    %2838 = vmatprep.subr.mxu0 0.0
    %2839 = vmatpush1.msra.mxu0 0.0
    %2840 = vmatprep.subr.mxu0 0.0
    %2841 = vmatpush1.msra.mxu0 0.0
    %2842 = vmatprep.subr.mxu0 0.0
    %2843 = vmatpush1.msra.mxu0 0.0
    %2844 = vmatprep.subr.mxu0 0.0
    %2845 = vmatpush1.msra.mxu0 0.0
    %2846 = vmatprep.subr.mxu0 0.0
    %2847 = vmatpush1.msra.mxu0 0.0
    %2848 = vmatprep.subr.mxu0 0.0
    %2849 = vmatpush1.msra.mxu0 0.0
    %2850 = vmatprep.subr.mxu0 0.0
    %2851 = vmatpush1.msra.mxu0 0.0
    %2852 = vmatprep.subr.mxu0 0.0
    %2853 = vmatpush1.msra.mxu0 0.0
    %2854 = vmatprep.subr.mxu0 0.0
    %2855 = vmatpush1.msra.mxu0 0.0
    %2856 = vmatprep.subr.mxu0 0.0
    %2857 = vmatpush1.msra.mxu0 0.0
    %2858 = vmatprep.subr.mxu0 0.0
    %2859 = vmatpush1.msra.mxu0 0.0
    %2860 = vmatprep.subr.mxu0 0.0
    %2861 = vmatpush1.msra.mxu0 0.0
    %2862 = vmatprep.subr.mxu0 0.0
    %2863 = vmatpush1.msra.mxu0 0.0
    %2864 = vmatprep.subr.mxu0 0.0
    %2865 = vmatpush1.msra.mxu0 0.0
    %2866 = vmatprep.subr.mxu0 0.0
    %2867 = vmatpush1.msra.mxu0 0.0
    %2868 = vmatprep.subr.mxu0 0.0
    %2869 = vmatpush1.msra.mxu0 0.0
    %2870 = vmatprep.subr.mxu0 0.0
    %2871 = vmatpush1.msra.mxu0 0.0
    %2872 = vmatprep.subr.mxu0 0.0
    %2873 = vmatpush1.msra.mxu0 0.0
    %2874 = vmatprep.subr.mxu0 0.0
    %2875 = vmatpush1.msra.mxu0 0.0
    %2876 = vmatprep.mubr.f32.mxu0 0.0
    %2877 = vmatmul.mubr.f32.gmra.mrb[0].mxu0 %v2810
    %v2878 = vpop.f32.mrb[0].mxu0
    %v2879 = vadd.f32 0.0, %v2878
    %v2880 = vpop.f32.mrb[0].mxu0
    %2881 = vdwg.mxu0
    %2882 = vrot.lane.b32.xlu0 %v2293, 96
    %v2883 = vpop.permute.xlu0 %2882
    %2884 = vrot.lane.b32.xlu0 %v2295, 96
    %v2885 = vpop.permute.xlu0 %2884
    %v2889 = vsel %vm519, %v2644, 0
    %2891 = vmatprep.subr.mxu0 0.0
    %2892 = vmatpush1.msra.mxu0 %v2883
    %2893 = vmatprep.subr.mxu0 0.0
    %2894 = vmatpush1.msra.mxu0 %v2885
    %2895 = vmatprep.subr.mxu0 0.0
    %2896 = vmatpush1.msra.mxu0 0.0
    %2897 = vmatprep.subr.mxu0 0.0
    %2898 = vmatpush1.msra.mxu0 0.0
    %2899 = vmatprep.subr.mxu0 0.0
    %2900 = vmatpush1.msra.mxu0 0.0
    %2901 = vmatprep.subr.mxu0 0.0
    %2902 = vmatpush1.msra.mxu0 0.0
    %2903 = vmatprep.subr.mxu0 0.0
    %2904 = vmatpush1.msra.mxu0 0.0
    %2905 = vmatprep.subr.mxu0 0.0
    %2906 = vmatpush1.msra.mxu0 0.0
    %2907 = vmatprep.subr.mxu0 0.0
    %2908 = vmatpush1.msra.mxu0 0.0
    %2909 = vmatprep.subr.mxu0 0.0
    %2910 = vmatpush1.msra.mxu0 0.0
    %2911 = vmatprep.subr.mxu0 0.0
    %2912 = vmatpush1.msra.mxu0 0.0
    %2913 = vmatprep.subr.mxu0 0.0
    %2914 = vmatpush1.msra.mxu0 0.0
    %2915 = vmatprep.subr.mxu0 0.0
    %2916 = vmatpush1.msra.mxu0 0.0
    %2917 = vmatprep.subr.mxu0 0.0
    %2918 = vmatpush1.msra.mxu0 0.0
    %2919 = vmatprep.subr.mxu0 0.0
    %2920 = vmatpush1.msra.mxu0 0.0
    %2921 = vmatprep.subr.mxu0 0.0
    %2922 = vmatpush1.msra.mxu0 0.0
    %2923 = vmatprep.subr.mxu0 0.0
    %2924 = vmatpush1.msra.mxu0 0.0
    %2925 = vmatprep.subr.mxu0 0.0
    %2926 = vmatpush1.msra.mxu0 0.0
    %2927 = vmatprep.subr.mxu0 0.0
    %2928 = vmatpush1.msra.mxu0 0.0
    %2929 = vmatprep.subr.mxu0 0.0
    %2930 = vmatpush1.msra.mxu0 0.0
    %2931 = vmatprep.subr.mxu0 0.0
    %2932 = vmatpush1.msra.mxu0 0.0
    %2933 = vmatprep.subr.mxu0 0.0
    %2934 = vmatpush1.msra.mxu0 0.0
    %2935 = vmatprep.subr.mxu0 0.0
    %2936 = vmatpush1.msra.mxu0 0.0
    %2937 = vmatprep.subr.mxu0 0.0
    %2938 = vmatpush1.msra.mxu0 0.0
    %2939 = vmatprep.subr.mxu0 0.0
    %2940 = vmatpush1.msra.mxu0 0.0
    %2941 = vmatprep.subr.mxu0 0.0
    %2942 = vmatpush1.msra.mxu0 0.0
    %2943 = vmatprep.subr.mxu0 0.0
    %2944 = vmatpush1.msra.mxu0 0.0
    %2945 = vmatprep.subr.mxu0 0.0
    %2946 = vmatpush1.msra.mxu0 0.0
    %2947 = vmatprep.subr.mxu0 0.0
    %2948 = vmatpush1.msra.mxu0 0.0
    %2949 = vmatprep.subr.mxu0 0.0
    %2950 = vmatpush1.msra.mxu0 0.0
    %2951 = vmatprep.subr.mxu0 0.0
    %2952 = vmatpush1.msra.mxu0 0.0
    %2953 = vmatprep.subr.mxu0 0.0
    %2954 = vmatpush1.msra.mxu0 0.0
    %2955 = vmatprep.mubr.f32.mxu0 0.0
    %2956 = vmatmul.mubr.f32.gmra.mrb[0].mxu0 %v2889
    %v2957 = vpop.f32.mrb[0].mxu0
    %v2958 = vadd.f32 0.0, %v2957
    %v2959 = vpop.f32.mrb[0].mxu0
    %2960 = vdwg.mxu0
    %2962 = vrot.lane.b32.xlu0 %v2800, 8
    %v2963 = vpop.permute.xlu0 %2962
    %2966 = vrot.lane.b32.xlu0 %v2879, 16
    %v2967 = vpop.permute.xlu0 %2966
    %2970 = vrot.lane.b32.xlu0 %v2958, 24
    %v2971 = vpop.permute.xlu0 %2970
    %v2973 = vsel %vm70, %v2721, %v2963
    %v2974 = vsel %vm519, %v2973, %v2967
    %v2975 = vsel %vm984, %v2974, %v2971
    %v2976 = vadd.f32 %v2175, %v2975
    %v2978 = vsel %vm995, %v2976, 0
    %2980 = vmatprep.subr.mxu0 0.0
    %2981 = vmatpush1.msra.mxu0 %v2270
    %2982 = vmatprep.subr.mxu0 0.0
    %2983 = vmatpush1.msra.mxu0 %v2271
    %2984 = vmatprep.subr.mxu0 0.0
    %2985 = vmatpush1.msra.mxu0 %v2272
    %2986 = vmatprep.subr.mxu0 0.0
    %2987 = vmatpush1.msra.mxu0 %v2273
    %2988 = vmatprep.subr.mxu0 0.0
    %2989 = vmatpush1.msra.mxu0 0.0
    %2990 = vmatprep.subr.mxu0 0.0
    %2991 = vmatpush1.msra.mxu0 0.0
    %2992 = vmatprep.subr.mxu0 0.0
    %2993 = vmatpush1.msra.mxu0 0.0
    %2994 = vmatprep.subr.mxu0 0.0
    %2995 = vmatpush1.msra.mxu0 0.0
    %2996 = vmatprep.subr.mxu0 0.0
    %2997 = vmatpush1.msra.mxu0 0.0
    %2998 = vmatprep.subr.mxu0 0.0
    %2999 = vmatpush1.msra.mxu0 0.0
    %3000 = vmatprep.subr.mxu0 0.0
    %3001 = vmatpush1.msra.mxu0 0.0
    %3002 = vmatprep.subr.mxu0 0.0
    %3003 = vmatpush1.msra.mxu0 0.0
    %3004 = vmatprep.subr.mxu0 0.0
    %3005 = vmatpush1.msra.mxu0 0.0
    %3006 = vmatprep.subr.mxu0 0.0
    %3007 = vmatpush1.msra.mxu0 0.0
    %3008 = vmatprep.subr.mxu0 0.0
    %3009 = vmatpush1.msra.mxu0 0.0
    %3010 = vmatprep.subr.mxu0 0.0
    %3011 = vmatpush1.msra.mxu0 0.0
    %3012 = vmatprep.subr.mxu0 0.0
    %3013 = vmatpush1.msra.mxu0 0.0
    %3014 = vmatprep.subr.mxu0 0.0
    %3015 = vmatpush1.msra.mxu0 0.0
    %3016 = vmatprep.subr.mxu0 0.0
    %3017 = vmatpush1.msra.mxu0 0.0
    %3018 = vmatprep.subr.mxu0 0.0
    %3019 = vmatpush1.msra.mxu0 0.0
    %3020 = vmatprep.subr.mxu0 0.0
    %3021 = vmatpush1.msra.mxu0 0.0
    %3022 = vmatprep.subr.mxu0 0.0
    %3023 = vmatpush1.msra.mxu0 0.0
    %3024 = vmatprep.subr.mxu0 0.0
    %3025 = vmatpush1.msra.mxu0 0.0
    %3026 = vmatprep.subr.mxu0 0.0
    %3027 = vmatpush1.msra.mxu0 0.0
    %3028 = vmatprep.subr.mxu0 0.0
    %3029 = vmatpush1.msra.mxu0 0.0
    %3030 = vmatprep.subr.mxu0 0.0
    %3031 = vmatpush1.msra.mxu0 0.0
    %3032 = vmatprep.subr.mxu0 0.0
    %3033 = vmatpush1.msra.mxu0 0.0
    %3034 = vmatprep.subr.mxu0 0.0
    %3035 = vmatpush1.msra.mxu0 0.0
    %3036 = vmatprep.subr.mxu0 0.0
    %3037 = vmatpush1.msra.mxu0 0.0
    %3038 = vmatprep.subr.mxu0 0.0
    %3039 = vmatpush1.msra.mxu0 0.0
    %3040 = vmatprep.subr.mxu0 0.0
    %3041 = vmatpush1.msra.mxu0 0.0
    %3042 = vmatprep.subr.mxu0 0.0
    %3043 = vmatpush1.msra.mxu0 0.0
    %3044 = vmatprep.mubr.f32.mxu0 0.0
    %3045 = vmatmul.mubr.f32.gmra.mrb[0].mxu0 %v2978
    %v3046 = vpop.f32.mrb[0].mxu0
    %v3047 = vadd.f32 %v2274, %v3046
    %v3048 = vpop.f32.mrb[0].mxu0
    %3049 = vdwg.mxu0
    %v3050 = vmax.f32 %v3047, 0.0
    %v3051 = vadd.f32 %v2976, %v3050
    %v3052 = vld [vmem:[%s16] sm:$0xff]
    %v3053 = vld [vmem:[%s16 + $0x8] sm:$0xff]
    %v3054 = vld [vmem:[%s16 + $0x10] sm:$0xff]
    %v3055 = vld [vmem:[%s16 + $0x18] sm:$0xff]
    %v3056 = vld [vmem:[%s17] sm:$0x1]
    %v3058 = vsel %vm995, %v3051, 0
    %3060 = vmatprep.subr.mxu0 0.0
    %3061 = vmatpush1.msra.mxu0 %v3052
    %3062 = vmatprep.subr.mxu0 0.0
    %3063 = vmatpush1.msra.mxu0 %v3053
    %3064 = vmatprep.subr.mxu0 0.0
    %3065 = vmatpush1.msra.mxu0 %v3054
    %3066 = vmatprep.subr.mxu0 0.0
    %3067 = vmatpush1.msra.mxu0 %v3055
    %3068 = vmatprep.subr.mxu0 0.0
    %3069 = vmatpush1.msra.mxu0 0.0
    %3070 = vmatprep.subr.mxu0 0.0
    %3071 = vmatpush1.msra.mxu0 0.0
    %3072 = vmatprep.subr.mxu0 0.0
    %3073 = vmatpush1.msra.mxu0 0.0
    %3074 = vmatprep.subr.mxu0 0.0
    %3075 = vmatpush1.msra.mxu0 0.0
    %3076 = vmatprep.subr.mxu0 0.0
    %3077 = vmatpush1.msra.mxu0 0.0
    %3078 = vmatprep.subr.mxu0 0.0
    %3079 = vmatpush1.msra.mxu0 0.0
    %3080 = vmatprep.subr.mxu0 0.0
    %3081 = vmatpush1.msra.mxu0 0.0
    %3082 = vmatprep.subr.mxu0 0.0
    %3083 = vmatpush1.msra.mxu0 0.0
    %3084 = vmatprep.subr.mxu0 0.0
    %3085 = vmatpush1.msra.mxu0 0.0
    %3086 = vmatprep.subr.mxu0 0.0
    %3087 = vmatpush1.msra.mxu0 0.0
    %3088 = vmatprep.subr.mxu0 0.0
    %3089 = vmatpush1.msra.mxu0 0.0
    %3090 = vmatprep.subr.mxu0 0.0
    %3091 = vmatpush1.msra.mxu0 0.0
    %3092 = vmatprep.subr.mxu0 0.0
    %3093 = vmatpush1.msra.mxu0 0.0
    %3094 = vmatprep.subr.mxu0 0.0
    %3095 = vmatpush1.msra.mxu0 0.0
    %3096 = vmatprep.subr.mxu0 0.0
    %3097 = vmatpush1.msra.mxu0 0.0
    %3098 = vmatprep.subr.mxu0 0.0
    %3099 = vmatpush1.msra.mxu0 0.0
    %3100 = vmatprep.subr.mxu0 0.0
    %3101 = vmatpush1.msra.mxu0 0.0
    %3102 = vmatprep.subr.mxu0 0.0
    %3103 = vmatpush1.msra.mxu0 0.0
    %3104 = vmatprep.subr.mxu0 0.0
    %3105 = vmatpush1.msra.mxu0 0.0
    %3106 = vmatprep.subr.mxu0 0.0
    %3107 = vmatpush1.msra.mxu0 0.0
    %3108 = vmatprep.subr.mxu0 0.0
    %3109 = vmatpush1.msra.mxu0 0.0
    %3110 = vmatprep.subr.mxu0 0.0
    %3111 = vmatpush1.msra.mxu0 0.0
    %3112 = vmatprep.subr.mxu0 0.0
    %3113 = vmatpush1.msra.mxu0 0.0
    %3114 = vmatprep.subr.mxu0 0.0
    %3115 = vmatpush1.msra.mxu0 0.0
    %3116 = vmatprep.subr.mxu0 0.0
    %3117 = vmatpush1.msra.mxu0 0.0
    %3118 = vmatprep.subr.mxu0 0.0
    %3119 = vmatpush1.msra.mxu0 0.0
    %3120 = vmatprep.subr.mxu0 0.0
    %3121 = vmatpush1.msra.mxu0 0.0
    %3122 = vmatprep.subr.mxu0 0.0
    %3123 = vmatpush1.msra.mxu0 0.0
    %3124 = vmatprep.mubr.f32.mxu0 0.0
    %3125 = vmatmul.mubr.f32.gmra.mrb[0].mxu0 %v3058
    %v3126 = vpop.f32.mrb[0].mxu0
    %v3127 = vadd.f32 %v3056, %v3126
    %v3128 = vpop.f32.mrb[0].mxu0
    %3129 = vdwg.mxu0
    %vm3130 = vcmask 24576
    %3131 = vst.msk [vmem:[#allocation2] sm:$0x1] %vm3130, %v3127
    // Predicated region
    $region74: #{set_transformer_forward.1} parent=1 // pred_check
      _
    $region75: #{set_transformer_forward.1} parent=1 // pred_check_branch
      %3133 = sbr.rel (0) target = $region77
    $region76: #{set_transformer_forward.1} parent=1 // pred_region
      %s3135 = ssub.s32 16, 16
      %3136 = vsyncadd [#allocation3], %s3135
      %s3138 = sshll.u32 [#allocation2], 4
      %s3139 = int_to_ptr.vmem [resolvable:$true] %s3138
      %3141 = dma.vmem_to_hbm [thread:$0]  %s3139, 16, %s18, [#allocation3]
    $region77: #{set_transformer_forward.1} parent=1 // pred_fallthru
      _
    // Predicated region
    $region78: #{set_transformer_forward.1} parent=1 // pred_check
      _
    $region79: #{set_transformer_forward.1} parent=1 // pred_check_branch
      %3143 = sbr.rel (0) target = $region81
    $region80: #{set_transformer_forward.1} parent=1 // pred_region
      %3144 = dma.done [#allocation3], 16
    $region81: #{set_transformer_forward.1} parent=1 // pred_fallthru
      _
    %3145 = vsyncpa [#allocation3], 1

</llo_original>
